<compile_context>
chip_gen: v5e
topology: v5e:2x2
jax: 0.10.0
libtpu: 0.0.40
codegen_flags: <defaults>
</compile_context>

<pallas_src>
import math

import jax
import jax.numpy as jnp
from jax import lax
from jax.experimental import pallas as pl
from jax.experimental.pallas import tpu as pltpu

# ---------------- configuration (scaled-down ViT-base analogue) ----------------
B = 2                          # batch per eye
C = 3                          # input channels
IMG = 32                       # image side
PATCH = 8                      # patch side
N_PATCH = (IMG // PATCH) ** 2  # 16 patches
S = N_PATCH + 1                # sequence length (CLS + patches) = 17
BS = B * S                     # rows per eye = 34
CPP = C * PATCH * PATCH        # flattened patch size = 192
D = 128                        # hidden size
H = 4                          # attention heads
HD = D // H                    # head dim = 32
FF = 256                       # intermediate (MLP) size
LAYERS = 2                     # encoder layers
R = 8                          # LoRA rank
LORA_ALPHA = 8
LORA_SCALE = LORA_ALPHA / R    # = 1.0
EPS = 1e-12                    # HF ViT layer_norm_eps
NEG_INF = -1e9                 # additive mask for cross-sequence attention


# ---------------- in-kernel helpers ----------------
def _layer_norm(x, g, b, eps=EPS):
    mu = jnp.mean(x, axis=-1, keepdims=True)
    var = jnp.mean((x - mu) ** 2, axis=-1, keepdims=True)
    return (x - mu) * lax.rsqrt(var + eps) * g + b


def _gelu(x):
    # TODO(synk): HF ViT uses exact erf-GELU; tanh approximation used here for safe TPU lowering.
    return 0.5 * x * (1.0 + jnp.tanh(0.7978845608028654 * (x + 0.044715 * x * x * x)))


def _norm_cdf(x):
    # TODO(synk): my_normal(0,1).cdf is the exact standard-normal CDF (erf); tanh approximation of
    # Phi(x) is used here for safe TPU lowering.
    return 0.5 * (1.0 + jnp.tanh(0.7978845608028654 * (x + 0.044715 * x * x * x)))


# ---------------- fused kernel: embeddings + encoder layers + final LN + heads ----------------
def covit_kernel(patches_ref, patch_w_ref, emb_add_ref, attn_bias_ref,
                 fin_ln_ref, head_w_ref, head_b_ref,
                 wq_ref, wk_ref, wv_ref, wo_ref,
                 aq_ref, bqa_ref, av_ref, bva_ref,
                 wi_ref, wo2_ref, vecs_ref, bi_ref,
                 o_ref):
    f32 = jnp.float32
    bf16 = jnp.bfloat16

    # patch embedding (conv-as-matmul). CLS rows are zero patches; cls token, position embedding
    # and conv bias are folded into the additive constant built host-side.
    hidden = jnp.dot(patches_ref[0], patch_w_ref[...],
                     preferred_element_type=f32) + emb_add_ref[...]            # (BS, D) f32
    attn_bias = attn_bias_ref[...]                                             # (BS, BS) block-diag

    scale = 1.0 / math.sqrt(HD)

    for l in range(LAYERS):                                                    # static unroll
        vecs = vecs_ref[l]                                                     # (9, D) f32
        ln1_g, ln1_b = vecs[0:1], vecs[1:2]
        b_q, b_k, b_v, b_o = vecs[2:3], vecs[3:4], vecs[4:5], vecs[5:6]
        ln2_g, ln2_b, b_o2 = vecs[6:7], vecs[7:8], vecs[8:9]
        b_i = bi_ref[l]                                                        # (1, FF) f32

        # layernorm_before
        x_ln = _layer_norm(hidden, ln1_g, ln1_b)
        xb = x_ln.astype(bf16)

        # query/value with LoRA (scaling = alpha / r); lora dropout is identity at eval
        q = jnp.dot(xb, wq_ref[l], preferred_element_type=f32) + b_q
        q = q + LORA_SCALE * jnp.dot(
            jnp.dot(xb, aq_ref[l], preferred_element_type=f32).astype(bf16),
            bqa_ref[l], preferred_element_type=f32)
        k = jnp.dot(xb, wk_ref[l], preferred_element_type=f32) + b_k
        v = jnp.dot(xb, wv_ref[l], preferred_element_type=f32) + b_v
        v = v + LORA_SCALE * jnp.dot(
            jnp.dot(xb, av_ref[l], preferred_element_type=f32).astype(bf16),
            bva_ref[l], preferred_element_type=f32)
        q = q * scale

        # multi-head self-attention over all B*S rows at once; the block-diagonal additive bias
        # keeps the B sequences of this eye independent (cross-sequence weights underflow to 0).
        ctx_heads = []
        for h in range(H):
            sl = slice(h * HD, (h + 1) * HD)
            qh = q[:, sl].astype(bf16)
            kh = k[:, sl].astype(bf16)
            vh = v[:, sl].astype(bf16)
            s = lax.dot_general(qh, kh, (((1,), (1,)), ((), ())),
                                preferred_element_type=f32) + attn_bias        # (BS, BS)
            s = s - jnp.max(s, axis=-1, keepdims=True)
            p = jnp.exp(s)
            p = p * pl.reciprocal(jnp.sum(p, axis=-1, keepdims=True), approx=True)
            ctx_heads.append(jnp.dot(p.astype(bf16), vh, preferred_element_type=f32))
        ctx = jnp.concatenate(ctx_heads, axis=-1)                              # (BS, D) f32

        attn_out = jnp.dot(ctx.astype(bf16), wo_ref[l], preferred_element_type=f32) + b_o
        hidden = attn_out + hidden                                             # first residual

        # layernorm_after + MLP + second residual
        h_ln = _layer_norm(hidden, ln2_g, ln2_b)
        ff = _gelu(jnp.dot(h_ln.astype(bf16), wi_ref[l], preferred_element_type=f32) + b_i)
        hidden = jnp.dot(ff.astype(bf16), wo2_ref[l], preferred_element_type=f32) + b_o2 + hidden

    # final vit.layernorm + fused classification/regression head. Computed for every row; the
    # wrapper keeps only the CLS rows, which is identical to applying them to hidden[:, 0, :].
    fin = fin_ln_ref[...]
    x_fin = _layer_norm(hidden, fin[0:1], fin[1:2])
    logits = jnp.dot(x_fin, head_w_ref[...], preferred_element_type=f32) + head_b_ref[...]  # (BS, 2)
    phi = _norm_cdf(logits[:, 0:1])                                            # my_normal(0,1).cdf
    o_ref[0] = jnp.concatenate([logits, phi], axis=-1)                         # [cls_logit, reg, Phi]


# ---------------- forward pass (host glue + single pallas_call) ----------------
def covit_forward(x, params):
    # x: [2 (left/right eye), B, C, H, W]
    # ---- patch extraction, CLS-slot zero row, weight packing (all inside the same jit) ----
    xe = x.reshape(2 * B, C, IMG // PATCH, PATCH, IMG // PATCH, PATCH)
    xp = xe.transpose(0, 2, 4, 1, 3, 5).reshape(2 * B, N_PATCH, CPP)
    xp = jnp.concatenate([jnp.zeros((2 * B, 1, CPP), xp.dtype), xp], axis=1)   # zero "patch" = CLS slot
    patches = xp.reshape(2, BS, CPP).astype(jnp.bfloat16)                      # (2, BS, CPP)

    # additive embedding constant: CLS row gets cls+pos[0]; patch rows get patch_b+pos[i]
    row_add = jnp.concatenate(
        [params["cls"].reshape(1, D),
         jnp.broadcast_to(params["patch_b"].reshape(1, D), (N_PATCH, D))], axis=0)
    emb_add = jnp.tile(row_add + params["pos"].reshape(S, D), (B, 1))          # (BS, D) f32

    # block-diagonal additive attention bias (no attention across the B sequences of an eye)
    rid = jnp.arange(BS) // S
    attn_bias = jnp.where(rid[:, None] == rid[None, :], 0.0, NEG_INF).astype(jnp.float32)

    fin_ln = jnp.concatenate([params["final_ln_g"], params["final_ln_b"]], axis=0)  # (2, D)
    head_w = jnp.concatenate([params["wc"], params["wr"]], axis=1)                  # (D, 2)
    head_b = jnp.concatenate([params["bc"], params["br"]], axis=1)                  # (1, 2)

    def stack(name, dtype=jnp.bfloat16):
        return jnp.stack([lyr[name] for lyr in params["layers"]]).astype(dtype)

    wq_all, wk_all = stack("wq"), stack("wk")
    wv_all, wo_all = stack("wv"), stack("wo")
    aq_all, bqa_all = stack("aq"), stack("bq_lora")
    av_all, bva_all = stack("av"), stack("bv_lora")
    wi_all, wo2_all = stack("wi"), stack("wo2")
    vecs_all = jnp.stack([
        jnp.concatenate([lyr["ln1_g"], lyr["ln1_b"], lyr["bq"], lyr["bk"], lyr["bv"],
                         lyr["bo"], lyr["ln2_g"], lyr["ln2_b"], lyr["bo2"]], axis=0)
        for lyr in params["layers"]])                                          # (L, 9, D) f32
    bi_all = jnp.stack([lyr["bi"] for lyr in params["layers"]])                # (L, 1, FF) f32
    patch_w = params["patch_w"].astype(jnp.bfloat16)

    const2d = lambda shape: pl.BlockSpec(shape, lambda e: (0, 0))
    const3d = lambda shape: pl.BlockSpec(shape, lambda e: (0, 0, 0))

    out = pl.pallas_call(
        covit_kernel,
        grid=(2,),                                     # one grid step per eye
        in_specs=[
            pl.BlockSpec((1, BS, CPP), lambda e: (e, 0, 0)),   # patches (per eye)
            const2d((CPP, D)),                                 # patch_w
            const2d((BS, D)),                                  # emb_add
            const2d((BS, BS)),                                 # attn_bias
            const2d((2, D)),                                   # final LN gamma/beta
            const2d((D, 2)),                                   # fused head weight
            const2d((1, 2)),                                   # fused head bias
            const3d((LAYERS, D, D)),                           # wq
            const3d((LAYERS, D, D)),                           # wk
            const3d((LAYERS, D, D)),                           # wv
            const3d((LAYERS, D, D)),                           # wo
            const3d((LAYERS, D, R)),                           # lora A (query)
            const3d((LAYERS, R, D)),                           # lora B (query)
            const3d((LAYERS, D, R)),                           # lora A (value)
            const3d((LAYERS, R, D)),                           # lora B (value)
            const3d((LAYERS, D, FF)),                          # wi
            const3d((LAYERS, FF, D)),                          # wo2
            const3d((LAYERS, 9, D)),                           # packed LN/bias vectors
            const3d((LAYERS, 1, FF)),                          # bi
        ],
        out_specs=pl.BlockSpec((1, BS, 3), lambda e: (e, 0, 0)),
        out_shape=jax.ShapeDtypeStruct((2, BS, 3), jnp.float32),
        compiler_params=pltpu.CompilerParams(dimension_semantics=("parallel",)),
    )(patches, patch_w, emb_add, attn_bias, fin_ln, head_w, head_b,
      wq_all, wk_all, wv_all, wo_all, aq_all, bqa_all, av_all, bva_all,
      wi_all, wo2_all, vecs_all, bi_all)

    # keep only CLS rows; columns are [cls_logit, reg, Phi(cls_logit)]
    cls_rows = out[:, ::S, :]                                  # (2, B, 3)
    out_left, out_right = cls_rows[0, :, 0:1], cls_rows[1, :, 0:1]
    y_vec = jnp.concatenate([cls_rows[0, :, 2:3], cls_rows[0, :, 1:2],
                             cls_rows[1, :, 2:3], cls_rows[1, :, 1:2]], axis=-1)   # (B, 4)
    return y_vec[:, 0:2], y_vec[:, 2:], out_left, out_right


# ---------------- deterministic synthetic parameters ----------------
def init_params(key):
    def nrm(k, shape, scale=0.02):
        return scale * jax.random.normal(k, shape, dtype=jnp.float32)

    ks = iter(jax.random.split(key, 64))
    params = {
        "patch_w": nrm(next(ks), (CPP, D)),
        "patch_b": jnp.zeros((1, D), jnp.float32),
        "cls": nrm(next(ks), (1, 1, D)),
        "pos": nrm(next(ks), (1, S, D)),
        "final_ln_g": jnp.ones((1, D), jnp.float32),
        "final_ln_b": jnp.zeros((1, D), jnp.float32),
        "wc": nrm(next(ks), (D, 1)),
        "bc": jnp.zeros((1, 1), jnp.float32),
        "wr": nrm(next(ks), (D, 1)),
        "br": jnp.zeros((1, 1), jnp.float32),
        "layers": [],
    }
    for _ in range(LAYERS):
        layer = {
            "ln1_g": jnp.ones((1, D), jnp.float32),
            "ln1_b": jnp.zeros((1, D), jnp.float32),
            "wq": nrm(next(ks), (D, D)), "bq": jnp.zeros((1, D), jnp.float32),
            "aq": nrm(next(ks), (D, R), scale=1.0 / math.sqrt(D)),
            "bq_lora": nrm(next(ks), (R, D)),
            "wk": nrm(next(ks), (D, D)), "bk": jnp.zeros((1, D), jnp.float32),
            "wv": nrm(next(ks), (D, D)), "bv": jnp.zeros((1, D), jnp.float32),
            "av": nrm(next(ks), (D, R), scale=1.0 / math.sqrt(D)),
            "bv_lora": nrm(next(ks), (R, D)),
            "wo": nrm(next(ks), (D, D)), "bo": jnp.zeros((1, D), jnp.float32),
            "ln2_g": jnp.ones((1, D), jnp.float32),
            "ln2_b": jnp.zeros((1, D), jnp.float32),
            "wi": nrm(next(ks), (D, FF)), "bi": jnp.zeros((1, FF), jnp.float32),
            "wo2": nrm(next(ks), (FF, D)), "bo2": jnp.zeros((1, D), jnp.float32),
        }
        params["layers"].append(layer)
    return params


if __name__ == "__main__":
    key = jax.random.PRNGKey(0)
    k_x, k_p = jax.random.split(key)
    x = jax.random.normal(k_x, (2, B, C, IMG, IMG), dtype=jnp.float32)  # [eyes, B, C, H, W]
    params = init_params(k_p)

    fwd = jax.jit(covit_forward)
    y_left, y_right, out_left, out_right = fwd(x, params)
    jax.block_until_ready((y_left, y_right, out_left, out_right))

    assert y_left.shape == (B, 2) and y_right.shape == (B, 2)
    assert out_left.shape == (B, 1) and out_right.shape == (B, 1)
    for a in (y_left, y_right, out_left, out_right):
        assert bool(jnp.all(jnp.isfinite(a)))
    # column 0 of each pair is a normal-CDF output -> must lie in (0, 1)
    assert bool(jnp.all((y_left[:, 0] > 0) & (y_left[:, 0] < 1)))
    assert bool(jnp.all((y_right[:, 0] > 0) & (y_right[:, 0] < 1)))
    print("KERNEL_OK")
</pallas_src>

<mosaic_0001>
module attributes {stable_mosaic.version = 11 : i64} {
  func.func @covit_kernel(%arg0: i32, %arg1: memref<1x34x192xbf16, #tpu.memory_space<vmem>>, %arg2: memref<192x128xbf16, #tpu.memory_space<vmem>>, %arg3: memref<34x128xf32, #tpu.memory_space<vmem>>, %arg4: memref<34x34xf32, #tpu.memory_space<vmem>>, %arg5: memref<2x128xf32, #tpu.memory_space<vmem>>, %arg6: memref<128x2xf32, #tpu.memory_space<vmem>>, %arg7: memref<1x2xf32, #tpu.memory_space<vmem>>, %arg8: memref<2x128x128xbf16, #tpu.memory_space<vmem>>, %arg9: memref<2x128x128xbf16, #tpu.memory_space<vmem>>, %arg10: memref<2x128x128xbf16, #tpu.memory_space<vmem>>, %arg11: memref<2x128x128xbf16, #tpu.memory_space<vmem>>, %arg12: memref<2x128x8xbf16, #tpu.memory_space<vmem>>, %arg13: memref<2x8x128xbf16, #tpu.memory_space<vmem>>, %arg14: memref<2x128x8xbf16, #tpu.memory_space<vmem>>, %arg15: memref<2x8x128xbf16, #tpu.memory_space<vmem>>, %arg16: memref<2x128x256xbf16, #tpu.memory_space<vmem>>, %arg17: memref<2x256x128xbf16, #tpu.memory_space<vmem>>, %arg18: memref<2x9x128xf32, #tpu.memory_space<vmem>>, %arg19: memref<2x1x256xf32, #tpu.memory_space<vmem>>, %arg20: memref<1x34x3xf32, #tpu.memory_space<vmem>>) attributes {dimension_semantics = [#tpu.dimension_semantics<parallel>], iteration_bounds = array<i64: 2>, scalar_prefetch = 0 : i64, scratch_operands = 0 : i64, tpu.core_type = #tpu.core_type<tc>, window_params = [{transform_indices = @transform_0, window_bounds = array<i64: 1, 34, 192>}, {pipeline_mode = #tpu.pipeline_mode<synchronous>, transform_indices = @transform_1, window_bounds = array<i64: 192, 128>}, {pipeline_mode = #tpu.pipeline_mode<synchronous>, transform_indices = @transform_2, window_bounds = array<i64: 34, 128>}, {pipeline_mode = #tpu.pipeline_mode<synchronous>, transform_indices = @transform_3, window_bounds = array<i64: 34, 34>}, {pipeline_mode = #tpu.pipeline_mode<synchronous>, transform_indices = @transform_4, window_bounds = array<i64: 2, 128>}, {pipeline_mode = #tpu.pipeline_mode<synchronous>, transform_indices = @transform_5, window_bounds = array<i64: 128, 2>}, {pipeline_mode = #tpu.pipeline_mode<synchronous>, transform_indices = @transform_6, window_bounds = array<i64: 1, 2>}, {pipeline_mode = #tpu.pipeline_mode<synchronous>, transform_indices = @transform_7, window_bounds = array<i64: 2, 128, 128>}, {pipeline_mode = #tpu.pipeline_mode<synchronous>, transform_indices = @transform_8, window_bounds = array<i64: 2, 128, 128>}, {pipeline_mode = #tpu.pipeline_mode<synchronous>, transform_indices = @transform_9, window_bounds = array<i64: 2, 128, 128>}, {pipeline_mode = #tpu.pipeline_mode<synchronous>, transform_indices = @transform_10, window_bounds = array<i64: 2, 128, 128>}, {pipeline_mode = #tpu.pipeline_mode<synchronous>, transform_indices = @transform_11, window_bounds = array<i64: 2, 128, 8>}, {pipeline_mode = #tpu.pipeline_mode<synchronous>, transform_indices = @transform_12, window_bounds = array<i64: 2, 8, 128>}, {pipeline_mode = #tpu.pipeline_mode<synchronous>, transform_indices = @transform_13, window_bounds = array<i64: 2, 128, 8>}, {pipeline_mode = #tpu.pipeline_mode<synchronous>, transform_indices = @transform_14, window_bounds = array<i64: 2, 8, 128>}, {pipeline_mode = #tpu.pipeline_mode<synchronous>, transform_indices = @transform_15, window_bounds = array<i64: 2, 128, 256>}, {pipeline_mode = #tpu.pipeline_mode<synchronous>, transform_indices = @transform_16, window_bounds = array<i64: 2, 256, 128>}, {pipeline_mode = #tpu.pipeline_mode<synchronous>, transform_indices = @transform_17, window_bounds = array<i64: 2, 9, 128>}, {pipeline_mode = #tpu.pipeline_mode<synchronous>, transform_indices = @transform_18, window_bounds = array<i64: 2, 1, 256>}, {transform_indices = @transform_19, window_bounds = array<i64: 1, 34, 3>}]} {
    %c0 = arith.constant 0 : index
    %c0_0 = arith.constant 0 : index
    %c0_1 = arith.constant 0 : index
    %0 = vector.load %arg1[%c0, %c0_0, %c0_1] : memref<1x34x192xbf16, #tpu.memory_space<vmem>>, vector<1x34x192xbf16>
    %1 = vector.shape_cast %0 : vector<1x34x192xbf16> to vector<34x192xbf16>
    %c0_2 = arith.constant 0 : index
    %c0_3 = arith.constant 0 : index
    %2 = vector.load %arg2[%c0_2, %c0_3] : memref<192x128xbf16, #tpu.memory_space<vmem>>, vector<192x128xbf16>
    %cst = arith.constant dense<0.000000e+00> : vector<34x128xf32>
    %3 = tpu.matmul %1, %2, %cst {dimension_numbers = #tpu.dot_dimension_numbers<[1], [0], [0], [1], [0, 0, 1, 1], [], []>} : vector<34x192xbf16>, vector<192x128xbf16>, vector<34x128xf32> -> vector<34x128xf32>
    %c0_4 = arith.constant 0 : index
    %c0_5 = arith.constant 0 : index
    %4 = vector.load %arg3[%c0_4, %c0_5] : memref<34x128xf32, #tpu.memory_space<vmem>>, vector<34x128xf32>
    %5 = arith.addf %3, %4 : vector<34x128xf32>
    %c0_6 = arith.constant 0 : index
    %c0_7 = arith.constant 0 : index
    %6 = vector.load %arg4[%c0_6, %c0_7] : memref<34x34xf32, #tpu.memory_space<vmem>>, vector<34x34xf32>
    %c0_8 = arith.constant 0 : index
    %c0_9 = arith.constant 0 : index
    %c0_10 = arith.constant 0 : index
    %7 = vector.load %arg18[%c0_8, %c0_9, %c0_10] : memref<2x9x128xf32, #tpu.memory_space<vmem>>, vector<1x9x128xf32>
    %8 = vector.shape_cast %7 : vector<1x9x128xf32> to vector<9x128xf32>
    %9 = vector.extract_strided_slice %8 {offsets = [0, 0], sizes = [1, 128], strides = [1, 1]} : vector<9x128xf32> to vector<1x128xf32>
    %10 = vector.extract_strided_slice %8 {offsets = [1, 0], sizes = [1, 128], strides = [1, 1]} : vector<9x128xf32> to vector<1x128xf32>
    %11 = vector.extract_strided_slice %8 {offsets = [2, 0], sizes = [1, 128], strides = [1, 1]} : vector<9x128xf32> to vector<1x128xf32>
    %12 = vector.extract_strided_slice %8 {offsets = [3, 0], sizes = [1, 128], strides = [1, 1]} : vector<9x128xf32> to vector<1x128xf32>
    %13 = vector.extract_strided_slice %8 {offsets = [4, 0], sizes = [1, 128], strides = [1, 1]} : vector<9x128xf32> to vector<1x128xf32>
    %14 = vector.extract_strided_slice %8 {offsets = [5, 0], sizes = [1, 128], strides = [1, 1]} : vector<9x128xf32> to vector<1x128xf32>
    %15 = vector.extract_strided_slice %8 {offsets = [6, 0], sizes = [1, 128], strides = [1, 1]} : vector<9x128xf32> to vector<1x128xf32>
    %16 = vector.extract_strided_slice %8 {offsets = [7, 0], sizes = [1, 128], strides = [1, 1]} : vector<9x128xf32> to vector<1x128xf32>
    %17 = vector.extract_strided_slice %8 {offsets = [8, 0], sizes = [1, 128], strides = [1, 1]} : vector<9x128xf32> to vector<1x128xf32>
    %c0_11 = arith.constant 0 : index
    %c0_12 = arith.constant 0 : index
    %c0_13 = arith.constant 0 : index
    %18 = vector.load %arg19[%c0_11, %c0_12, %c0_13] : memref<2x1x256xf32, #tpu.memory_space<vmem>>, vector<1x1x256xf32>
    %19 = vector.shape_cast %18 : vector<1x1x256xf32> to vector<1x256xf32>
    %cst_14 = arith.constant dense<0.000000e+00> : vector<34xf32>
    %20 = vector.multi_reduction <add>, %5, %cst_14 [1] : vector<34x128xf32> to vector<34xf32>
    %21 = vector.shape_cast %20 : vector<34xf32> to vector<34x1xf32>
    %cst_15 = arith.constant 1.280000e+02 : f32
    %22 = vector.broadcast %cst_15 : f32 to vector<34x1xf32>
    %23 = arith.divf %21, %22 : vector<34x1xf32>
    %24 = vector.broadcast %23 : vector<34x1xf32> to vector<34x128xf32>
    %25 = arith.subf %5, %24 : vector<34x128xf32>
    %26 = arith.mulf %25, %25 : vector<34x128xf32>
    %cst_16 = arith.constant dense<0.000000e+00> : vector<34xf32>
    %27 = vector.multi_reduction <add>, %26, %cst_16 [1] : vector<34x128xf32> to vector<34xf32>
    %28 = vector.shape_cast %27 : vector<34xf32> to vector<34x1xf32>
    %cst_17 = arith.constant 1.280000e+02 : f32
    %29 = vector.broadcast %cst_17 : f32 to vector<34x1xf32>
    %30 = arith.divf %28, %29 : vector<34x1xf32>
    %31 = vector.broadcast %23 : vector<34x1xf32> to vector<34x128xf32>
    %32 = arith.subf %5, %31 : vector<34x128xf32>
    %cst_18 = arith.constant 9.99999996E-13 : f32
    %33 = vector.broadcast %cst_18 : f32 to vector<34x1xf32>
    %34 = arith.addf %30, %33 : vector<34x1xf32>
    %35 = math.rsqrt %34 : vector<34x1xf32>
    %36 = vector.broadcast %35 : vector<34x1xf32> to vector<34x128xf32>
    %37 = arith.mulf %32, %36 : vector<34x128xf32>
    %38 = vector.broadcast %9 : vector<1x128xf32> to vector<34x128xf32>
    %39 = arith.mulf %37, %38 : vector<34x128xf32>
    %40 = vector.broadcast %10 : vector<1x128xf32> to vector<34x128xf32>
    %41 = arith.addf %39, %40 : vector<34x128xf32>
    %42 = arith.truncf %41 : vector<34x128xf32> to vector<34x128xbf16>
    %c0_19 = arith.constant 0 : index
    %c0_20 = arith.constant 0 : index
    %c0_21 = arith.constant 0 : index
    %43 = vector.load %arg8[%c0_19, %c0_20, %c0_21] : memref<2x128x128xbf16, #tpu.memory_space<vmem>>, vector<1x128x128xbf16>
    %44 = vector.shape_cast %43 : vector<1x128x128xbf16> to vector<128x128xbf16>
    %cst_22 = arith.constant dense<0.000000e+00> : vector<34x128xf32>
    %45 = tpu.matmul %42, %44, %cst_22 {dimension_numbers = #tpu.dot_dimension_numbers<[1], [0], [0], [1], [0, 0, 1, 1], [], []>} : vector<34x128xbf16>, vector<128x128xbf16>, vector<34x128xf32> -> vector<34x128xf32>
    %46 = vector.broadcast %11 : vector<1x128xf32> to vector<34x128xf32>
    %47 = arith.addf %45, %46 : vector<34x128xf32>
    %c0_23 = arith.constant 0 : index
    %c0_24 = arith.constant 0 : index
    %c0_25 = arith.constant 0 : index
    %48 = vector.load %arg12[%c0_23, %c0_24, %c0_25] : memref<2x128x8xbf16, #tpu.memory_space<vmem>>, vector<1x128x8xbf16>
    %49 = vector.shape_cast %48 : vector<1x128x8xbf16> to vector<128x8xbf16>
    %cst_26 = arith.constant dense<0.000000e+00> : vector<34x8xf32>
    %50 = tpu.matmul %42, %49, %cst_26 {dimension_numbers = #tpu.dot_dimension_numbers<[1], [0], [0], [1], [0, 0, 1, 1], [], []>} : vector<34x128xbf16>, vector<128x8xbf16>, vector<34x8xf32> -> vector<34x8xf32>
    %51 = arith.truncf %50 : vector<34x8xf32> to vector<34x8xbf16>
    %c0_27 = arith.constant 0 : index
    %c0_28 = arith.constant 0 : index
    %c0_29 = arith.constant 0 : index
    %52 = vector.load %arg13[%c0_27, %c0_28, %c0_29] : memref<2x8x128xbf16, #tpu.memory_space<vmem>>, vector<1x8x128xbf16>
    %53 = vector.shape_cast %52 : vector<1x8x128xbf16> to vector<8x128xbf16>
    %cst_30 = arith.constant dense<0.000000e+00> : vector<34x128xf32>
    %54 = tpu.matmul %51, %53, %cst_30 {dimension_numbers = #tpu.dot_dimension_numbers<[1], [0], [0], [1], [0, 0, 1, 1], [], []>} : vector<34x8xbf16>, vector<8x128xbf16>, vector<34x128xf32> -> vector<34x128xf32>
    %cst_31 = arith.constant 1.000000e+00 : f32
    %55 = vector.broadcast %cst_31 : f32 to vector<34x128xf32>
    %56 = arith.mulf %55, %54 : vector<34x128xf32>
    %57 = arith.addf %47, %56 : vector<34x128xf32>
    %c0_32 = arith.constant 0 : index
    %c0_33 = arith.constant 0 : index
    %c0_34 = arith.constant 0 : index
    %58 = vector.load %arg9[%c0_32, %c0_33, %c0_34] : memref<2x128x128xbf16, #tpu.memory_space<vmem>>, vector<1x128x128xbf16>
    %59 = vector.shape_cast %58 : vector<1x128x128xbf16> to vector<128x128xbf16>
    %cst_35 = arith.constant dense<0.000000e+00> : vector<34x128xf32>
    %60 = tpu.matmul %42, %59, %cst_35 {dimension_numbers = #tpu.dot_dimension_numbers<[1], [0], [0], [1], [0, 0, 1, 1], [], []>} : vector<34x128xbf16>, vector<128x128xbf16>, vector<34x128xf32> -> vector<34x128xf32>
    %61 = vector.broadcast %12 : vector<1x128xf32> to vector<34x128xf32>
    %62 = arith.addf %60, %61 : vector<34x128xf32>
    %c0_36 = arith.constant 0 : index
    %c0_37 = arith.constant 0 : index
    %c0_38 = arith.constant 0 : index
    %63 = vector.load %arg10[%c0_36, %c0_37, %c0_38] : memref<2x128x128xbf16, #tpu.memory_space<vmem>>, vector<1x128x128xbf16>
    %64 = vector.shape_cast %63 : vector<1x128x128xbf16> to vector<128x128xbf16>
    %cst_39 = arith.constant dense<0.000000e+00> : vector<34x128xf32>
    %65 = tpu.matmul %42, %64, %cst_39 {dimension_numbers = #tpu.dot_dimension_numbers<[1], [0], [0], [1], [0, 0, 1, 1], [], []>} : vector<34x128xbf16>, vector<128x128xbf16>, vector<34x128xf32> -> vector<34x128xf32>
    %66 = vector.broadcast %13 : vector<1x128xf32> to vector<34x128xf32>
    %67 = arith.addf %65, %66 : vector<34x128xf32>
    %c0_40 = arith.constant 0 : index
    %c0_41 = arith.constant 0 : index
    %c0_42 = arith.constant 0 : index
    %68 = vector.load %arg14[%c0_40, %c0_41, %c0_42] : memref<2x128x8xbf16, #tpu.memory_space<vmem>>, vector<1x128x8xbf16>
    %69 = vector.shape_cast %68 : vector<1x128x8xbf16> to vector<128x8xbf16>
    %cst_43 = arith.constant dense<0.000000e+00> : vector<34x8xf32>
    %70 = tpu.matmul %42, %69, %cst_43 {dimension_numbers = #tpu.dot_dimension_numbers<[1], [0], [0], [1], [0, 0, 1, 1], [], []>} : vector<34x128xbf16>, vector<128x8xbf16>, vector<34x8xf32> -> vector<34x8xf32>
    %71 = arith.truncf %70 : vector<34x8xf32> to vector<34x8xbf16>
    %c0_44 = arith.constant 0 : index
    %c0_45 = arith.constant 0 : index
    %c0_46 = arith.constant 0 : index
    %72 = vector.load %arg15[%c0_44, %c0_45, %c0_46] : memref<2x8x128xbf16, #tpu.memory_space<vmem>>, vector<1x8x128xbf16>
    %73 = vector.shape_cast %72 : vector<1x8x128xbf16> to vector<8x128xbf16>
    %cst_47 = arith.constant dense<0.000000e+00> : vector<34x128xf32>
    %74 = tpu.matmul %71, %73, %cst_47 {dimension_numbers = #tpu.dot_dimension_numbers<[1], [0], [0], [1], [0, 0, 1, 1], [], []>} : vector<34x8xbf16>, vector<8x128xbf16>, vector<34x128xf32> -> vector<34x128xf32>
    %cst_48 = arith.constant 1.000000e+00 : f32
    %75 = vector.broadcast %cst_48 : f32 to vector<34x128xf32>
    %76 = arith.mulf %75, %74 : vector<34x128xf32>
    %77 = arith.addf %67, %76 : vector<34x128xf32>
    %cst_49 = arith.constant 0.176776692 : f32
    %78 = vector.broadcast %cst_49 : f32 to vector<34x128xf32>
    %79 = arith.mulf %57, %78 : vector<34x128xf32>
    %80 = vector.extract_strided_slice %79 {offsets = [0, 0], sizes = [34, 32], strides = [1, 1]} : vector<34x128xf32> to vector<34x32xf32>
    %81 = arith.truncf %80 : vector<34x32xf32> to vector<34x32xbf16>
    %82 = vector.extract_strided_slice %62 {offsets = [0, 0], sizes = [34, 32], strides = [1, 1]} : vector<34x128xf32> to vector<34x32xf32>
    %83 = arith.truncf %82 : vector<34x32xf32> to vector<34x32xbf16>
    %84 = vector.extract_strided_slice %77 {offsets = [0, 0], sizes = [34, 32], strides = [1, 1]} : vector<34x128xf32> to vector<34x32xf32>
    %85 = arith.truncf %84 : vector<34x32xf32> to vector<34x32xbf16>
    %cst_50 = arith.constant dense<0.000000e+00> : vector<34x34xf32>
    %86 = tpu.matmul %81, %83, %cst_50 {dimension_numbers = #tpu.dot_dimension_numbers<[1], [1], [0], [0], [0, 0, 1, 0], [], []>} : vector<34x32xbf16>, vector<34x32xbf16>, vector<34x34xf32> -> vector<34x34xf32>
    %87 = arith.addf %86, %6 : vector<34x34xf32>
    %cst_51 = arith.constant dense<0xFF800000> : vector<34xf32>
    %88 = vector.multi_reduction <maximumf>, %87, %cst_51 [1] : vector<34x34xf32> to vector<34xf32>
    %89 = vector.shape_cast %88 : vector<34xf32> to vector<34x1xf32>
    %90 = vector.broadcast %89 : vector<34x1xf32> to vector<34x34xf32>
    %91 = arith.subf %87, %90 : vector<34x34xf32>
    %92 = math.exp %91 : vector<34x34xf32>
    %cst_52 = arith.constant dense<0.000000e+00> : vector<34xf32>
    %93 = vector.multi_reduction <add>, %92, %cst_52 [1] : vector<34x34xf32> to vector<34xf32>
    %94 = vector.shape_cast %93 : vector<34xf32> to vector<34x1xf32>
    %95 = tpu.reciprocal %94 {approx = true} : vector<34x1xf32> -> vector<34x1xf32>
    %96 = vector.broadcast %95 : vector<34x1xf32> to vector<34x34xf32>
    %97 = arith.mulf %92, %96 : vector<34x34xf32>
    %98 = arith.truncf %97 : vector<34x34xf32> to vector<34x34xbf16>
    %cst_53 = arith.constant dense<0.000000e+00> : vector<34x32xf32>
    %99 = tpu.matmul %98, %85, %cst_53 {dimension_numbers = #tpu.dot_dimension_numbers<[1], [0], [0], [1], [0, 0, 1, 1], [], []>} : vector<34x34xbf16>, vector<34x32xbf16>, vector<34x32xf32> -> vector<34x32xf32>
    %100 = vector.extract_strided_slice %79 {offsets = [0, 32], sizes = [34, 32], strides = [1, 1]} : vector<34x128xf32> to vector<34x32xf32>
    %101 = arith.truncf %100 : vector<34x32xf32> to vector<34x32xbf16>
    %102 = vector.extract_strided_slice %62 {offsets = [0, 32], sizes = [34, 32], strides = [1, 1]} : vector<34x128xf32> to vector<34x32xf32>
    %103 = arith.truncf %102 : vector<34x32xf32> to vector<34x32xbf16>
    %104 = vector.extract_strided_slice %77 {offsets = [0, 32], sizes = [34, 32], strides = [1, 1]} : vector<34x128xf32> to vector<34x32xf32>
    %105 = arith.truncf %104 : vector<34x32xf32> to vector<34x32xbf16>
    %cst_54 = arith.constant dense<0.000000e+00> : vector<34x34xf32>
    %106 = tpu.matmul %101, %103, %cst_54 {dimension_numbers = #tpu.dot_dimension_numbers<[1], [1], [0], [0], [0, 0, 1, 0], [], []>} : vector<34x32xbf16>, vector<34x32xbf16>, vector<34x34xf32> -> vector<34x34xf32>
    %107 = arith.addf %106, %6 : vector<34x34xf32>
    %cst_55 = arith.constant dense<0xFF800000> : vector<34xf32>
    %108 = vector.multi_reduction <maximumf>, %107, %cst_55 [1] : vector<34x34xf32> to vector<34xf32>
    %109 = vector.shape_cast %108 : vector<34xf32> to vector<34x1xf32>
    %110 = vector.broadcast %109 : vector<34x1xf32> to vector<34x34xf32>
    %111 = arith.subf %107, %110 : vector<34x34xf32>
    %112 = math.exp %111 : vector<34x34xf32>
    %cst_56 = arith.constant dense<0.000000e+00> : vector<34xf32>
    %113 = vector.multi_reduction <add>, %112, %cst_56 [1] : vector<34x34xf32> to vector<34xf32>
    %114 = vector.shape_cast %113 : vector<34xf32> to vector<34x1xf32>
    %115 = tpu.reciprocal %114 {approx = true} : vector<34x1xf32> -> vector<34x1xf32>
    %116 = vector.broadcast %115 : vector<34x1xf32> to vector<34x34xf32>
    %117 = arith.mulf %112, %116 : vector<34x34xf32>
    %118 = arith.truncf %117 : vector<34x34xf32> to vector<34x34xbf16>
    %cst_57 = arith.constant dense<0.000000e+00> : vector<34x32xf32>
    %119 = tpu.matmul %118, %105, %cst_57 {dimension_numbers = #tpu.dot_dimension_numbers<[1], [0], [0], [1], [0, 0, 1, 1], [], []>} : vector<34x34xbf16>, vector<34x32xbf16>, vector<34x32xf32> -> vector<34x32xf32>
    %120 = vector.extract_strided_slice %79 {offsets = [0, 64], sizes = [34, 32], strides = [1, 1]} : vector<34x128xf32> to vector<34x32xf32>
    %121 = arith.truncf %120 : vector<34x32xf32> to vector<34x32xbf16>
    %122 = vector.extract_strided_slice %62 {offsets = [0, 64], sizes = [34, 32], strides = [1, 1]} : vector<34x128xf32> to vector<34x32xf32>
    %123 = arith.truncf %122 : vector<34x32xf32> to vector<34x32xbf16>
    %124 = vector.extract_strided_slice %77 {offsets = [0, 64], sizes = [34, 32], strides = [1, 1]} : vector<34x128xf32> to vector<34x32xf32>
    %125 = arith.truncf %124 : vector<34x32xf32> to vector<34x32xbf16>
    %cst_58 = arith.constant dense<0.000000e+00> : vector<34x34xf32>
    %126 = tpu.matmul %121, %123, %cst_58 {dimension_numbers = #tpu.dot_dimension_numbers<[1], [1], [0], [0], [0, 0, 1, 0], [], []>} : vector<34x32xbf16>, vector<34x32xbf16>, vector<34x34xf32> -> vector<34x34xf32>
    %127 = arith.addf %126, %6 : vector<34x34xf32>
    %cst_59 = arith.constant dense<0xFF800000> : vector<34xf32>
    %128 = vector.multi_reduction <maximumf>, %127, %cst_59 [1] : vector<34x34xf32> to vector<34xf32>
    %129 = vector.shape_cast %128 : vector<34xf32> to vector<34x1xf32>
    %130 = vector.broadcast %129 : vector<34x1xf32> to vector<34x34xf32>
    %131 = arith.subf %127, %130 : vector<34x34xf32>
    %132 = math.exp %131 : vector<34x34xf32>
    %cst_60 = arith.constant dense<0.000000e+00> : vector<34xf32>
    %133 = vector.multi_reduction <add>, %132, %cst_60 [1] : vector<34x34xf32> to vector<34xf32>
    %134 = vector.shape_cast %133 : vector<34xf32> to vector<34x1xf32>
    %135 = tpu.reciprocal %134 {approx = true} : vector<34x1xf32> -> vector<34x1xf32>
    %136 = vector.broadcast %135 : vector<34x1xf32> to vector<34x34xf32>
    %137 = arith.mulf %132, %136 : vector<34x34xf32>
    %138 = arith.truncf %137 : vector<34x34xf32> to vector<34x34xbf16>
    %cst_61 = arith.constant dense<0.000000e+00> : vector<34x32xf32>
    %139 = tpu.matmul %138, %125, %cst_61 {dimension_numbers = #tpu.dot_dimension_numbers<[1], [0], [0], [1], [0, 0, 1, 1], [], []>} : vector<34x34xbf16>, vector<34x32xbf16>, vector<34x32xf32> -> vector<34x32xf32>
    %140 = vector.extract_strided_slice %79 {offsets = [0, 96], sizes = [34, 32], strides = [1, 1]} : vector<34x128xf32> to vector<34x32xf32>
    %141 = arith.truncf %140 : vector<34x32xf32> to vector<34x32xbf16>
    %142 = vector.extract_strided_slice %62 {offsets = [0, 96], sizes = [34, 32], strides = [1, 1]} : vector<34x128xf32> to vector<34x32xf32>
    %143 = arith.truncf %142 : vector<34x32xf32> to vector<34x32xbf16>
    %144 = vector.extract_strided_slice %77 {offsets = [0, 96], sizes = [34, 32], strides = [1, 1]} : vector<34x128xf32> to vector<34x32xf32>
    %145 = arith.truncf %144 : vector<34x32xf32> to vector<34x32xbf16>
    %cst_62 = arith.constant dense<0.000000e+00> : vector<34x34xf32>
    %146 = tpu.matmul %141, %143, %cst_62 {dimension_numbers = #tpu.dot_dimension_numbers<[1], [1], [0], [0], [0, 0, 1, 0], [], []>} : vector<34x32xbf16>, vector<34x32xbf16>, vector<34x34xf32> -> vector<34x34xf32>
    %147 = arith.addf %146, %6 : vector<34x34xf32>
    %cst_63 = arith.constant dense<0xFF800000> : vector<34xf32>
    %148 = vector.multi_reduction <maximumf>, %147, %cst_63 [1] : vector<34x34xf32> to vector<34xf32>
    %149 = vector.shape_cast %148 : vector<34xf32> to vector<34x1xf32>
    %150 = vector.broadcast %149 : vector<34x1xf32> to vector<34x34xf32>
    %151 = arith.subf %147, %150 : vector<34x34xf32>
    %152 = math.exp %151 : vector<34x34xf32>
    %cst_64 = arith.constant dense<0.000000e+00> : vector<34xf32>
    %153 = vector.multi_reduction <add>, %152, %cst_64 [1] : vector<34x34xf32> to vector<34xf32>
    %154 = vector.shape_cast %153 : vector<34xf32> to vector<34x1xf32>
    %155 = tpu.reciprocal %154 {approx = true} : vector<34x1xf32> -> vector<34x1xf32>
    %156 = vector.broadcast %155 : vector<34x1xf32> to vector<34x34xf32>
    %157 = arith.mulf %152, %156 : vector<34x34xf32>
    %158 = arith.truncf %157 : vector<34x34xf32> to vector<34x34xbf16>
    %cst_65 = arith.constant dense<0.000000e+00> : vector<34x32xf32>
    %159 = tpu.matmul %158, %145, %cst_65 {dimension_numbers = #tpu.dot_dimension_numbers<[1], [0], [0], [1], [0, 0, 1, 1], [], []>} : vector<34x34xbf16>, vector<34x32xbf16>, vector<34x32xf32> -> vector<34x32xf32>
    %160 = tpu.concatenate %99, %119, %139, %159 in 1 : vector<34x32xf32>, vector<34x32xf32>, vector<34x32xf32>, vector<34x32xf32> -> vector<34x128xf32>
    %161 = arith.truncf %160 : vector<34x128xf32> to vector<34x128xbf16>
    %c0_66 = arith.constant 0 : index
    %c0_67 = arith.constant 0 : index
    %c0_68 = arith.constant 0 : index
    %162 = vector.load %arg11[%c0_66, %c0_67, %c0_68] : memref<2x128x128xbf16, #tpu.memory_space<vmem>>, vector<1x128x128xbf16>
    %163 = vector.shape_cast %162 : vector<1x128x128xbf16> to vector<128x128xbf16>
    %cst_69 = arith.constant dense<0.000000e+00> : vector<34x128xf32>
    %164 = tpu.matmul %161, %163, %cst_69 {dimension_numbers = #tpu.dot_dimension_numbers<[1], [0], [0], [1], [0, 0, 1, 1], [], []>} : vector<34x128xbf16>, vector<128x128xbf16>, vector<34x128xf32> -> vector<34x128xf32>
    %165 = vector.broadcast %14 : vector<1x128xf32> to vector<34x128xf32>
    %166 = arith.addf %164, %165 : vector<34x128xf32>
    %167 = arith.addf %166, %5 : vector<34x128xf32>
    %cst_70 = arith.constant dense<0.000000e+00> : vector<34xf32>
    %168 = vector.multi_reduction <add>, %167, %cst_70 [1] : vector<34x128xf32> to vector<34xf32>
    %169 = vector.shape_cast %168 : vector<34xf32> to vector<34x1xf32>
    %cst_71 = arith.constant 1.280000e+02 : f32
    %170 = vector.broadcast %cst_71 : f32 to vector<34x1xf32>
    %171 = arith.divf %169, %170 : vector<34x1xf32>
    %172 = vector.broadcast %171 : vector<34x1xf32> to vector<34x128xf32>
    %173 = arith.subf %167, %172 : vector<34x128xf32>
    %174 = arith.mulf %173, %173 : vector<34x128xf32>
    %cst_72 = arith.constant dense<0.000000e+00> : vector<34xf32>
    %175 = vector.multi_reduction <add>, %174, %cst_72 [1] : vector<34x128xf32> to vector<34xf32>
    %176 = vector.shape_cast %175 : vector<34xf32> to vector<34x1xf32>
    %cst_73 = arith.constant 1.280000e+02 : f32
    %177 = vector.broadcast %cst_73 : f32 to vector<34x1xf32>
    %178 = arith.divf %176, %177 : vector<34x1xf32>
    %179 = vector.broadcast %171 : vector<34x1xf32> to vector<34x128xf32>
    %180 = arith.subf %167, %179 : vector<34x128xf32>
    %cst_74 = arith.constant 9.99999996E-13 : f32
    %181 = vector.broadcast %cst_74 : f32 to vector<34x1xf32>
    %182 = arith.addf %178, %181 : vector<34x1xf32>
    %183 = math.rsqrt %182 : vector<34x1xf32>
    %184 = vector.broadcast %183 : vector<34x1xf32> to vector<34x128xf32>
    %185 = arith.mulf %180, %184 : vector<34x128xf32>
    %186 = vector.broadcast %15 : vector<1x128xf32> to vector<34x128xf32>
    %187 = arith.mulf %185, %186 : vector<34x128xf32>
    %188 = vector.broadcast %16 : vector<1x128xf32> to vector<34x128xf32>
    %189 = arith.addf %187, %188 : vector<34x128xf32>
    %190 = arith.truncf %189 : vector<34x128xf32> to vector<34x128xbf16>
    %c0_75 = arith.constant 0 : index
    %c0_76 = arith.constant 0 : index
    %c0_77 = arith.constant 0 : index
    %191 = vector.load %arg16[%c0_75, %c0_76, %c0_77] : memref<2x128x256xbf16, #tpu.memory_space<vmem>>, vector<1x128x256xbf16>
    %192 = vector.shape_cast %191 : vector<1x128x256xbf16> to vector<128x256xbf16>
    %cst_78 = arith.constant dense<0.000000e+00> : vector<34x256xf32>
    %193 = tpu.matmul %190, %192, %cst_78 {dimension_numbers = #tpu.dot_dimension_numbers<[1], [0], [0], [1], [0, 0, 1, 1], [], []>} : vector<34x128xbf16>, vector<128x256xbf16>, vector<34x256xf32> -> vector<34x256xf32>
    %194 = vector.broadcast %19 : vector<1x256xf32> to vector<34x256xf32>
    %195 = arith.addf %193, %194 : vector<34x256xf32>
    %cst_79 = arith.constant 5.000000e-01 : f32
    %196 = vector.broadcast %cst_79 : f32 to vector<34x256xf32>
    %197 = arith.mulf %196, %195 : vector<34x256xf32>
    %cst_80 = arith.constant 4.471500e-02 : f32
    %198 = vector.broadcast %cst_80 : f32 to vector<34x256xf32>
    %199 = arith.mulf %198, %195 : vector<34x256xf32>
    %200 = arith.mulf %199, %195 : vector<34x256xf32>
    %201 = arith.mulf %200, %195 : vector<34x256xf32>
    %202 = arith.addf %195, %201 : vector<34x256xf32>
    %cst_81 = arith.constant 0.797884583 : f32
    %203 = vector.broadcast %cst_81 : f32 to vector<34x256xf32>
    %204 = arith.mulf %203, %202 : vector<34x256xf32>
    %205 = math.tanh %204 : vector<34x256xf32>
    %cst_82 = arith.constant 1.000000e+00 : f32
    %206 = vector.broadcast %cst_82 : f32 to vector<34x256xf32>
    %207 = arith.addf %206, %205 : vector<34x256xf32>
    %208 = arith.mulf %197, %207 : vector<34x256xf32>
    %209 = arith.truncf %208 : vector<34x256xf32> to vector<34x256xbf16>
    %c0_83 = arith.constant 0 : index
    %c0_84 = arith.constant 0 : index
    %c0_85 = arith.constant 0 : index
    %210 = vector.load %arg17[%c0_83, %c0_84, %c0_85] : memref<2x256x128xbf16, #tpu.memory_space<vmem>>, vector<1x256x128xbf16>
    %211 = vector.shape_cast %210 : vector<1x256x128xbf16> to vector<256x128xbf16>
    %cst_86 = arith.constant dense<0.000000e+00> : vector<34x128xf32>
    %212 = tpu.matmul %209, %211, %cst_86 {dimension_numbers = #tpu.dot_dimension_numbers<[1], [0], [0], [1], [0, 0, 1, 1], [], []>} : vector<34x256xbf16>, vector<256x128xbf16>, vector<34x128xf32> -> vector<34x128xf32>
    %213 = vector.broadcast %17 : vector<1x128xf32> to vector<34x128xf32>
    %214 = arith.addf %212, %213 : vector<34x128xf32>
    %215 = arith.addf %214, %167 : vector<34x128xf32>
    %c1 = arith.constant 1 : index
    %c0_87 = arith.constant 0 : index
    %c0_88 = arith.constant 0 : index
    %216 = vector.load %arg18[%c1, %c0_87, %c0_88] : memref<2x9x128xf32, #tpu.memory_space<vmem>>, vector<1x9x128xf32>
    %217 = vector.shape_cast %216 : vector<1x9x128xf32> to vector<9x128xf32>
    %218 = vector.extract_strided_slice %217 {offsets = [0, 0], sizes = [1, 128], strides = [1, 1]} : vector<9x128xf32> to vector<1x128xf32>
    %219 = vector.extract_strided_slice %217 {offsets = [1, 0], sizes = [1, 128], strides = [1, 1]} : vector<9x128xf32> to vector<1x128xf32>
    %220 = vector.extract_strided_slice %217 {offsets = [2, 0], sizes = [1, 128], strides = [1, 1]} : vector<9x128xf32> to vector<1x128xf32>
    %221 = vector.extract_strided_slice %217 {offsets = [3, 0], sizes = [1, 128], strides = [1, 1]} : vector<9x128xf32> to vector<1x128xf32>
    %222 = vector.extract_strided_slice %217 {offsets = [4, 0], sizes = [1, 128], strides = [1, 1]} : vector<9x128xf32> to vector<1x128xf32>
    %223 = vector.extract_strided_slice %217 {offsets = [5, 0], sizes = [1, 128], strides = [1, 1]} : vector<9x128xf32> to vector<1x128xf32>
    %224 = vector.extract_strided_slice %217 {offsets = [6, 0], sizes = [1, 128], strides = [1, 1]} : vector<9x128xf32> to vector<1x128xf32>
    %225 = vector.extract_strided_slice %217 {offsets = [7, 0], sizes = [1, 128], strides = [1, 1]} : vector<9x128xf32> to vector<1x128xf32>
    %226 = vector.extract_strided_slice %217 {offsets = [8, 0], sizes = [1, 128], strides = [1, 1]} : vector<9x128xf32> to vector<1x128xf32>
    %c1_89 = arith.constant 1 : index
    %c0_90 = arith.constant 0 : index
    %c0_91 = arith.constant 0 : index
    %227 = vector.load %arg19[%c1_89, %c0_90, %c0_91] : memref<2x1x256xf32, #tpu.memory_space<vmem>>, vector<1x1x256xf32>
    %228 = vector.shape_cast %227 : vector<1x1x256xf32> to vector<1x256xf32>
    %cst_92 = arith.constant dense<0.000000e+00> : vector<34xf32>
    %229 = vector.multi_reduction <add>, %215, %cst_92 [1] : vector<34x128xf32> to vector<34xf32>
    %230 = vector.shape_cast %229 : vector<34xf32> to vector<34x1xf32>
    %cst_93 = arith.constant 1.280000e+02 : f32
    %231 = vector.broadcast %cst_93 : f32 to vector<34x1xf32>
    %232 = arith.divf %230, %231 : vector<34x1xf32>
    %233 = vector.broadcast %232 : vector<34x1xf32> to vector<34x128xf32>
    %234 = arith.subf %215, %233 : vector<34x128xf32>
    %235 = arith.mulf %234, %234 : vector<34x128xf32>
    %cst_94 = arith.constant dense<0.000000e+00> : vector<34xf32>
    %236 = vector.multi_reduction <add>, %235, %cst_94 [1] : vector<34x128xf32> to vector<34xf32>
    %237 = vector.shape_cast %236 : vector<34xf32> to vector<34x1xf32>
    %cst_95 = arith.constant 1.280000e+02 : f32
    %238 = vector.broadcast %cst_95 : f32 to vector<34x1xf32>
    %239 = arith.divf %237, %238 : vector<34x1xf32>
    %240 = vector.broadcast %232 : vector<34x1xf32> to vector<34x128xf32>
    %241 = arith.subf %215, %240 : vector<34x128xf32>
    %cst_96 = arith.constant 9.99999996E-13 : f32
    %242 = vector.broadcast %cst_96 : f32 to vector<34x1xf32>
    %243 = arith.addf %239, %242 : vector<34x1xf32>
    %244 = math.rsqrt %243 : vector<34x1xf32>
    %245 = vector.broadcast %244 : vector<34x1xf32> to vector<34x128xf32>
    %246 = arith.mulf %241, %245 : vector<34x128xf32>
    %247 = vector.broadcast %218 : vector<1x128xf32> to vector<34x128xf32>
    %248 = arith.mulf %246, %247 : vector<34x128xf32>
    %249 = vector.broadcast %219 : vector<1x128xf32> to vector<34x128xf32>
    %250 = arith.addf %248, %249 : vector<34x128xf32>
    %251 = arith.truncf %250 : vector<34x128xf32> to vector<34x128xbf16>
    %c1_97 = arith.constant 1 : index
    %c0_98 = arith.constant 0 : index
    %c0_99 = arith.constant 0 : index
    %252 = vector.load %arg8[%c1_97, %c0_98, %c0_99] : memref<2x128x128xbf16, #tpu.memory_space<vmem>>, vector<1x128x128xbf16>
    %253 = vector.shape_cast %252 : vector<1x128x128xbf16> to vector<128x128xbf16>
    %cst_100 = arith.constant dense<0.000000e+00> : vector<34x128xf32>
    %254 = tpu.matmul %251, %253, %cst_100 {dimension_numbers = #tpu.dot_dimension_numbers<[1], [0], [0], [1], [0, 0, 1, 1], [], []>} : vector<34x128xbf16>, vector<128x128xbf16>, vector<34x128xf32> -> vector<34x128xf32>
    %255 = vector.broadcast %220 : vector<1x128xf32> to vector<34x128xf32>
    %256 = arith.addf %254, %255 : vector<34x128xf32>
    %c1_101 = arith.constant 1 : index
    %c0_102 = arith.constant 0 : index
    %c0_103 = arith.constant 0 : index
    %257 = vector.load %arg12[%c1_101, %c0_102, %c0_103] : memref<2x128x8xbf16, #tpu.memory_space<vmem>>, vector<1x128x8xbf16>
    %258 = vector.shape_cast %257 : vector<1x128x8xbf16> to vector<128x8xbf16>
    %cst_104 = arith.constant dense<0.000000e+00> : vector<34x8xf32>
    %259 = tpu.matmul %251, %258, %cst_104 {dimension_numbers = #tpu.dot_dimension_numbers<[1], [0], [0], [1], [0, 0, 1, 1], [], []>} : vector<34x128xbf16>, vector<128x8xbf16>, vector<34x8xf32> -> vector<34x8xf32>
    %260 = arith.truncf %259 : vector<34x8xf32> to vector<34x8xbf16>
    %c1_105 = arith.constant 1 : index
    %c0_106 = arith.constant 0 : index
    %c0_107 = arith.constant 0 : index
    %261 = vector.load %arg13[%c1_105, %c0_106, %c0_107] : memref<2x8x128xbf16, #tpu.memory_space<vmem>>, vector<1x8x128xbf16>
    %262 = vector.shape_cast %261 : vector<1x8x128xbf16> to vector<8x128xbf16>
    %cst_108 = arith.constant dense<0.000000e+00> : vector<34x128xf32>
    %263 = tpu.matmul %260, %262, %cst_108 {dimension_numbers = #tpu.dot_dimension_numbers<[1], [0], [0], [1], [0, 0, 1, 1], [], []>} : vector<34x8xbf16>, vector<8x128xbf16>, vector<34x128xf32> -> vector<34x128xf32>
    %cst_109 = arith.constant 1.000000e+00 : f32
    %264 = vector.broadcast %cst_109 : f32 to vector<34x128xf32>
    %265 = arith.mulf %264, %263 : vector<34x128xf32>
    %266 = arith.addf %256, %265 : vector<34x128xf32>
    %c1_110 = arith.constant 1 : index
    %c0_111 = arith.constant 0 : index
    %c0_112 = arith.constant 0 : index
    %267 = vector.load %arg9[%c1_110, %c0_111, %c0_112] : memref<2x128x128xbf16, #tpu.memory_space<vmem>>, vector<1x128x128xbf16>
    %268 = vector.shape_cast %267 : vector<1x128x128xbf16> to vector<128x128xbf16>
    %cst_113 = arith.constant dense<0.000000e+00> : vector<34x128xf32>
    %269 = tpu.matmul %251, %268, %cst_113 {dimension_numbers = #tpu.dot_dimension_numbers<[1], [0], [0], [1], [0, 0, 1, 1], [], []>} : vector<34x128xbf16>, vector<128x128xbf16>, vector<34x128xf32> -> vector<34x128xf32>
    %270 = vector.broadcast %221 : vector<1x128xf32> to vector<34x128xf32>
    %271 = arith.addf %269, %270 : vector<34x128xf32>
    %c1_114 = arith.constant 1 : index
    %c0_115 = arith.constant 0 : index
    %c0_116 = arith.constant 0 : index
    %272 = vector.load %arg10[%c1_114, %c0_115, %c0_116] : memref<2x128x128xbf16, #tpu.memory_space<vmem>>, vector<1x128x128xbf16>
    %273 = vector.shape_cast %272 : vector<1x128x128xbf16> to vector<128x128xbf16>
    %cst_117 = arith.constant dense<0.000000e+00> : vector<34x128xf32>
    %274 = tpu.matmul %251, %273, %cst_117 {dimension_numbers = #tpu.dot_dimension_numbers<[1], [0], [0], [1], [0, 0, 1, 1], [], []>} : vector<34x128xbf16>, vector<128x128xbf16>, vector<34x128xf32> -> vector<34x128xf32>
    %275 = vector.broadcast %222 : vector<1x128xf32> to vector<34x128xf32>
    %276 = arith.addf %274, %275 : vector<34x128xf32>
    %c1_118 = arith.constant 1 : index
    %c0_119 = arith.constant 0 : index
    %c0_120 = arith.constant 0 : index
    %277 = vector.load %arg14[%c1_118, %c0_119, %c0_120] : memref<2x128x8xbf16, #tpu.memory_space<vmem>>, vector<1x128x8xbf16>
    %278 = vector.shape_cast %277 : vector<1x128x8xbf16> to vector<128x8xbf16>
    %cst_121 = arith.constant dense<0.000000e+00> : vector<34x8xf32>
    %279 = tpu.matmul %251, %278, %cst_121 {dimension_numbers = #tpu.dot_dimension_numbers<[1], [0], [0], [1], [0, 0, 1, 1], [], []>} : vector<34x128xbf16>, vector<128x8xbf16>, vector<34x8xf32> -> vector<34x8xf32>
    %280 = arith.truncf %279 : vector<34x8xf32> to vector<34x8xbf16>
    %c1_122 = arith.constant 1 : index
    %c0_123 = arith.constant 0 : index
    %c0_124 = arith.constant 0 : index
    %281 = vector.load %arg15[%c1_122, %c0_123, %c0_124] : memref<2x8x128xbf16, #tpu.memory_space<vmem>>, vector<1x8x128xbf16>
    %282 = vector.shape_cast %281 : vector<1x8x128xbf16> to vector<8x128xbf16>
    %cst_125 = arith.constant dense<0.000000e+00> : vector<34x128xf32>
    %283 = tpu.matmul %280, %282, %cst_125 {dimension_numbers = #tpu.dot_dimension_numbers<[1], [0], [0], [1], [0, 0, 1, 1], [], []>} : vector<34x8xbf16>, vector<8x128xbf16>, vector<34x128xf32> -> vector<34x128xf32>
    %cst_126 = arith.constant 1.000000e+00 : f32
    %284 = vector.broadcast %cst_126 : f32 to vector<34x128xf32>
    %285 = arith.mulf %284, %283 : vector<34x128xf32>
    %286 = arith.addf %276, %285 : vector<34x128xf32>
    %cst_127 = arith.constant 0.176776692 : f32
    %287 = vector.broadcast %cst_127 : f32 to vector<34x128xf32>
    %288 = arith.mulf %266, %287 : vector<34x128xf32>
    %289 = vector.extract_strided_slice %288 {offsets = [0, 0], sizes = [34, 32], strides = [1, 1]} : vector<34x128xf32> to vector<34x32xf32>
    %290 = arith.truncf %289 : vector<34x32xf32> to vector<34x32xbf16>
    %291 = vector.extract_strided_slice %271 {offsets = [0, 0], sizes = [34, 32], strides = [1, 1]} : vector<34x128xf32> to vector<34x32xf32>
    %292 = arith.truncf %291 : vector<34x32xf32> to vector<34x32xbf16>
    %293 = vector.extract_strided_slice %286 {offsets = [0, 0], sizes = [34, 32], strides = [1, 1]} : vector<34x128xf32> to vector<34x32xf32>
    %294 = arith.truncf %293 : vector<34x32xf32> to vector<34x32xbf16>
    %cst_128 = arith.constant dense<0.000000e+00> : vector<34x34xf32>
    %295 = tpu.matmul %290, %292, %cst_128 {dimension_numbers = #tpu.dot_dimension_numbers<[1], [1], [0], [0], [0, 0, 1, 0], [], []>} : vector<34x32xbf16>, vector<34x32xbf16>, vector<34x34xf32> -> vector<34x34xf32>
    %296 = arith.addf %295, %6 : vector<34x34xf32>
    %cst_129 = arith.constant dense<0xFF800000> : vector<34xf32>
    %297 = vector.multi_reduction <maximumf>, %296, %cst_129 [1] : vector<34x34xf32> to vector<34xf32>
    %298 = vector.shape_cast %297 : vector<34xf32> to vector<34x1xf32>
    %299 = vector.broadcast %298 : vector<34x1xf32> to vector<34x34xf32>
    %300 = arith.subf %296, %299 : vector<34x34xf32>
    %301 = math.exp %300 : vector<34x34xf32>
    %cst_130 = arith.constant dense<0.000000e+00> : vector<34xf32>
    %302 = vector.multi_reduction <add>, %301, %cst_130 [1] : vector<34x34xf32> to vector<34xf32>
    %303 = vector.shape_cast %302 : vector<34xf32> to vector<34x1xf32>
    %304 = tpu.reciprocal %303 {approx = true} : vector<34x1xf32> -> vector<34x1xf32>
    %305 = vector.broadcast %304 : vector<34x1xf32> to vector<34x34xf32>
    %306 = arith.mulf %301, %305 : vector<34x34xf32>
    %307 = arith.truncf %306 : vector<34x34xf32> to vector<34x34xbf16>
    %cst_131 = arith.constant dense<0.000000e+00> : vector<34x32xf32>
    %308 = tpu.matmul %307, %294, %cst_131 {dimension_numbers = #tpu.dot_dimension_numbers<[1], [0], [0], [1], [0, 0, 1, 1], [], []>} : vector<34x34xbf16>, vector<34x32xbf16>, vector<34x32xf32> -> vector<34x32xf32>
    %309 = vector.extract_strided_slice %288 {offsets = [0, 32], sizes = [34, 32], strides = [1, 1]} : vector<34x128xf32> to vector<34x32xf32>
    %310 = arith.truncf %309 : vector<34x32xf32> to vector<34x32xbf16>
    %311 = vector.extract_strided_slice %271 {offsets = [0, 32], sizes = [34, 32], strides = [1, 1]} : vector<34x128xf32> to vector<34x32xf32>
    %312 = arith.truncf %311 : vector<34x32xf32> to vector<34x32xbf16>
    %313 = vector.extract_strided_slice %286 {offsets = [0, 32], sizes = [34, 32], strides = [1, 1]} : vector<34x128xf32> to vector<34x32xf32>
    %314 = arith.truncf %313 : vector<34x32xf32> to vector<34x32xbf16>
    %cst_132 = arith.constant dense<0.000000e+00> : vector<34x34xf32>
    %315 = tpu.matmul %310, %312, %cst_132 {dimension_numbers = #tpu.dot_dimension_numbers<[1], [1], [0], [0], [0, 0, 1, 0], [], []>} : vector<34x32xbf16>, vector<34x32xbf16>, vector<34x34xf32> -> vector<34x34xf32>
    %316 = arith.addf %315, %6 : vector<34x34xf32>
    %cst_133 = arith.constant dense<0xFF800000> : vector<34xf32>
    %317 = vector.multi_reduction <maximumf>, %316, %cst_133 [1] : vector<34x34xf32> to vector<34xf32>
    %318 = vector.shape_cast %317 : vector<34xf32> to vector<34x1xf32>
    %319 = vector.broadcast %318 : vector<34x1xf32> to vector<34x34xf32>
    %320 = arith.subf %316, %319 : vector<34x34xf32>
    %321 = math.exp %320 : vector<34x34xf32>
    %cst_134 = arith.constant dense<0.000000e+00> : vector<34xf32>
    %322 = vector.multi_reduction <add>, %321, %cst_134 [1] : vector<34x34xf32> to vector<34xf32>
    %323 = vector.shape_cast %322 : vector<34xf32> to vector<34x1xf32>
    %324 = tpu.reciprocal %323 {approx = true} : vector<34x1xf32> -> vector<34x1xf32>
    %325 = vector.broadcast %324 : vector<34x1xf32> to vector<34x34xf32>
    %326 = arith.mulf %321, %325 : vector<34x34xf32>
    %327 = arith.truncf %326 : vector<34x34xf32> to vector<34x34xbf16>
    %cst_135 = arith.constant dense<0.000000e+00> : vector<34x32xf32>
    %328 = tpu.matmul %327, %314, %cst_135 {dimension_numbers = #tpu.dot_dimension_numbers<[1], [0], [0], [1], [0, 0, 1, 1], [], []>} : vector<34x34xbf16>, vector<34x32xbf16>, vector<34x32xf32> -> vector<34x32xf32>
    %329 = vector.extract_strided_slice %288 {offsets = [0, 64], sizes = [34, 32], strides = [1, 1]} : vector<34x128xf32> to vector<34x32xf32>
    %330 = arith.truncf %329 : vector<34x32xf32> to vector<34x32xbf16>
    %331 = vector.extract_strided_slice %271 {offsets = [0, 64], sizes = [34, 32], strides = [1, 1]} : vector<34x128xf32> to vector<34x32xf32>
    %332 = arith.truncf %331 : vector<34x32xf32> to vector<34x32xbf16>
    %333 = vector.extract_strided_slice %286 {offsets = [0, 64], sizes = [34, 32], strides = [1, 1]} : vector<34x128xf32> to vector<34x32xf32>
    %334 = arith.truncf %333 : vector<34x32xf32> to vector<34x32xbf16>
    %cst_136 = arith.constant dense<0.000000e+00> : vector<34x34xf32>
    %335 = tpu.matmul %330, %332, %cst_136 {dimension_numbers = #tpu.dot_dimension_numbers<[1], [1], [0], [0], [0, 0, 1, 0], [], []>} : vector<34x32xbf16>, vector<34x32xbf16>, vector<34x34xf32> -> vector<34x34xf32>
    %336 = arith.addf %335, %6 : vector<34x34xf32>
    %cst_137 = arith.constant dense<0xFF800000> : vector<34xf32>
    %337 = vector.multi_reduction <maximumf>, %336, %cst_137 [1] : vector<34x34xf32> to vector<34xf32>
    %338 = vector.shape_cast %337 : vector<34xf32> to vector<34x1xf32>
    %339 = vector.broadcast %338 : vector<34x1xf32> to vector<34x34xf32>
    %340 = arith.subf %336, %339 : vector<34x34xf32>
    %341 = math.exp %340 : vector<34x34xf32>
    %cst_138 = arith.constant dense<0.000000e+00> : vector<34xf32>
    %342 = vector.multi_reduction <add>, %341, %cst_138 [1] : vector<34x34xf32> to vector<34xf32>
    %343 = vector.shape_cast %342 : vector<34xf32> to vector<34x1xf32>
    %344 = tpu.reciprocal %343 {approx = true} : vector<34x1xf32> -> vector<34x1xf32>
    %345 = vector.broadcast %344 : vector<34x1xf32> to vector<34x34xf32>
    %346 = arith.mulf %341, %345 : vector<34x34xf32>
    %347 = arith.truncf %346 : vector<34x34xf32> to vector<34x34xbf16>
    %cst_139 = arith.constant dense<0.000000e+00> : vector<34x32xf32>
    %348 = tpu.matmul %347, %334, %cst_139 {dimension_numbers = #tpu.dot_dimension_numbers<[1], [0], [0], [1], [0, 0, 1, 1], [], []>} : vector<34x34xbf16>, vector<34x32xbf16>, vector<34x32xf32> -> vector<34x32xf32>
    %349 = vector.extract_strided_slice %288 {offsets = [0, 96], sizes = [34, 32], strides = [1, 1]} : vector<34x128xf32> to vector<34x32xf32>
    %350 = arith.truncf %349 : vector<34x32xf32> to vector<34x32xbf16>
    %351 = vector.extract_strided_slice %271 {offsets = [0, 96], sizes = [34, 32], strides = [1, 1]} : vector<34x128xf32> to vector<34x32xf32>
    %352 = arith.truncf %351 : vector<34x32xf32> to vector<34x32xbf16>
    %353 = vector.extract_strided_slice %286 {offsets = [0, 96], sizes = [34, 32], strides = [1, 1]} : vector<34x128xf32> to vector<34x32xf32>
    %354 = arith.truncf %353 : vector<34x32xf32> to vector<34x32xbf16>
    %cst_140 = arith.constant dense<0.000000e+00> : vector<34x34xf32>
    %355 = tpu.matmul %350, %352, %cst_140 {dimension_numbers = #tpu.dot_dimension_numbers<[1], [1], [0], [0], [0, 0, 1, 0], [], []>} : vector<34x32xbf16>, vector<34x32xbf16>, vector<34x34xf32> -> vector<34x34xf32>
    %356 = arith.addf %355, %6 : vector<34x34xf32>
    %cst_141 = arith.constant dense<0xFF800000> : vector<34xf32>
    %357 = vector.multi_reduction <maximumf>, %356, %cst_141 [1] : vector<34x34xf32> to vector<34xf32>
    %358 = vector.shape_cast %357 : vector<34xf32> to vector<34x1xf32>
    %359 = vector.broadcast %358 : vector<34x1xf32> to vector<34x34xf32>
    %360 = arith.subf %356, %359 : vector<34x34xf32>
    %361 = math.exp %360 : vector<34x34xf32>
    %cst_142 = arith.constant dense<0.000000e+00> : vector<34xf32>
    %362 = vector.multi_reduction <add>, %361, %cst_142 [1] : vector<34x34xf32> to vector<34xf32>
    %363 = vector.shape_cast %362 : vector<34xf32> to vector<34x1xf32>
    %364 = tpu.reciprocal %363 {approx = true} : vector<34x1xf32> -> vector<34x1xf32>
    %365 = vector.broadcast %364 : vector<34x1xf32> to vector<34x34xf32>
    %366 = arith.mulf %361, %365 : vector<34x34xf32>
    %367 = arith.truncf %366 : vector<34x34xf32> to vector<34x34xbf16>
    %cst_143 = arith.constant dense<0.000000e+00> : vector<34x32xf32>
    %368 = tpu.matmul %367, %354, %cst_143 {dimension_numbers = #tpu.dot_dimension_numbers<[1], [0], [0], [1], [0, 0, 1, 1], [], []>} : vector<34x34xbf16>, vector<34x32xbf16>, vector<34x32xf32> -> vector<34x32xf32>
    %369 = tpu.concatenate %308, %328, %348, %368 in 1 : vector<34x32xf32>, vector<34x32xf32>, vector<34x32xf32>, vector<34x32xf32> -> vector<34x128xf32>
    %370 = arith.truncf %369 : vector<34x128xf32> to vector<34x128xbf16>
    %c1_144 = arith.constant 1 : index
    %c0_145 = arith.constant 0 : index
    %c0_146 = arith.constant 0 : index
    %371 = vector.load %arg11[%c1_144, %c0_145, %c0_146] : memref<2x128x128xbf16, #tpu.memory_space<vmem>>, vector<1x128x128xbf16>
    %372 = vector.shape_cast %371 : vector<1x128x128xbf16> to vector<128x128xbf16>
    %cst_147 = arith.constant dense<0.000000e+00> : vector<34x128xf32>
    %373 = tpu.matmul %370, %372, %cst_147 {dimension_numbers = #tpu.dot_dimension_numbers<[1], [0], [0], [1], [0, 0, 1, 1], [], []>} : vector<34x128xbf16>, vector<128x128xbf16>, vector<34x128xf32> -> vector<34x128xf32>
    %374 = vector.broadcast %223 : vector<1x128xf32> to vector<34x128xf32>
    %375 = arith.addf %373, %374 : vector<34x128xf32>
    %376 = arith.addf %375, %215 : vector<34x128xf32>
    %cst_148 = arith.constant dense<0.000000e+00> : vector<34xf32>
    %377 = vector.multi_reduction <add>, %376, %cst_148 [1] : vector<34x128xf32> to vector<34xf32>
    %378 = vector.shape_cast %377 : vector<34xf32> to vector<34x1xf32>
    %cst_149 = arith.constant 1.280000e+02 : f32
    %379 = vector.broadcast %cst_149 : f32 to vector<34x1xf32>
    %380 = arith.divf %378, %379 : vector<34x1xf32>
    %381 = vector.broadcast %380 : vector<34x1xf32> to vector<34x128xf32>
    %382 = arith.subf %376, %381 : vector<34x128xf32>
    %383 = arith.mulf %382, %382 : vector<34x128xf32>
    %cst_150 = arith.constant dense<0.000000e+00> : vector<34xf32>
    %384 = vector.multi_reduction <add>, %383, %cst_150 [1] : vector<34x128xf32> to vector<34xf32>
    %385 = vector.shape_cast %384 : vector<34xf32> to vector<34x1xf32>
    %cst_151 = arith.constant 1.280000e+02 : f32
    %386 = vector.broadcast %cst_151 : f32 to vector<34x1xf32>
    %387 = arith.divf %385, %386 : vector<34x1xf32>
    %388 = vector.broadcast %380 : vector<34x1xf32> to vector<34x128xf32>
    %389 = arith.subf %376, %388 : vector<34x128xf32>
    %cst_152 = arith.constant 9.99999996E-13 : f32
    %390 = vector.broadcast %cst_152 : f32 to vector<34x1xf32>
    %391 = arith.addf %387, %390 : vector<34x1xf32>
    %392 = math.rsqrt %391 : vector<34x1xf32>
    %393 = vector.broadcast %392 : vector<34x1xf32> to vector<34x128xf32>
    %394 = arith.mulf %389, %393 : vector<34x128xf32>
    %395 = vector.broadcast %224 : vector<1x128xf32> to vector<34x128xf32>
    %396 = arith.mulf %394, %395 : vector<34x128xf32>
    %397 = vector.broadcast %225 : vector<1x128xf32> to vector<34x128xf32>
    %398 = arith.addf %396, %397 : vector<34x128xf32>
    %399 = arith.truncf %398 : vector<34x128xf32> to vector<34x128xbf16>
    %c1_153 = arith.constant 1 : index
    %c0_154 = arith.constant 0 : index
    %c0_155 = arith.constant 0 : index
    %400 = vector.load %arg16[%c1_153, %c0_154, %c0_155] : memref<2x128x256xbf16, #tpu.memory_space<vmem>>, vector<1x128x256xbf16>
    %401 = vector.shape_cast %400 : vector<1x128x256xbf16> to vector<128x256xbf16>
    %cst_156 = arith.constant dense<0.000000e+00> : vector<34x256xf32>
    %402 = tpu.matmul %399, %401, %cst_156 {dimension_numbers = #tpu.dot_dimension_numbers<[1], [0], [0], [1], [0, 0, 1, 1], [], []>} : vector<34x128xbf16>, vector<128x256xbf16>, vector<34x256xf32> -> vector<34x256xf32>
    %403 = vector.broadcast %228 : vector<1x256xf32> to vector<34x256xf32>
    %404 = arith.addf %402, %403 : vector<34x256xf32>
    %cst_157 = arith.constant 5.000000e-01 : f32
    %405 = vector.broadcast %cst_157 : f32 to vector<34x256xf32>
    %406 = arith.mulf %405, %404 : vector<34x256xf32>
    %cst_158 = arith.constant 4.471500e-02 : f32
    %407 = vector.broadcast %cst_158 : f32 to vector<34x256xf32>
    %408 = arith.mulf %407, %404 : vector<34x256xf32>
    %409 = arith.mulf %408, %404 : vector<34x256xf32>
    %410 = arith.mulf %409, %404 : vector<34x256xf32>
    %411 = arith.addf %404, %410 : vector<34x256xf32>
    %cst_159 = arith.constant 0.797884583 : f32
    %412 = vector.broadcast %cst_159 : f32 to vector<34x256xf32>
    %413 = arith.mulf %412, %411 : vector<34x256xf32>
    %414 = math.tanh %413 : vector<34x256xf32>
    %cst_160 = arith.constant 1.000000e+00 : f32
    %415 = vector.broadcast %cst_160 : f32 to vector<34x256xf32>
    %416 = arith.addf %415, %414 : vector<34x256xf32>
    %417 = arith.mulf %406, %416 : vector<34x256xf32>
    %418 = arith.truncf %417 : vector<34x256xf32> to vector<34x256xbf16>
    %c1_161 = arith.constant 1 : index
    %c0_162 = arith.constant 0 : index
    %c0_163 = arith.constant 0 : index
    %419 = vector.load %arg17[%c1_161, %c0_162, %c0_163] : memref<2x256x128xbf16, #tpu.memory_space<vmem>>, vector<1x256x128xbf16>
    %420 = vector.shape_cast %419 : vector<1x256x128xbf16> to vector<256x128xbf16>
    %cst_164 = arith.constant dense<0.000000e+00> : vector<34x128xf32>
    %421 = tpu.matmul %418, %420, %cst_164 {dimension_numbers = #tpu.dot_dimension_numbers<[1], [0], [0], [1], [0, 0, 1, 1], [], []>} : vector<34x256xbf16>, vector<256x128xbf16>, vector<34x128xf32> -> vector<34x128xf32>
    %422 = vector.broadcast %226 : vector<1x128xf32> to vector<34x128xf32>
    %423 = arith.addf %421, %422 : vector<34x128xf32>
    %424 = arith.addf %423, %376 : vector<34x128xf32>
    %c0_165 = arith.constant 0 : index
    %c0_166 = arith.constant 0 : index
    %425 = vector.load %arg5[%c0_165, %c0_166] : memref<2x128xf32, #tpu.memory_space<vmem>>, vector<2x128xf32>
    %426 = vector.extract_strided_slice %425 {offsets = [0, 0], sizes = [1, 128], strides = [1, 1]} : vector<2x128xf32> to vector<1x128xf32>
    %427 = vector.extract_strided_slice %425 {offsets = [1, 0], sizes = [1, 128], strides = [1, 1]} : vector<2x128xf32> to vector<1x128xf32>
    %cst_167 = arith.constant dense<0.000000e+00> : vector<34xf32>
    %428 = vector.multi_reduction <add>, %424, %cst_167 [1] : vector<34x128xf32> to vector<34xf32>
    %429 = vector.shape_cast %428 : vector<34xf32> to vector<34x1xf32>
    %cst_168 = arith.constant 1.280000e+02 : f32
    %430 = vector.broadcast %cst_168 : f32 to vector<34x1xf32>
    %431 = arith.divf %429, %430 : vector<34x1xf32>
    %432 = vector.broadcast %431 : vector<34x1xf32> to vector<34x128xf32>
    %433 = arith.subf %424, %432 : vector<34x128xf32>
    %434 = arith.mulf %433, %433 : vector<34x128xf32>
    %cst_169 = arith.constant dense<0.000000e+00> : vector<34xf32>
    %435 = vector.multi_reduction <add>, %434, %cst_169 [1] : vector<34x128xf32> to vector<34xf32>
    %436 = vector.shape_cast %435 : vector<34xf32> to vector<34x1xf32>
    %cst_170 = arith.constant 1.280000e+02 : f32
    %437 = vector.broadcast %cst_170 : f32 to vector<34x1xf32>
    %438 = arith.divf %436, %437 : vector<34x1xf32>
    %439 = vector.broadcast %431 : vector<34x1xf32> to vector<34x128xf32>
    %440 = arith.subf %424, %439 : vector<34x128xf32>
    %cst_171 = arith.constant 9.99999996E-13 : f32
    %441 = vector.broadcast %cst_171 : f32 to vector<34x1xf32>
    %442 = arith.addf %438, %441 : vector<34x1xf32>
    %443 = math.rsqrt %442 : vector<34x1xf32>
    %444 = vector.broadcast %443 : vector<34x1xf32> to vector<34x128xf32>
    %445 = arith.mulf %440, %444 : vector<34x128xf32>
    %446 = vector.broadcast %426 : vector<1x128xf32> to vector<34x128xf32>
    %447 = arith.mulf %445, %446 : vector<34x128xf32>
    %448 = vector.broadcast %427 : vector<1x128xf32> to vector<34x128xf32>
    %449 = arith.addf %447, %448 : vector<34x128xf32>
    %c0_172 = arith.constant 0 : index
    %c0_173 = arith.constant 0 : index
    %450 = vector.load %arg6[%c0_172, %c0_173] : memref<128x2xf32, #tpu.memory_space<vmem>>, vector<128x2xf32>
    %cst_174 = arith.constant dense<0.000000e+00> : vector<34x2xf32>
    %451 = tpu.matmul %449, %450, %cst_174 {dimension_numbers = #tpu.dot_dimension_numbers<[1], [0], [0], [1], [0, 0, 1, 1], [], []>} : vector<34x128xf32>, vector<128x2xf32>, vector<34x2xf32> -> vector<34x2xf32>
    %c0_175 = arith.constant 0 : index
    %c0_176 = arith.constant 0 : index
    %452 = vector.load %arg7[%c0_175, %c0_176] : memref<1x2xf32, #tpu.memory_space<vmem>>, vector<1x2xf32>
    %453 = vector.broadcast %452 : vector<1x2xf32> to vector<34x2xf32>
    %454 = arith.addf %451, %453 : vector<34x2xf32>
    %455 = vector.extract_strided_slice %454 {offsets = [0, 0], sizes = [34, 1], strides = [1, 1]} : vector<34x2xf32> to vector<34x1xf32>
    %cst_177 = arith.constant 4.471500e-02 : f32
    %456 = vector.broadcast %cst_177 : f32 to vector<34x1xf32>
    %457 = arith.mulf %456, %455 : vector<34x1xf32>
    %458 = arith.mulf %457, %455 : vector<34x1xf32>
    %459 = arith.mulf %458, %455 : vector<34x1xf32>
    %460 = arith.addf %455, %459 : vector<34x1xf32>
    %cst_178 = arith.constant 0.797884583 : f32
    %461 = vector.broadcast %cst_178 : f32 to vector<34x1xf32>
    %462 = arith.mulf %461, %460 : vector<34x1xf32>
    %463 = math.tanh %462 : vector<34x1xf32>
    %cst_179 = arith.constant 1.000000e+00 : f32
    %464 = vector.broadcast %cst_179 : f32 to vector<34x1xf32>
    %465 = arith.addf %464, %463 : vector<34x1xf32>
    %cst_180 = arith.constant 5.000000e-01 : f32
    %466 = vector.broadcast %cst_180 : f32 to vector<34x1xf32>
    %467 = arith.mulf %466, %465 : vector<34x1xf32>
    %468 = tpu.concatenate %454, %467 in 1 : vector<34x2xf32>, vector<34x1xf32> -> vector<34x3xf32>
    %c0_181 = arith.constant 0 : index
    %c0_182 = arith.constant 0 : index
    %c0_183 = arith.constant 0 : index
    %469 = vector.load %arg20[%c0_181, %c0_182, %c0_183] : memref<1x34x3xf32, #tpu.memory_space<vmem>>, vector<1x34x3xf32>
    %470 = vector.shape_cast %469 : vector<1x34x3xf32> to vector<34x3xf32>
    %471 = vector.shape_cast %468 : vector<34x3xf32> to vector<1x34x3xf32>
    tpu.vector_store %arg20[%c0_181, %c0_182, %c0_183], %471 {strides = array<i32>} : memref<1x34x3xf32, #tpu.memory_space<vmem>>, vector<1x34x3xf32>,
    return
  }
  func.func @transform_0(%arg0: i32) -> (i32, i32, i32) {
    %c0_i32 = arith.constant 0 : i32
    %c0_i32_0 = arith.constant 0 : i32
    %c0_i32_1 = arith.constant 0 : i32
    return %arg0, %c0_i32, %c0_i32_0 : i32, i32, i32
  }
  func.func @transform_1(%arg0: i32) -> (i32, i32) {
    %c0_i32 = arith.constant 0 : i32
    %c0_i32_0 = arith.constant 0 : i32
    %c0_i32_1 = arith.constant 0 : i32
    return %c0_i32, %c0_i32_0 : i32, i32
  }
  func.func @transform_2(%arg0: i32) -> (i32, i32) {
    %c0_i32 = arith.constant 0 : i32
    %c0_i32_0 = arith.constant 0 : i32
    %c0_i32_1 = arith.constant 0 : i32
    return %c0_i32, %c0_i32_0 : i32, i32
  }
  func.func @transform_3(%arg0: i32) -> (i32, i32) {
    %c0_i32 = arith.constant 0 : i32
    %c0_i32_0 = arith.constant 0 : i32
    %c0_i32_1 = arith.constant 0 : i32
    return %c0_i32, %c0_i32_0 : i32, i32
  }
  func.func @transform_4(%arg0: i32) -> (i32, i32) {
    %c0_i32 = arith.constant 0 : i32
    %c0_i32_0 = arith.constant 0 : i32
    %c0_i32_1 = arith.constant 0 : i32
    return %c0_i32, %c0_i32_0 : i32, i32
  }
  func.func @transform_5(%arg0: i32) -> (i32, i32) {
    %c0_i32 = arith.constant 0 : i32
    %c0_i32_0 = arith.constant 0 : i32
    %c0_i32_1 = arith.constant 0 : i32
    return %c0_i32, %c0_i32_0 : i32, i32
  }
  func.func @transform_6(%arg0: i32) -> (i32, i32) {
    %c0_i32 = arith.constant 0 : i32
    %c0_i32_0 = arith.constant 0 : i32
    %c0_i32_1 = arith.constant 0 : i32
    return %c0_i32, %c0_i32_0 : i32, i32
  }
  func.func @transform_7(%arg0: i32) -> (i32, i32, i32) {
    %c0_i32 = arith.constant 0 : i32
    %c0_i32_0 = arith.constant 0 : i32
    %c0_i32_1 = arith.constant 0 : i32
    %c0_i32_2 = arith.constant 0 : i32
    return %c0_i32, %c0_i32_0, %c0_i32_1 : i32, i32, i32
  }
  func.func @transform_8(%arg0: i32) -> (i32, i32, i32) {
    %c0_i32 = arith.constant 0 : i32
    %c0_i32_0 = arith.constant 0 : i32
    %c0_i32_1 = arith.constant 0 : i32
    %c0_i32_2 = arith.constant 0 : i32
    return %c0_i32, %c0_i32_0, %c0_i32_1 : i32, i32, i32
  }
  func.func @transform_9(%arg0: i32) -> (i32, i32, i32) {
    %c0_i32 = arith.constant 0 : i32
    %c0_i32_0 = arith.constant 0 : i32
    %c0_i32_1 = arith.constant 0 : i32
    %c0_i32_2 = arith.constant 0 : i32
    return %c0_i32, %c0_i32_0, %c0_i32_1 : i32, i32, i32
  }
  func.func @transform_10(%arg0: i32) -> (i32, i32, i32) {
    %c0_i32 = arith.constant 0 : i32
    %c0_i32_0 = arith.constant 0 : i32
    %c0_i32_1 = arith.constant 0 : i32
    %c0_i32_2 = arith.constant 0 : i32
    return %c0_i32, %c0_i32_0, %c0_i32_1 : i32, i32, i32
  }
  func.func @transform_11(%arg0: i32) -> (i32, i32, i32) {
    %c0_i32 = arith.constant 0 : i32
    %c0_i32_0 = arith.constant 0 : i32
    %c0_i32_1 = arith.constant 0 : i32
    %c0_i32_2 = arith.constant 0 : i32
    return %c0_i32, %c0_i32_0, %c0_i32_1 : i32, i32, i32
  }
  func.func @transform_12(%arg0: i32) -> (i32, i32, i32) {
    %c0_i32 = arith.constant 0 : i32
    %c0_i32_0 = arith.constant 0 : i32
    %c0_i32_1 = arith.constant 0 : i32
    %c0_i32_2 = arith.constant 0 : i32
    return %c0_i32, %c0_i32_0, %c0_i32_1 : i32, i32, i32
  }
  func.func @transform_13(%arg0: i32) -> (i32, i32, i32) {
    %c0_i32 = arith.constant 0 : i32
    %c0_i32_0 = arith.constant 0 : i32
    %c0_i32_1 = arith.constant 0 : i32
    %c0_i32_2 = arith.constant 0 : i32
    return %c0_i32, %c0_i32_0, %c0_i32_1 : i32, i32, i32
  }
  func.func @transform_14(%arg0: i32) -> (i32, i32, i32) {
    %c0_i32 = arith.constant 0 : i32
    %c0_i32_0 = arith.constant 0 : i32
    %c0_i32_1 = arith.constant 0 : i32
    %c0_i32_2 = arith.constant 0 : i32
    return %c0_i32, %c0_i32_0, %c0_i32_1 : i32, i32, i32
  }
  func.func @transform_15(%arg0: i32) -> (i32, i32, i32) {
    %c0_i32 = arith.constant 0 : i32
    %c0_i32_0 = arith.constant 0 : i32
    %c0_i32_1 = arith.constant 0 : i32
    %c0_i32_2 = arith.constant 0 : i32
    return %c0_i32, %c0_i32_0, %c0_i32_1 : i32, i32, i32
  }
  func.func @transform_16(%arg0: i32) -> (i32, i32, i32) {
    %c0_i32 = arith.constant 0 : i32
    %c0_i32_0 = arith.constant 0 : i32
    %c0_i32_1 = arith.constant 0 : i32
    %c0_i32_2 = arith.constant 0 : i32
    return %c0_i32, %c0_i32_0, %c0_i32_1 : i32, i32, i32
  }
  func.func @transform_17(%arg0: i32) -> (i32, i32, i32) {
    %c0_i32 = arith.constant 0 : i32
    %c0_i32_0 = arith.constant 0 : i32
    %c0_i32_1 = arith.constant 0 : i32
    %c0_i32_2 = arith.constant 0 : i32
    return %c0_i32, %c0_i32_0, %c0_i32_1 : i32, i32, i32
  }
  func.func @transform_18(%arg0: i32) -> (i32, i32, i32) {
    %c0_i32 = arith.constant 0 : i32
    %c0_i32_0 = arith.constant 0 : i32
    %c0_i32_1 = arith.constant 0 : i32
    %c0_i32_2 = arith.constant 0 : i32
    return %c0_i32, %c0_i32_0, %c0_i32_1 : i32, i32, i32
  }
  func.func @transform_19(%arg0: i32) -> (i32, i32, i32) {
    %c0_i32 = arith.constant 0 : i32
    %c0_i32_0 = arith.constant 0 : i32
    %c0_i32_1 = arith.constant 0 : i32
    return %arg0, %c0_i32, %c0_i32_0 : i32, i32, i32
  }
}

</mosaic_0001>

<llo_original>
// kernel: tile.9
$region0: #{tile.9}
  %s0 = inlined_call_operand.vmem [shape: f32[2,17,128], index: 0, kind: input, shape index: {}]
  %s1 = inlined_call_operand.vmem [shape: f32[34,128], index: 1, kind: output, shape index: {}]
  %v2 = vld [vmem:[%s0] sm:$0xff]
  %3 = vst [vmem:[%s1] sm:$0xff] %v2
  %s4 = scalar_lea.vmem %s0, 8
  %v5 = vld [vmem:[%s4] sm:$0xff]
  %s6 = scalar_lea.vmem %s1, 8
  %7 = vst [vmem:[%s6] sm:$0xff] %v5
  %s8 = scalar_lea.vmem %s0, 16
  %s9 = smov 3
  %v10 = vld [vmem:[%s8] ss:$8 sm:%s9]
  %s11 = scalar_lea.vmem %s1, 16
  %12 = vst [vmem:[%s11] sm:$0x3] %v10
  %s13 = scalar_lea.vmem %s0, 25
  %v14 = vld [vmem:[%s13] sm:$0xff]
  %s15 = scalar_lea.vmem %s1, 18
  %16 = vst [vmem:[%s15] sm:$0xff] %v14
  %s17 = scalar_lea.vmem %s0, 33
  %v18 = vld [vmem:[%s17] sm:$0xff]
  %s19 = scalar_lea.vmem %s1, 26
  %20 = vst [vmem:[%s19] sm:$0xff] %v18

// kernel: covit_forward.1
$region0: #{covit_forward.1}
  #allocation0 [shape = 'u32[]', space=smem, size = 0x4, offset = 0x4, fixed_abs, tag = 'smem constant byte address 0x4 - core index']
  #allocation1 [shape = 'u32[72,128]{1,0:T(1,128)}', space=vmem, size = 0x9000, scoped, tag = 'internal scratch']
  %s0 = inlined_call_operand.vmem [shape: bf16[2,34,192], index: 0, kind: input, shape index: {}]
  %s1 = inlined_call_operand.vmem [shape: bf16[192,128], index: 1, kind: input, shape index: {}]
  %s2 = inlined_call_operand.vmem [shape: f32[34,128], index: 2, kind: input, shape index: {}]
  %s3 = inlined_call_operand.vmem [shape: f32[34,34], index: 3, kind: input, shape index: {}]
  %s4 = inlined_call_operand.vmem [shape: f32[2,128], index: 4, kind: input, shape index: {}]
  %s5 = inlined_call_operand.vmem [shape: f32[128,2], index: 5, kind: input, shape index: {}]
  %s6 = inlined_call_operand.vmem [shape: f32[1,2], index: 6, kind: input, shape index: {}]
  %s7 = inlined_call_operand.vmem [shape: bf16[2,128,128], index: 7, kind: input, shape index: {}]
  %s8 = inlined_call_operand.vmem [shape: bf16[2,128,128], index: 8, kind: input, shape index: {}]
  %s9 = inlined_call_operand.vmem [shape: bf16[2,128,128], index: 9, kind: input, shape index: {}]
  %s10 = inlined_call_operand.vmem [shape: bf16[2,128,128], index: 10, kind: input, shape index: {}]
  %s11 = inlined_call_operand.vmem [shape: bf16[2,128,8], index: 11, kind: input, shape index: {}]
  %s12 = inlined_call_operand.vmem [shape: bf16[2,8,128], index: 12, kind: input, shape index: {}]
  %s13 = inlined_call_operand.vmem [shape: bf16[2,128,8], index: 13, kind: input, shape index: {}]
  %s14 = inlined_call_operand.vmem [shape: bf16[2,8,128], index: 14, kind: input, shape index: {}]
  %s15 = inlined_call_operand.vmem [shape: bf16[2,128,256], index: 15, kind: input, shape index: {}]
  %s16 = inlined_call_operand.vmem [shape: bf16[2,256,128], index: 16, kind: input, shape index: {}]
  %s17 = inlined_call_operand.vmem [shape: f32[2,9,128], index: 17, kind: input, shape index: {}]
  %s18 = inlined_call_operand.vmem [shape: f32[2,1,256], index: 18, kind: input, shape index: {}]
  %s19 = inlined_call_operand.vmem [shape: f32[2,34,3], index: 19, kind: output, shape index: {}]
  %s20 = sld [smem:[#allocation0]]
  $region109: #{covit_forward.1} parent=0
    _
  %s22 = ssub.s32 1, %s20
  %s23 = scalar_select 0, %s22, %s20
  loop: start=0, step=1, limit=4
  $region2: #{covit_forward.1} parent=0 // loop_pre_header
    _
  $region3: #{covit_forward.1} parent=0 // loop_header
    %s25 = sphi 0, %s29
    %p26 = scmp.ge.s32.totalorder %s25, 4
    %s35 = sphi 0, %s37
    %s38 = sphi 0, %s35
    %s39 = sphi 0, %s38
    %s55 = sphi 0, %s39
    %s59 = sphi 0, %s59
    %s61 = sphi 0, %s59
    %s62 = sphi 0, %s61
    %s76 = sphi 0, %s62
    %s80 = sphi 0, %s80
    %s82 = sphi 0, %s80
    %s83 = sphi 0, %s82
    %s97 = sphi 0, %s83
    %s101 = sphi 0, %s101
    %s103 = sphi 0, %s101
    %s104 = sphi 0, %s103
    %s118 = sphi 0, %s104
    %s122 = sphi 0, %s122
    %s124 = sphi 0, %s122
    %s125 = sphi 0, %s124
    %s139 = sphi 0, %s125
    %s143 = sphi 0, %s143
    %s145 = sphi 0, %s143
    %s146 = sphi 0, %s145
    %s160 = sphi 0, %s146
    %s164 = sphi 0, %s164
    %s166 = sphi 0, %s164
    %s167 = sphi 0, %s166
    %s181 = sphi 0, %s167
    %s185 = sphi 0, %s185
    %s187 = sphi 0, %s185
    %s188 = sphi 0, %s187
    %s202 = sphi 0, %s188
    %s206 = sphi 0, %s206
    %s208 = sphi 0, %s206
    %s209 = sphi 0, %s208
    %s223 = sphi 0, %s209
    %s227 = sphi 0, %s227
    %s229 = sphi 0, %s227
    %s230 = sphi 0, %s229
    %s244 = sphi 0, %s230
    %s248 = sphi 0, %s248
    %s250 = sphi 0, %s248
    %s251 = sphi 0, %s250
    %s265 = sphi 0, %s251
    %s269 = sphi 0, %s269
    %s271 = sphi 0, %s269
    %s272 = sphi 0, %s271
    %s286 = sphi 0, %s272
    %s290 = sphi 0, %s290
    %s292 = sphi 0, %s290
    %s293 = sphi 0, %s292
    %s307 = sphi 0, %s293
    %s311 = sphi 0, %s311
    %s313 = sphi 0, %s311
    %s314 = sphi 0, %s313
    %s328 = sphi 0, %s314
    %s332 = sphi 0, %s332
    %s334 = sphi 0, %s332
    %s335 = sphi 0, %s334
    %s349 = sphi 0, %s335
    %s353 = sphi 0, %s353
    %s355 = sphi 0, %s353
    %s356 = sphi 0, %s355
    %s370 = sphi 0, %s356
    %s374 = sphi 0, %s374
    %s376 = sphi 0, %s374
    %s377 = sphi 0, %s376
    %s391 = sphi 0, %s377
    %s395 = sphi 0, %s395
    %s397 = sphi 0, %s395
    %s398 = sphi 0, %s397
    %s412 = sphi 0, %s398
    %s416 = sphi 0, %s416
    %s418 = sphi 0, %s416
    %s419 = sphi 0, %s418
    %s433 = sphi 0, %s419
    %s439 = sphi 0, %s441
    %s442 = sphi 0, %s439
    %s443 = sphi 0, %s442
    %s459 = sphi 0, %s443
  $region4: #{covit_forward.1} parent=0 // loop_header_branch
    %28 = sbr.rel (%p26) target = $region8
  $region5: #{covit_forward.1} parent=0 // loop_body
    %s30 = ssub.s32 %s25, 1
    %s31 = ssub.s32 %s25, 2
    %s32 = sadd.s32 %s25, 1
    %s33 = ssub.s32 %s25, %s32
    %p34 = scmp.eq.s32.totalorder %s33, 0
    %s36 = sadd.s32 %s35, 1
    %s37 = scalar_select %p34, %s35, %s36
    %p40 = pneg %p34
    %p41 = scmp.eq.s32.totalorder %s25, 1
    %p42 = por %p40, %p41
    %p43 = scmp.ne.s32.totalorder %s35, %s38
    %p44 = scmp.eq.s32.totalorder %s25, 0
    %p45 = por %p43, %p44
    %p46 = scmp.ne.s32.totalorder %s35, %s38
    %p47 = scmp.eq.s32.totalorder %s30, 1
    %p48 = por %p46, %p47
    %p49 = scmp.ne.s32.totalorder %s38, %s39
    %p50 = scmp.eq.s32.totalorder %s30, 0
    %p51 = por %p49, %p50
    %p52 = scmp.ne.s32.totalorder %s38, %s39
    %p53 = scmp.eq.s32.totalorder %s31, 1
    %p54 = por %p52, %p53
    %p56 = scmp.ne.s32.totalorder %s39, %s55
    %p57 = scmp.eq.s32.totalorder %s31, 0
    %p58 = por %p56, %p57
    %s60 = sadd.s32 %s59, 1
    %p63 = scmp.eq.s32.totalorder %s25, 1
    %p64 = scmp.ne.s32.totalorder %s59, %s61
    %p65 = scmp.eq.s32.totalorder %s25, 0
    %p66 = por %p64, %p65
    %p67 = scmp.ne.s32.totalorder %s59, %s61
    %p68 = scmp.eq.s32.totalorder %s30, 1
    %p69 = por %p67, %p68
    %p70 = scmp.ne.s32.totalorder %s61, %s62
    %p71 = scmp.eq.s32.totalorder %s30, 0
    %p72 = por %p70, %p71
    %p73 = scmp.ne.s32.totalorder %s61, %s62
    %p74 = scmp.eq.s32.totalorder %s31, 1
    %p75 = por %p73, %p74
    %p77 = scmp.ne.s32.totalorder %s62, %s76
    %p78 = scmp.eq.s32.totalorder %s31, 0
    %p79 = por %p77, %p78
    %s81 = sadd.s32 %s80, 1
    %p84 = scmp.eq.s32.totalorder %s25, 1
    %p85 = scmp.ne.s32.totalorder %s80, %s82
    %p86 = scmp.eq.s32.totalorder %s25, 0
    %p87 = por %p85, %p86
    %p88 = scmp.ne.s32.totalorder %s80, %s82
    %p89 = scmp.eq.s32.totalorder %s30, 1
    %p90 = por %p88, %p89
    %p91 = scmp.ne.s32.totalorder %s82, %s83
    %p92 = scmp.eq.s32.totalorder %s30, 0
    %p93 = por %p91, %p92
    %p94 = scmp.ne.s32.totalorder %s82, %s83
    %p95 = scmp.eq.s32.totalorder %s31, 1
    %p96 = por %p94, %p95
    %p98 = scmp.ne.s32.totalorder %s83, %s97
    %p99 = scmp.eq.s32.totalorder %s31, 0
    %p100 = por %p98, %p99
    %s102 = sadd.s32 %s101, 1
    %p105 = scmp.eq.s32.totalorder %s25, 1
    %p106 = scmp.ne.s32.totalorder %s101, %s103
    %p107 = scmp.eq.s32.totalorder %s25, 0
    %p108 = por %p106, %p107
    %p109 = scmp.ne.s32.totalorder %s101, %s103
    %p110 = scmp.eq.s32.totalorder %s30, 1
    %p111 = por %p109, %p110
    %p112 = scmp.ne.s32.totalorder %s103, %s104
    %p113 = scmp.eq.s32.totalorder %s30, 0
    %p114 = por %p112, %p113
    %p115 = scmp.ne.s32.totalorder %s103, %s104
    %p116 = scmp.eq.s32.totalorder %s31, 1
    %p117 = por %p115, %p116
    %p119 = scmp.ne.s32.totalorder %s104, %s118
    %p120 = scmp.eq.s32.totalorder %s31, 0
    %p121 = por %p119, %p120
    %s123 = sadd.s32 %s122, 1
    %p126 = scmp.eq.s32.totalorder %s25, 1
    %p127 = scmp.ne.s32.totalorder %s122, %s124
    %p128 = scmp.eq.s32.totalorder %s25, 0
    %p129 = por %p127, %p128
    %p130 = scmp.ne.s32.totalorder %s122, %s124
    %p131 = scmp.eq.s32.totalorder %s30, 1
    %p132 = por %p130, %p131
    %p133 = scmp.ne.s32.totalorder %s124, %s125
    %p134 = scmp.eq.s32.totalorder %s30, 0
    %p135 = por %p133, %p134
    %p136 = scmp.ne.s32.totalorder %s124, %s125
    %p137 = scmp.eq.s32.totalorder %s31, 1
    %p138 = por %p136, %p137
    %p140 = scmp.ne.s32.totalorder %s125, %s139
    %p141 = scmp.eq.s32.totalorder %s31, 0
    %p142 = por %p140, %p141
    %s144 = sadd.s32 %s143, 1
    %p147 = scmp.eq.s32.totalorder %s25, 1
    %p148 = scmp.ne.s32.totalorder %s143, %s145
    %p149 = scmp.eq.s32.totalorder %s25, 0
    %p150 = por %p148, %p149
    %p151 = scmp.ne.s32.totalorder %s143, %s145
    %p152 = scmp.eq.s32.totalorder %s30, 1
    %p153 = por %p151, %p152
    %p154 = scmp.ne.s32.totalorder %s145, %s146
    %p155 = scmp.eq.s32.totalorder %s30, 0
    %p156 = por %p154, %p155
    %p157 = scmp.ne.s32.totalorder %s145, %s146
    %p158 = scmp.eq.s32.totalorder %s31, 1
    %p159 = por %p157, %p158
    %p161 = scmp.ne.s32.totalorder %s146, %s160
    %p162 = scmp.eq.s32.totalorder %s31, 0
    %p163 = por %p161, %p162
    %s165 = sadd.s32 %s164, 1
    %p168 = scmp.eq.s32.totalorder %s25, 1
    %p169 = scmp.ne.s32.totalorder %s164, %s166
    %p170 = scmp.eq.s32.totalorder %s25, 0
    %p171 = por %p169, %p170
    %p172 = scmp.ne.s32.totalorder %s164, %s166
    %p173 = scmp.eq.s32.totalorder %s30, 1
    %p174 = por %p172, %p173
    %p175 = scmp.ne.s32.totalorder %s166, %s167
    %p176 = scmp.eq.s32.totalorder %s30, 0
    %p177 = por %p175, %p176
    %p178 = scmp.ne.s32.totalorder %s166, %s167
    %p179 = scmp.eq.s32.totalorder %s31, 1
    %p180 = por %p178, %p179
    %p182 = scmp.ne.s32.totalorder %s167, %s181
    %p183 = scmp.eq.s32.totalorder %s31, 0
    %p184 = por %p182, %p183
    %s186 = sadd.s32 %s185, 1
    %p189 = scmp.eq.s32.totalorder %s25, 1
    %p190 = scmp.ne.s32.totalorder %s185, %s187
    %p191 = scmp.eq.s32.totalorder %s25, 0
    %p192 = por %p190, %p191
    %p193 = scmp.ne.s32.totalorder %s185, %s187
    %p194 = scmp.eq.s32.totalorder %s30, 1
    %p195 = por %p193, %p194
    %p196 = scmp.ne.s32.totalorder %s187, %s188
    %p197 = scmp.eq.s32.totalorder %s30, 0
    %p198 = por %p196, %p197
    %p199 = scmp.ne.s32.totalorder %s187, %s188
    %p200 = scmp.eq.s32.totalorder %s31, 1
    %p201 = por %p199, %p200
    %p203 = scmp.ne.s32.totalorder %s188, %s202
    %p204 = scmp.eq.s32.totalorder %s31, 0
    %p205 = por %p203, %p204
    %s207 = sadd.s32 %s206, 1
    %p210 = scmp.eq.s32.totalorder %s25, 1
    %p211 = scmp.ne.s32.totalorder %s206, %s208
    %p212 = scmp.eq.s32.totalorder %s25, 0
    %p213 = por %p211, %p212
    %p214 = scmp.ne.s32.totalorder %s206, %s208
    %p215 = scmp.eq.s32.totalorder %s30, 1
    %p216 = por %p214, %p215
    %p217 = scmp.ne.s32.totalorder %s208, %s209
    %p218 = scmp.eq.s32.totalorder %s30, 0
    %p219 = por %p217, %p218
    %p220 = scmp.ne.s32.totalorder %s208, %s209
    %p221 = scmp.eq.s32.totalorder %s31, 1
    %p222 = por %p220, %p221
    %p224 = scmp.ne.s32.totalorder %s209, %s223
    %p225 = scmp.eq.s32.totalorder %s31, 0
    %p226 = por %p224, %p225
    %s228 = sadd.s32 %s227, 1
    %p231 = scmp.eq.s32.totalorder %s25, 1
    %p232 = scmp.ne.s32.totalorder %s227, %s229
    %p233 = scmp.eq.s32.totalorder %s25, 0
    %p234 = por %p232, %p233
    %p235 = scmp.ne.s32.totalorder %s227, %s229
    %p236 = scmp.eq.s32.totalorder %s30, 1
    %p237 = por %p235, %p236
    %p238 = scmp.ne.s32.totalorder %s229, %s230
    %p239 = scmp.eq.s32.totalorder %s30, 0
    %p240 = por %p238, %p239
    %p241 = scmp.ne.s32.totalorder %s229, %s230
    %p242 = scmp.eq.s32.totalorder %s31, 1
    %p243 = por %p241, %p242
    %p245 = scmp.ne.s32.totalorder %s230, %s244
    %p246 = scmp.eq.s32.totalorder %s31, 0
    %p247 = por %p245, %p246
    %s249 = sadd.s32 %s248, 1
    %p252 = scmp.eq.s32.totalorder %s25, 1
    %p253 = scmp.ne.s32.totalorder %s248, %s250
    %p254 = scmp.eq.s32.totalorder %s25, 0
    %p255 = por %p253, %p254
    %p256 = scmp.ne.s32.totalorder %s248, %s250
    %p257 = scmp.eq.s32.totalorder %s30, 1
    %p258 = por %p256, %p257
    %p259 = scmp.ne.s32.totalorder %s250, %s251
    %p260 = scmp.eq.s32.totalorder %s30, 0
    %p261 = por %p259, %p260
    %p262 = scmp.ne.s32.totalorder %s250, %s251
    %p263 = scmp.eq.s32.totalorder %s31, 1
    %p264 = por %p262, %p263
    %p266 = scmp.ne.s32.totalorder %s251, %s265
    %p267 = scmp.eq.s32.totalorder %s31, 0
    %p268 = por %p266, %p267
    %s270 = sadd.s32 %s269, 1
    %p273 = scmp.eq.s32.totalorder %s25, 1
    %p274 = scmp.ne.s32.totalorder %s269, %s271
    %p275 = scmp.eq.s32.totalorder %s25, 0
    %p276 = por %p274, %p275
    %p277 = scmp.ne.s32.totalorder %s269, %s271
    %p278 = scmp.eq.s32.totalorder %s30, 1
    %p279 = por %p277, %p278
    %p280 = scmp.ne.s32.totalorder %s271, %s272
    %p281 = scmp.eq.s32.totalorder %s30, 0
    %p282 = por %p280, %p281
    %p283 = scmp.ne.s32.totalorder %s271, %s272
    %p284 = scmp.eq.s32.totalorder %s31, 1
    %p285 = por %p283, %p284
    %p287 = scmp.ne.s32.totalorder %s272, %s286
    %p288 = scmp.eq.s32.totalorder %s31, 0
    %p289 = por %p287, %p288
    %s291 = sadd.s32 %s290, 1
    %p294 = scmp.eq.s32.totalorder %s25, 1
    %p295 = scmp.ne.s32.totalorder %s290, %s292
    %p296 = scmp.eq.s32.totalorder %s25, 0
    %p297 = por %p295, %p296
    %p298 = scmp.ne.s32.totalorder %s290, %s292
    %p299 = scmp.eq.s32.totalorder %s30, 1
    %p300 = por %p298, %p299
    %p301 = scmp.ne.s32.totalorder %s292, %s293
    %p302 = scmp.eq.s32.totalorder %s30, 0
    %p303 = por %p301, %p302
    %p304 = scmp.ne.s32.totalorder %s292, %s293
    %p305 = scmp.eq.s32.totalorder %s31, 1
    %p306 = por %p304, %p305
    %p308 = scmp.ne.s32.totalorder %s293, %s307
    %p309 = scmp.eq.s32.totalorder %s31, 0
    %p310 = por %p308, %p309
    %s312 = sadd.s32 %s311, 1
    %p315 = scmp.eq.s32.totalorder %s25, 1
    %p316 = scmp.ne.s32.totalorder %s311, %s313
    %p317 = scmp.eq.s32.totalorder %s25, 0
    %p318 = por %p316, %p317
    %p319 = scmp.ne.s32.totalorder %s311, %s313
    %p320 = scmp.eq.s32.totalorder %s30, 1
    %p321 = por %p319, %p320
    %p322 = scmp.ne.s32.totalorder %s313, %s314
    %p323 = scmp.eq.s32.totalorder %s30, 0
    %p324 = por %p322, %p323
    %p325 = scmp.ne.s32.totalorder %s313, %s314
    %p326 = scmp.eq.s32.totalorder %s31, 1
    %p327 = por %p325, %p326
    %p329 = scmp.ne.s32.totalorder %s314, %s328
    %p330 = scmp.eq.s32.totalorder %s31, 0
    %p331 = por %p329, %p330
    %s333 = sadd.s32 %s332, 1
    %p336 = scmp.eq.s32.totalorder %s25, 1
    %p337 = scmp.ne.s32.totalorder %s332, %s334
    %p338 = scmp.eq.s32.totalorder %s25, 0
    %p339 = por %p337, %p338
    %p340 = scmp.ne.s32.totalorder %s332, %s334
    %p341 = scmp.eq.s32.totalorder %s30, 1
    %p342 = por %p340, %p341
    %p343 = scmp.ne.s32.totalorder %s334, %s335
    %p344 = scmp.eq.s32.totalorder %s30, 0
    %p345 = por %p343, %p344
    %p346 = scmp.ne.s32.totalorder %s334, %s335
    %p347 = scmp.eq.s32.totalorder %s31, 1
    %p348 = por %p346, %p347
    %p350 = scmp.ne.s32.totalorder %s335, %s349
    %p351 = scmp.eq.s32.totalorder %s31, 0
    %p352 = por %p350, %p351
    %s354 = sadd.s32 %s353, 1
    %p357 = scmp.eq.s32.totalorder %s25, 1
    %p358 = scmp.ne.s32.totalorder %s353, %s355
    %p359 = scmp.eq.s32.totalorder %s25, 0
    %p360 = por %p358, %p359
    %p361 = scmp.ne.s32.totalorder %s353, %s355
    %p362 = scmp.eq.s32.totalorder %s30, 1
    %p363 = por %p361, %p362
    %p364 = scmp.ne.s32.totalorder %s355, %s356
    %p365 = scmp.eq.s32.totalorder %s30, 0
    %p366 = por %p364, %p365
    %p367 = scmp.ne.s32.totalorder %s355, %s356
    %p368 = scmp.eq.s32.totalorder %s31, 1
    %p369 = por %p367, %p368
    %p371 = scmp.ne.s32.totalorder %s356, %s370
    %p372 = scmp.eq.s32.totalorder %s31, 0
    %p373 = por %p371, %p372
    %s375 = sadd.s32 %s374, 1
    %p378 = scmp.eq.s32.totalorder %s25, 1
    %p379 = scmp.ne.s32.totalorder %s374, %s376
    %p380 = scmp.eq.s32.totalorder %s25, 0
    %p381 = por %p379, %p380
    %p382 = scmp.ne.s32.totalorder %s374, %s376
    %p383 = scmp.eq.s32.totalorder %s30, 1
    %p384 = por %p382, %p383
    %p385 = scmp.ne.s32.totalorder %s376, %s377
    %p386 = scmp.eq.s32.totalorder %s30, 0
    %p387 = por %p385, %p386
    %p388 = scmp.ne.s32.totalorder %s376, %s377
    %p389 = scmp.eq.s32.totalorder %s31, 1
    %p390 = por %p388, %p389
    %p392 = scmp.ne.s32.totalorder %s377, %s391
    %p393 = scmp.eq.s32.totalorder %s31, 0
    %p394 = por %p392, %p393
    %s396 = sadd.s32 %s395, 1
    %p399 = scmp.eq.s32.totalorder %s25, 1
    %p400 = scmp.ne.s32.totalorder %s395, %s397
    %p401 = scmp.eq.s32.totalorder %s25, 0
    %p402 = por %p400, %p401
    %p403 = scmp.ne.s32.totalorder %s395, %s397
    %p404 = scmp.eq.s32.totalorder %s30, 1
    %p405 = por %p403, %p404
    %p406 = scmp.ne.s32.totalorder %s397, %s398
    %p407 = scmp.eq.s32.totalorder %s30, 0
    %p408 = por %p406, %p407
    %p409 = scmp.ne.s32.totalorder %s397, %s398
    %p410 = scmp.eq.s32.totalorder %s31, 1
    %p411 = por %p409, %p410
    %p413 = scmp.ne.s32.totalorder %s398, %s412
    %p414 = scmp.eq.s32.totalorder %s31, 0
    %p415 = por %p413, %p414
    %s417 = sadd.s32 %s416, 1
    %p420 = scmp.eq.s32.totalorder %s25, 1
    %p421 = scmp.ne.s32.totalorder %s416, %s418
    %p422 = scmp.eq.s32.totalorder %s25, 0
    %p423 = por %p421, %p422
    %p424 = scmp.ne.s32.totalorder %s416, %s418
    %p425 = scmp.eq.s32.totalorder %s30, 1
    %p426 = por %p424, %p425
    %p427 = scmp.ne.s32.totalorder %s418, %s419
    %p428 = scmp.eq.s32.totalorder %s30, 0
    %p429 = por %p427, %p428
    %p430 = scmp.ne.s32.totalorder %s418, %s419
    %p431 = scmp.eq.s32.totalorder %s31, 1
    %p432 = por %p430, %p431
    %p434 = scmp.ne.s32.totalorder %s419, %s433
    %p435 = scmp.eq.s32.totalorder %s31, 0
    %p436 = por %p434, %p435
    %s437 = ssub.s32 %s25, %s32
    %p438 = scmp.eq.s32.totalorder %s437, 0
    %s440 = sadd.s32 %s439, 1
    %s441 = scalar_select %p438, %s439, %s440
    %p444 = pneg %p438
    %p445 = scmp.eq.s32.totalorder %s25, 1
    %p446 = por %p444, %p445
    %p447 = scmp.ne.s32.totalorder %s439, %s442
    %p448 = scmp.eq.s32.totalorder %s25, 0
    %p449 = por %p447, %p448
    %p450 = scmp.ne.s32.totalorder %s439, %s442
    %p451 = scmp.eq.s32.totalorder %s30, 1
    %p452 = por %p450, %p451
    %p453 = scmp.ne.s32.totalorder %s442, %s443
    %p454 = scmp.eq.s32.totalorder %s30, 0
    %p455 = por %p453, %p454
    %p456 = scmp.ne.s32.totalorder %s442, %s443
    %p457 = scmp.eq.s32.totalorder %s31, 1
    %p458 = por %p456, %p457
    %p460 = scmp.ne.s32.totalorder %s443, %s459
    %p461 = scmp.eq.s32.totalorder %s31, 0
    %p462 = por %p460, %p461
    %p463 = scmp.le.s32.totalorder 1, %s25
    %p464 = scmp.lt.s32.totalorder %s25, 3
    %p465 = pnand %p463, %p464
    %p466 = pneg %p465
    // Predicated region
    $region9: #{covit_forward.1} parent=5 // pred_check
      _
    $region10: #{covit_forward.1} parent=5 // pred_check_branch
      %468 = sbr.rel (%p465) target = $region12
    $region11: #{covit_forward.1} parent=5 // pred_region
      %s469 = ssub.s32 %s25, 1
      // Predicated region
      $region13: #{covit_forward.1} parent=11 // pred_check
        %p470 = pneg %p72
      $region14: #{covit_forward.1} parent=11 // pred_check_branch
        %472 = sbr.rel (%p470) target = $region16
      $region15: #{covit_forward.1} parent=11 // pred_region
        _
      $region16: #{covit_forward.1} parent=11 // pred_fallthru
        _
      // Predicated region
      $region17: #{covit_forward.1} parent=11 // pred_check
        %p473 = pneg %p93
      $region18: #{covit_forward.1} parent=11 // pred_check_branch
        %475 = sbr.rel (%p473) target = $region20
      $region19: #{covit_forward.1} parent=11 // pred_region
        _
      $region20: #{covit_forward.1} parent=11 // pred_fallthru
        _
      // Predicated region
      $region21: #{covit_forward.1} parent=11 // pred_check
        %p476 = pneg %p114
      $region22: #{covit_forward.1} parent=11 // pred_check_branch
        %478 = sbr.rel (%p476) target = $region24
      $region23: #{covit_forward.1} parent=11 // pred_region
        _
      $region24: #{covit_forward.1} parent=11 // pred_fallthru
        _
      // Predicated region
      $region25: #{covit_forward.1} parent=11 // pred_check
        %p479 = pneg %p135
      $region26: #{covit_forward.1} parent=11 // pred_check_branch
        %481 = sbr.rel (%p479) target = $region28
      $region27: #{covit_forward.1} parent=11 // pred_region
        _
      $region28: #{covit_forward.1} parent=11 // pred_fallthru
        _
      // Predicated region
      $region29: #{covit_forward.1} parent=11 // pred_check
        %p482 = pneg %p156
      $region30: #{covit_forward.1} parent=11 // pred_check_branch
        %484 = sbr.rel (%p482) target = $region32
      $region31: #{covit_forward.1} parent=11 // pred_region
        _
      $region32: #{covit_forward.1} parent=11 // pred_fallthru
        _
      // Predicated region
      $region33: #{covit_forward.1} parent=11 // pred_check
        %p485 = pneg %p177
      $region34: #{covit_forward.1} parent=11 // pred_check_branch
        %487 = sbr.rel (%p485) target = $region36
      $region35: #{covit_forward.1} parent=11 // pred_region
        _
      $region36: #{covit_forward.1} parent=11 // pred_fallthru
        _
      // Predicated region
      $region37: #{covit_forward.1} parent=11 // pred_check
        %p488 = pneg %p198
      $region38: #{covit_forward.1} parent=11 // pred_check_branch
        %490 = sbr.rel (%p488) target = $region40
      $region39: #{covit_forward.1} parent=11 // pred_region
        _
      $region40: #{covit_forward.1} parent=11 // pred_fallthru
        _
      // Predicated region
      $region41: #{covit_forward.1} parent=11 // pred_check
        %p491 = pneg %p219
      $region42: #{covit_forward.1} parent=11 // pred_check_branch
        %493 = sbr.rel (%p491) target = $region44
      $region43: #{covit_forward.1} parent=11 // pred_region
        _
      $region44: #{covit_forward.1} parent=11 // pred_fallthru
        _
      // Predicated region
      $region45: #{covit_forward.1} parent=11 // pred_check
        %p494 = pneg %p240
      $region46: #{covit_forward.1} parent=11 // pred_check_branch
        %496 = sbr.rel (%p494) target = $region48
      $region47: #{covit_forward.1} parent=11 // pred_region
        _
      $region48: #{covit_forward.1} parent=11 // pred_fallthru
        _
      // Predicated region
      $region49: #{covit_forward.1} parent=11 // pred_check
        %p497 = pneg %p261
      $region50: #{covit_forward.1} parent=11 // pred_check_branch
        %499 = sbr.rel (%p497) target = $region52
      $region51: #{covit_forward.1} parent=11 // pred_region
        _
      $region52: #{covit_forward.1} parent=11 // pred_fallthru
        _
      // Predicated region
      $region53: #{covit_forward.1} parent=11 // pred_check
        %p500 = pneg %p282
      $region54: #{covit_forward.1} parent=11 // pred_check_branch
        %502 = sbr.rel (%p500) target = $region56
      $region55: #{covit_forward.1} parent=11 // pred_region
        _
      $region56: #{covit_forward.1} parent=11 // pred_fallthru
        _
      // Predicated region
      $region57: #{covit_forward.1} parent=11 // pred_check
        %p503 = pneg %p303
      $region58: #{covit_forward.1} parent=11 // pred_check_branch
        %505 = sbr.rel (%p503) target = $region60
      $region59: #{covit_forward.1} parent=11 // pred_region
        _
      $region60: #{covit_forward.1} parent=11 // pred_fallthru
        _
      // Predicated region
      $region61: #{covit_forward.1} parent=11 // pred_check
        %p506 = pneg %p324
      $region62: #{covit_forward.1} parent=11 // pred_check_branch
        %508 = sbr.rel (%p506) target = $region64
      $region63: #{covit_forward.1} parent=11 // pred_region
        _
      $region64: #{covit_forward.1} parent=11 // pred_fallthru
        _
      // Predicated region
      $region65: #{covit_forward.1} parent=11 // pred_check
        %p509 = pneg %p345
      $region66: #{covit_forward.1} parent=11 // pred_check_branch
        %511 = sbr.rel (%p509) target = $region68
      $region67: #{covit_forward.1} parent=11 // pred_region
        _
      $region68: #{covit_forward.1} parent=11 // pred_fallthru
        _
      // Predicated region
      $region69: #{covit_forward.1} parent=11 // pred_check
        %p512 = pneg %p366
      $region70: #{covit_forward.1} parent=11 // pred_check_branch
        %514 = sbr.rel (%p512) target = $region72
      $region71: #{covit_forward.1} parent=11 // pred_region
        _
      $region72: #{covit_forward.1} parent=11 // pred_fallthru
        _
      // Predicated region
      $region73: #{covit_forward.1} parent=11 // pred_check
        %p515 = pneg %p387
      $region74: #{covit_forward.1} parent=11 // pred_check_branch
        %517 = sbr.rel (%p515) target = $region76
      $region75: #{covit_forward.1} parent=11 // pred_region
        _
      $region76: #{covit_forward.1} parent=11 // pred_fallthru
        _
      // Predicated region
      $region77: #{covit_forward.1} parent=11 // pred_check
        %p518 = pneg %p408
      $region78: #{covit_forward.1} parent=11 // pred_check_branch
        %520 = sbr.rel (%p518) target = $region80
      $region79: #{covit_forward.1} parent=11 // pred_region
        _
      $region80: #{covit_forward.1} parent=11 // pred_fallthru
        _
      // Predicated region
      $region81: #{covit_forward.1} parent=11 // pred_check
        %p521 = pneg %p429
      $region82: #{covit_forward.1} parent=11 // pred_check_branch
        %523 = sbr.rel (%p521) target = $region84
      $region83: #{covit_forward.1} parent=11 // pred_region
        _
      $region84: #{covit_forward.1} parent=11 // pred_fallthru
        _
    $region12: #{covit_forward.1} parent=5 // pred_fallthru
      _
    %p524 = scmp.lt.s32.totalorder %s25, 2
    // Predicated region
    $region85: #{covit_forward.1} parent=5 // pred_check
      %p525 = pneg %p524
    $region86: #{covit_forward.1} parent=5 // pred_check_branch
      %527 = sbr.rel (%p525) target = $region88
    $region87: #{covit_forward.1} parent=5 // pred_region
      // Predicated region
      $region89: #{covit_forward.1} parent=87 // pred_check
        %p528 = pneg %p45
      $region90: #{covit_forward.1} parent=87 // pred_check_branch
        %530 = sbr.rel (%p528) target = $region92
      $region91: #{covit_forward.1} parent=87 // pred_region
        %p531 = scmp.lt.s32.totalorder %s25, 1
        %s532 = scalar_select %p531, %s25, 1
        %s533 = smul.addr %s532, 10
        %s534 = smul.addr %s533, 4
        %s535 = scalar_lea.vmem %s0, %s534
      $region92: #{covit_forward.1} parent=87 // pred_fallthru
        _
    $region88: #{covit_forward.1} parent=5 // pred_fallthru
      _
    %p536 = scmp.le.s32.totalorder 1, %s25
    %p537 = scmp.lt.s32.totalorder %s25, 3
    %p538 = pnand %p536, %p537
    %p539 = pneg %p538
    // Predicated region
    $region93: #{covit_forward.1} parent=5 // pred_check
      _
    $region94: #{covit_forward.1} parent=5 // pred_check_branch
      %541 = sbr.rel (%p538) target = $region96
    $region95: #{covit_forward.1} parent=5 // pred_region
      %s542 = ssub.s32 %s25, 1
      %p543 = scmp.lt.s32.totalorder %s30, 1
      %s544 = scalar_select %p543, %s30, 1
      %s545 = smul.addr %s544, 10
      %s546 = smul.addr %s545, 4
      %s547 = scalar_lea.vmem %s0, %s546
      %p548 = pneg %p51
      %p549 = pneg %p48
      %p550 = pneg %p72
      %p551 = pneg %p69
      %p552 = pneg %p93
      %p553 = pneg %p90
      %p554 = pneg %p114
      %p555 = pneg %p111
      %p556 = pneg %p135
      %p557 = pneg %p132
      %p558 = pneg %p156
      %p559 = pneg %p153
      %p560 = pneg %p177
      %p561 = pneg %p174
      %p562 = pneg %p198
      %p563 = pneg %p195
      %p564 = pneg %p219
      %p565 = pneg %p216
      %p566 = pneg %p240
      %p567 = pneg %p237
      %p568 = pneg %p261
      %p569 = pneg %p258
      %p570 = pneg %p282
      %p571 = pneg %p279
      %p572 = pneg %p303
      %p573 = pneg %p300
      %p574 = pneg %p324
      %p575 = pneg %p321
      %p576 = pneg %p345
      %p577 = pneg %p342
      %p578 = pneg %p366
      %p579 = pneg %p363
      %p580 = pneg %p387
      %p581 = pneg %p384
      %p582 = pneg %p408
      %p583 = pneg %p405
      %p584 = pneg %p429
      %p585 = pneg %p426
      %p586 = pneg %p455
      %p587 = pneg %p452
      %p588 = scmp.lt.s32.totalorder %s30, 1
      %s589 = scalar_select %p588, %s30, 1
      %s590 = smul.addr %s589, 5
      %s591 = smul.addr %s590, 8
      %s592 = scalar_lea.vmem %s19, %s591
      %p593 = scmp.lt.s32.totalorder %s30, 1
      %s594 = scalar_select %p593, %s30, 1
      %s595 = smul.addr %s594, 10
      %s596 = smul.addr %s595, 4
      %s597 = scalar_lea.vmem %s0, %s596
      %p598 = scmp.lt.s32.totalorder %s30, 1
      %s599 = scalar_select %p598, %s30, 1
      %s600 = smul.addr %s599, 5
      %s601 = smul.addr %s600, 8
      %s602 = scalar_lea.vmem %s19, %s601
      %v604 = vld [vmem:[%s597] sm:$0xff]
      %v605 = vld [vmem:[%s597 + $0x8] sm:$0xff]
      %v606 = vld [vmem:[%s597 + $0x10] sm:$0xff]
      %v607 = vld [vmem:[%s597 + $0x18] sm:$0xff]
      %v608 = vld [vmem:[%s597 + $0x20] sm:$0x11]
      %v609 = vld [vmem:[%s1] sm:$0xf]
      %v610 = vld [vmem:[%s1 + $0x4] sm:$0xf]
      %v611 = vld [vmem:[%s1 + $0x8] sm:$0xf]
      %v612 = vld [vmem:[%s1 + $0xc] sm:$0xf]
      %v613 = vld [vmem:[%s1 + $0x10] sm:$0xf]
      %v614 = vld [vmem:[%s1 + $0x14] sm:$0xf]
      %v615 = vld [vmem:[%s1 + $0x18] sm:$0xf]
      %v616 = vld [vmem:[%s1 + $0x1c] sm:$0xf]
      %v617 = vld [vmem:[%s1 + $0x20] sm:$0xf]
      %v618 = vld [vmem:[%s1 + $0x24] sm:$0xf]
      %v619 = vld [vmem:[%s1 + $0x28] sm:$0xf]
      %v620 = vld [vmem:[%s1 + $0x2c] sm:$0xf]
      %v621 = vld [vmem:[%s1 + $0x30] sm:$0xf]
      %v622 = vld [vmem:[%s1 + $0x34] sm:$0xf]
      %v623 = vld [vmem:[%s1 + $0x38] sm:$0xf]
      %v624 = vld [vmem:[%s1 + $0x3c] sm:$0xf]
      %v625 = vld [vmem:[%s1 + $0x40] sm:$0xf]
      %v626 = vld [vmem:[%s1 + $0x44] sm:$0xf]
      %v627 = vld [vmem:[%s1 + $0x48] sm:$0xf]
      %v628 = vld [vmem:[%s1 + $0x4c] sm:$0xf]
      %v629 = vld [vmem:[%s1 + $0x50] sm:$0xf]
      %v630 = vld [vmem:[%s1 + $0x54] sm:$0xf]
      %v631 = vld [vmem:[%s1 + $0x58] sm:$0xf]
      %v632 = vld [vmem:[%s1 + $0x5c] sm:$0xf]
      %v633 = vld [vmem:[%s2] sm:$0xff]
      %v634 = vld [vmem:[%s2 + $0x8] sm:$0xff]
      %v635 = vld [vmem:[%s2 + $0x10] sm:$0xff]
      %v636 = vld [vmem:[%s2 + $0x18] sm:$0xff]
      %v637 = vld [vmem:[%s2 + $0x20] sm:$0x3]
      %v643 = vunpack.c.l.b16 %v604
      %v644 = vunpack.c.h.b16 %v604
      %v645 = vunpack.c.l.b16 %v605
      %v646 = vunpack.c.h.b16 %v605
      %v647 = vunpack.c.l.b16 %v606
      %v648 = vunpack.c.h.b16 %v606
      %v649 = vunpack.c.l.b16 %v607
      %v650 = vunpack.c.h.b16 %v607
      %v651 = vunpack.c.l.b16 %v608
      %v652 = vunpack.c.h.b16 %v608
      %v653 = vpack.c.b16 %v645, %v643
      %v654 = vpack.c.b16 %v646, %v644
      %v655 = vpack.c.b16 %v649, %v647
      %v656 = vpack.c.b16 %v650, %v648
      %v657 = vpack.c.b16 %v651, %v651
      %v658 = vpack.c.b16 %v652, %v652
      %v686 = vunpack.c.l.b16 %v609
      %v687 = vunpack.c.l.b16 %v610
      %v688 = vunpack.c.l.b16 %v611
      %v689 = vunpack.c.l.b16 %v612
      %v690 = vunpack.c.l.b16 %v613
      %v691 = vunpack.c.l.b16 %v614
      %v692 = vunpack.c.l.b16 %v615
      %v693 = vunpack.c.l.b16 %v616
      %v694 = vunpack.c.l.b16 %v617
      %v695 = vunpack.c.l.b16 %v618
      %v696 = vunpack.c.l.b16 %v619
      %v697 = vunpack.c.l.b16 %v620
      %v698 = vunpack.c.l.b16 %v621
      %v699 = vunpack.c.l.b16 %v622
      %v700 = vunpack.c.l.b16 %v623
      %v701 = vunpack.c.l.b16 %v624
      %v702 = vunpack.c.l.b16 %v625
      %v703 = vunpack.c.l.b16 %v626
      %v704 = vunpack.c.l.b16 %v627
      %v705 = vunpack.c.l.b16 %v628
      %v706 = vunpack.c.l.b16 %v629
      %v707 = vunpack.c.l.b16 %v630
      %v708 = vunpack.c.l.b16 %v631
      %v709 = vunpack.c.l.b16 %v632
      %v710 = vpack.c.b16 %v687, %v686
      %v711 = vpack.c.b16 %v689, %v688
      %v712 = vpack.c.b16 %v691, %v690
      %v713 = vpack.c.b16 %v693, %v692
      %v714 = vpack.c.b16 %v695, %v694
      %v715 = vpack.c.b16 %v697, %v696
      %v716 = vpack.c.b16 %v699, %v698
      %v717 = vpack.c.b16 %v701, %v700
      %v718 = vpack.c.b16 %v703, %v702
      %v719 = vpack.c.b16 %v705, %v704
      %v720 = vpack.c.b16 %v707, %v706
      %v721 = vpack.c.b16 %v709, %v708
      %vm734 = vcmask 523264
      %v736 = vsel %vm734, %v654, 0
      %v739 = vsel %vm734, %v656, 0
      %v742 = vsel %vm734, %v658, 0
      %744 = vmatpush.bf16.msra.mxu0 %v717
      %745 = vmatpush.bf16.msra.mxu0 %v716
      %746 = vmatpush.bf16.msra.mxu0 %v715
      %747 = vmatpush.bf16.msra.mxu0 %v714
      %748 = vmatpush.bf16.msra.mxu0 %v713
      %749 = vmatpush.bf16.msra.mxu0 %v712
      %750 = vmatpush.bf16.msra.mxu0 %v711
      %751 = vmatpush.bf16.msra.mxu0 %v710
      %752 = vmatmul.bf16.gmra.mxu0 %v653
      %v753 = vpop.f32.mrf.mxu0
      %v754 = vadd.f32 %v633, %v753
      %v755 = vpop.f32.mrf.mxu0
      %v756 = vadd.f32 %v634, %v755
      %757 = vmatmul.bf16.gmra.mxu0 %v655
      %v758 = vpop.f32.mrf.mxu0
      %v759 = vadd.f32 %v635, %v758
      %v760 = vpop.f32.mrf.mxu0
      %v761 = vadd.f32 %v636, %v760
      %762 = vmatmul.bf16.gmra.mxu0 %v657
      %v763 = vpop.f32.mrf.mxu0
      %v764 = vadd.f32 %v637, %v763
      %v765 = vpop.f32.mrf.mxu0
      %766 = vdwg.mxu0
      %767 = vmatpush.bf16.msra.mxu0 0
      %768 = vmatpush.bf16.msra.mxu0 0
      %769 = vmatpush.bf16.msra.mxu0 0
      %770 = vmatpush.bf16.msra.mxu0 0
      %771 = vmatpush.bf16.msra.mxu0 %v721
      %772 = vmatpush.bf16.msra.mxu0 %v720
      %773 = vmatpush.bf16.msra.mxu0 %v719
      %774 = vmatpush.bf16.msra.mxu0 %v718
      %775 = vmatmul.bf16.gmra.mxu0 %v736
      %v776 = vpop.f32.mrf.mxu0
      %v777 = vadd.f32 %v754, %v776
      %v778 = vpop.f32.mrf.mxu0
      %v779 = vadd.f32 %v756, %v778
      %780 = vmatmul.bf16.gmra.mxu0 %v739
      %v781 = vpop.f32.mrf.mxu0
      %v782 = vadd.f32 %v759, %v781
      %v783 = vpop.f32.mrf.mxu0
      %v784 = vadd.f32 %v761, %v783
      %785 = vmatmul.bf16.gmra.mxu0 %v742
      %v786 = vpop.f32.mrf.mxu0
      %v787 = vadd.f32 %v764, %v786
      %v788 = vpop.f32.mrf.mxu0
      %789 = vdwg.mxu0
      %v790 = vld [vmem:[%s3] sm:$0xff]
      %v791 = vld [vmem:[%s3 + $0x8] sm:$0xff]
      %v792 = vld [vmem:[%s3 + $0x10] sm:$0xff]
      %v793 = vld [vmem:[%s3 + $0x18] sm:$0xff]
      %v794 = vld [vmem:[%s3 + $0x20] sm:$0x3]
      %v795 = vld [vmem:[%s17] sm:$0xff]
      %v796 = vld [vmem:[%s17 + $0x8] sm:$0x1]
      %v797 = vld [vmem:[%s18] sm:$0x3]
      %798 = vadd.xlane.f32.xlu0 %v777
      %v799 = vpop.xlane.xlu0 %798
      %800 = vadd.xlane.f32.xlu0 %v779
      %v801 = vpop.xlane.xlu0 %800
      %802 = vadd.xlane.f32.xlu0 %v782
      %v803 = vpop.xlane.xlu0 %802
      %804 = vadd.xlane.f32.xlu0 %v784
      %v805 = vpop.xlane.xlu0 %804
      %vm806 = vcmask 1041408
      %v807 = vsel %vm806, %v787, 0.0
      %808 = vadd.xlane.f32.xlu0 %v807
      %v809 = vpop.xlane.xlu0 %808
      %v810 = vrcp.pop 128.0
      %v811 = vmul.f32 128.0, %v810
      %v812 = vsub.f32 1.0, %v811
      %v813 = vmul.f32 %v810, %v812
      %v814 = vadd.f32 %v810, %v813
      %vm815 = vweird.f32 %v810
      %v816 = vsel %vm815, %v810, %v814
      %v817 = vmul.f32 %v799, %v816
      %v818 = vmul.f32 %v801, %v816
      %v819 = vmul.f32 %v803, %v816
      %v820 = vmul.f32 %v805, %v816
      %v821 = vmul.f32 %v809, %v816
      %v822 = vsub.f32 %v777, %v817
      %v823 = vsub.f32 %v779, %v818
      %v824 = vsub.f32 %v782, %v819
      %v825 = vsub.f32 %v784, %v820
      %v826 = vsub.f32 %v787, %v821
      %v827 = vmul.f32 %v822, %v822
      %v828 = vmul.f32 %v823, %v823
      %v829 = vmul.f32 %v824, %v824
      %v830 = vmul.f32 %v825, %v825
      %v831 = vmul.f32 %v826, %v826
      %832 = vadd.xlane.f32.xlu0 %v827
      %v833 = vpop.xlane.xlu0 %832
      %834 = vadd.xlane.f32.xlu0 %v828
      %v835 = vpop.xlane.xlu0 %834
      %836 = vadd.xlane.f32.xlu0 %v829
      %v837 = vpop.xlane.xlu0 %836
      %838 = vadd.xlane.f32.xlu0 %v830
      %v839 = vpop.xlane.xlu0 %838
      %v840 = vsel %vm806, %v831, 0.0
      %841 = vadd.xlane.f32.xlu0 %v840
      %v842 = vpop.xlane.xlu0 %841
      %v843 = vmul.f32 %v833, %v816
      %v844 = vmul.f32 %v835, %v816
      %v845 = vmul.f32 %v837, %v816
      %v846 = vmul.f32 %v839, %v816
      %v847 = vmul.f32 %v842, %v816
      %v848 = vadd.f32 %v843, 1e-12
      %v849 = vadd.f32 %v844, 1e-12
      %v850 = vadd.f32 %v845, 1e-12
      %v851 = vadd.f32 %v846, 1e-12
      %v852 = vadd.f32 %v847, 1e-12
      %v853 = vrsqrt.pop %v848
      %v854 = vmul.f32 %v853, %v848
      %v855 = vmul.f32 %v854, %v853
      %v856 = vmul.f32 0.5, %v855
      %v857 = vsub.f32 1.5, %v856
      %v858 = vmul.f32 %v853, %v857
      %vm859 = vweird.f32 %v848
      %vm860 = vweird.f32 %v853
      %vm861 = vmor %vm859, %vm860
      %v862 = vsel %vm861, %v853, %v858
      %v863 = vrsqrt.pop %v849
      %v864 = vmul.f32 %v863, %v849
      %v865 = vmul.f32 %v864, %v863
      %v866 = vmul.f32 0.5, %v865
      %v867 = vsub.f32 1.5, %v866
      %v868 = vmul.f32 %v863, %v867
      %vm869 = vweird.f32 %v849
      %vm870 = vweird.f32 %v863
      %vm871 = vmor %vm869, %vm870
      %v872 = vsel %vm871, %v863, %v868
      %v873 = vrsqrt.pop %v850
      %v874 = vmul.f32 %v873, %v850
      %v875 = vmul.f32 %v874, %v873
      %v876 = vmul.f32 0.5, %v875
      %v877 = vsub.f32 1.5, %v876
      %v878 = vmul.f32 %v873, %v877
      %vm879 = vweird.f32 %v850
      %vm880 = vweird.f32 %v873
      %vm881 = vmor %vm879, %vm880
      %v882 = vsel %vm881, %v873, %v878
      %v883 = vrsqrt.pop %v851
      %v884 = vmul.f32 %v883, %v851
      %v885 = vmul.f32 %v884, %v883
      %v886 = vmul.f32 0.5, %v885
      %v887 = vsub.f32 1.5, %v886
      %v888 = vmul.f32 %v883, %v887
      %vm889 = vweird.f32 %v851
      %vm890 = vweird.f32 %v883
      %vm891 = vmor %vm889, %vm890
      %v892 = vsel %vm891, %v883, %v888
      %v893 = vrsqrt.pop %v852
      %v894 = vmul.f32 %v893, %v852
      %v895 = vmul.f32 %v894, %v893
      %v896 = vmul.f32 0.5, %v895
      %v897 = vsub.f32 1.5, %v896
      %v898 = vmul.f32 %v893, %v897
      %vm899 = vweird.f32 %v852
      %vm900 = vweird.f32 %v893
      %vm901 = vmor %vm899, %vm900
      %v902 = vsel %vm901, %v893, %v898
      %v903 = vmul.f32 %v822, %v862
      %v904 = vmul.f32 %v823, %v872
      %v905 = vmul.f32 %v824, %v882
      %v906 = vmul.f32 %v825, %v892
      %v907 = vmul.f32 %v826, %v902
      %v908 = vperm.slane %v795, 0
      %v909 = vmul.f32 %v903, %v908
      %v910 = vmul.f32 %v904, %v908
      %v911 = vmul.f32 %v905, %v908
      %v912 = vmul.f32 %v906, %v908
      %v913 = vmul.f32 %v907, %v908
      %v914 = vperm.slane %v795, 1
      %v915 = vadd.f32 %v909, %v914
      %v916 = vadd.f32 %v910, %v914
      %v917 = vadd.f32 %v911, %v914
      %v918 = vadd.f32 %v912, %v914
      %v919 = vadd.f32 %v913, %v914
      %v920 = vpack.c.bf16 %v916, %v915
      %v921 = vpack.c.bf16 %v918, %v917
      %v922 = vpack.c.bf16 %v919, %v919
      %v923 = vld [vmem:[%s7] sm:$0xf]
      %v924 = vld [vmem:[%s7 + $0x4] sm:$0xf]
      %v925 = vld [vmem:[%s7 + $0x8] sm:$0xf]
      %v926 = vld [vmem:[%s7 + $0xc] sm:$0xf]
      %v927 = vld [vmem:[%s7 + $0x10] sm:$0xf]
      %v928 = vld [vmem:[%s7 + $0x14] sm:$0xf]
      %v929 = vld [vmem:[%s7 + $0x18] sm:$0xf]
      %v930 = vld [vmem:[%s7 + $0x1c] sm:$0xf]
      %v931 = vld [vmem:[%s7 + $0x20] sm:$0xf]
      %v932 = vld [vmem:[%s7 + $0x24] sm:$0xf]
      %v933 = vld [vmem:[%s7 + $0x28] sm:$0xf]
      %v934 = vld [vmem:[%s7 + $0x2c] sm:$0xf]
      %v935 = vld [vmem:[%s7 + $0x30] sm:$0xf]
      %v936 = vld [vmem:[%s7 + $0x34] sm:$0xf]
      %v937 = vld [vmem:[%s7 + $0x38] sm:$0xf]
      %v938 = vld [vmem:[%s7 + $0x3c] sm:$0xf]
      %v939 = vperm.slane %v795, 2
      %v956 = vunpack.c.l.b16 %v923
      %v957 = vunpack.c.l.b16 %v924
      %v958 = vunpack.c.l.b16 %v925
      %v959 = vunpack.c.l.b16 %v926
      %v960 = vunpack.c.l.b16 %v927
      %v961 = vunpack.c.l.b16 %v928
      %v962 = vunpack.c.l.b16 %v929
      %v963 = vunpack.c.l.b16 %v930
      %v964 = vunpack.c.l.b16 %v931
      %v965 = vunpack.c.l.b16 %v932
      %v966 = vunpack.c.l.b16 %v933
      %v967 = vunpack.c.l.b16 %v934
      %v968 = vunpack.c.l.b16 %v935
      %v969 = vunpack.c.l.b16 %v936
      %v970 = vunpack.c.l.b16 %v937
      %v971 = vunpack.c.l.b16 %v938
      %v972 = vpack.c.b16 %v957, %v956
      %v973 = vpack.c.b16 %v959, %v958
      %v974 = vpack.c.b16 %v961, %v960
      %v975 = vpack.c.b16 %v963, %v962
      %v976 = vpack.c.b16 %v965, %v964
      %v977 = vpack.c.b16 %v967, %v966
      %v978 = vpack.c.b16 %v969, %v968
      %v979 = vpack.c.b16 %v971, %v970
      %988 = vmatpush.bf16.msra.mxu0 %v979
      %989 = vmatpush.bf16.msra.mxu0 %v978
      %990 = vmatpush.bf16.msra.mxu0 %v977
      %991 = vmatpush.bf16.msra.mxu0 %v976
      %992 = vmatpush.bf16.msra.mxu0 %v975
      %993 = vmatpush.bf16.msra.mxu0 %v974
      %994 = vmatpush.bf16.msra.mxu0 %v973
      %995 = vmatpush.bf16.msra.mxu0 %v972
      %996 = vmatmul.bf16.gmra.mxu0 %v920
      %v997 = vpop.f32.mrf.mxu0
      %v998 = vadd.f32 %v939, %v997
      %v999 = vpop.f32.mrf.mxu0
      %v1000 = vadd.f32 %v939, %v999
      %1001 = vmatmul.bf16.gmra.mxu0 %v921
      %v1002 = vpop.f32.mrf.mxu0
      %v1003 = vadd.f32 %v939, %v1002
      %v1004 = vpop.f32.mrf.mxu0
      %v1005 = vadd.f32 %v939, %v1004
      %1006 = vmatmul.bf16.gmra.mxu0 %v922
      %v1007 = vpop.f32.mrf.mxu0
      %v1008 = vadd.f32 %v939, %v1007
      %v1009 = vpop.f32.mrf.mxu0
      %1010 = vdwg.mxu0
      %v1011 = vld [vmem:[%s11] sm:$0xf]
      %v1012 = vld [vmem:[%s11 + $0x4] sm:$0xf]
      %v1013 = vld [vmem:[%s11 + $0x8] sm:$0xf]
      %v1014 = vld [vmem:[%s11 + $0xc] sm:$0xf]
      %v1015 = vld [vmem:[%s11 + $0x10] sm:$0xf]
      %v1016 = vld [vmem:[%s11 + $0x14] sm:$0xf]
      %v1017 = vld [vmem:[%s11 + $0x18] sm:$0xf]
      %v1018 = vld [vmem:[%s11 + $0x1c] sm:$0xf]
      %v1019 = vld [vmem:[%s11 + $0x20] sm:$0xf]
      %v1020 = vld [vmem:[%s11 + $0x24] sm:$0xf]
      %v1021 = vld [vmem:[%s11 + $0x28] sm:$0xf]
      %v1022 = vld [vmem:[%s11 + $0x2c] sm:$0xf]
      %v1023 = vld [vmem:[%s11 + $0x30] sm:$0xf]
      %v1024 = vld [vmem:[%s11 + $0x34] sm:$0xf]
      %v1025 = vld [vmem:[%s11 + $0x38] sm:$0xf]
      %v1026 = vld [vmem:[%s11 + $0x3c] sm:$0xf]
      %v1043 = vunpack.c.l.b16 %v1011
      %v1044 = vunpack.c.l.b16 %v1012
      %v1045 = vunpack.c.l.b16 %v1013
      %v1046 = vunpack.c.l.b16 %v1014
      %v1047 = vunpack.c.l.b16 %v1015
      %v1048 = vunpack.c.l.b16 %v1016
      %v1049 = vunpack.c.l.b16 %v1017
      %v1050 = vunpack.c.l.b16 %v1018
      %v1051 = vunpack.c.l.b16 %v1019
      %v1052 = vunpack.c.l.b16 %v1020
      %v1053 = vunpack.c.l.b16 %v1021
      %v1054 = vunpack.c.l.b16 %v1022
      %v1055 = vunpack.c.l.b16 %v1023
      %v1056 = vunpack.c.l.b16 %v1024
      %v1057 = vunpack.c.l.b16 %v1025
      %v1058 = vunpack.c.l.b16 %v1026
      %v1059 = vpack.c.b16 %v1044, %v1043
      %v1060 = vpack.c.b16 %v1046, %v1045
      %v1061 = vpack.c.b16 %v1048, %v1047
      %v1062 = vpack.c.b16 %v1050, %v1049
      %v1063 = vpack.c.b16 %v1052, %v1051
      %v1064 = vpack.c.b16 %v1054, %v1053
      %v1065 = vpack.c.b16 %v1056, %v1055
      %v1066 = vpack.c.b16 %v1058, %v1057
      %1075 = vmatpush.bf16.msra.mxu0 %v1066
      %1076 = vmatpush.bf16.msra.mxu0 %v1065
      %1077 = vmatpush.bf16.msra.mxu0 %v1064
      %1078 = vmatpush.bf16.msra.mxu0 %v1063
      %1079 = vmatpush.bf16.msra.mxu0 %v1062
      %1080 = vmatpush.bf16.msra.mxu0 %v1061
      %1081 = vmatpush.bf16.msra.mxu0 %v1060
      %1082 = vmatpush.bf16.msra.mxu0 %v1059
      %1083 = vmatmul.bf16.gmra.mxu0 %v920
      %v1084 = vpop.f32.mrf.mxu0
      %v1085 = vadd.f32 0.0, %v1084
      %v1086 = vpop.f32.mrf.mxu0
      %v1087 = vadd.f32 0.0, %v1086
      %1088 = vmatmul.bf16.gmra.mxu0 %v921
      %v1089 = vpop.f32.mrf.mxu0
      %v1090 = vadd.f32 0.0, %v1089
      %v1091 = vpop.f32.mrf.mxu0
      %v1092 = vadd.f32 0.0, %v1091
      %1093 = vmatmul.bf16.gmra.mxu0 %v922
      %v1094 = vpop.f32.mrf.mxu0
      %v1095 = vadd.f32 0.0, %v1094
      %v1096 = vpop.f32.mrf.mxu0
      %1097 = vdwg.mxu0
      %v1098 = vpack.c.bf16 %v1087, %v1085
      %v1099 = vpack.c.bf16 %v1092, %v1090
      %v1100 = vpack.c.bf16 %v1095, %v1095
      %v1101 = vld [vmem:[%s12] sm:$0xf]
      %vm1102 = vcmask 64512
      %v1104 = vsel %vm1102, %v1098, 0
      %v1107 = vsel %vm1102, %v1099, 0
      %v1110 = vsel %vm1102, %v1100, 0
      %vm1112 = vcmask 1043456
      %v1114 = vsel %vm1112, %v1101, 0
      %1116 = vmatpush.bf16.msra.mxu0 0
      %1117 = vmatpush.bf16.msra.mxu0 0
      %1118 = vmatpush.bf16.msra.mxu0 0
      %1119 = vmatpush.bf16.msra.mxu0 0
      %1120 = vmatpush.bf16.msra.mxu0 0
      %1121 = vmatpush.bf16.msra.mxu0 0
      %1122 = vmatpush.bf16.msra.mxu0 0
      %1123 = vmatpush.bf16.msra.mxu0 %v1114
      %1124 = vmatmul.bf16.gmra.mxu0 %v1104
      %v1125 = vpop.f32.mrf.mxu0
      %v1126 = vadd.f32 0.0, %v1125
      %v1127 = vpop.f32.mrf.mxu0
      %v1128 = vadd.f32 0.0, %v1127
      %1129 = vmatmul.bf16.gmra.mxu0 %v1107
      %v1130 = vpop.f32.mrf.mxu0
      %v1131 = vadd.f32 0.0, %v1130
      %v1132 = vpop.f32.mrf.mxu0
      %v1133 = vadd.f32 0.0, %v1132
      %1134 = vmatmul.bf16.gmra.mxu0 %v1110
      %v1135 = vpop.f32.mrf.mxu0
      %v1136 = vadd.f32 0.0, %v1135
      %v1137 = vpop.f32.mrf.mxu0
      %1138 = vdwg.mxu0
      %v1139 = vadd.f32 %v998, %v1126
      %v1140 = vadd.f32 %v1000, %v1128
      %v1141 = vadd.f32 %v1003, %v1131
      %v1142 = vadd.f32 %v1005, %v1133
      %v1143 = vadd.f32 %v1008, %v1136
      %v1144 = vld [vmem:[%s8] sm:$0xf]
      %v1145 = vld [vmem:[%s8 + $0x4] sm:$0xf]
      %v1146 = vld [vmem:[%s8 + $0x8] sm:$0xf]
      %v1147 = vld [vmem:[%s8 + $0xc] sm:$0xf]
      %v1148 = vld [vmem:[%s8 + $0x10] sm:$0xf]
      %v1149 = vld [vmem:[%s8 + $0x14] sm:$0xf]
      %v1150 = vld [vmem:[%s8 + $0x18] sm:$0xf]
      %v1151 = vld [vmem:[%s8 + $0x1c] sm:$0xf]
      %v1152 = vld [vmem:[%s8 + $0x20] sm:$0xf]
      %v1153 = vld [vmem:[%s8 + $0x24] sm:$0xf]
      %v1154 = vld [vmem:[%s8 + $0x28] sm:$0xf]
      %v1155 = vld [vmem:[%s8 + $0x2c] sm:$0xf]
      %v1156 = vld [vmem:[%s8 + $0x30] sm:$0xf]
      %v1157 = vld [vmem:[%s8 + $0x34] sm:$0xf]
      %v1158 = vld [vmem:[%s8 + $0x38] sm:$0xf]
      %v1159 = vld [vmem:[%s8 + $0x3c] sm:$0xf]
      %v1160 = vperm.slane %v795, 3
      %v1177 = vunpack.c.l.b16 %v1144
      %v1178 = vunpack.c.l.b16 %v1145
      %v1179 = vunpack.c.l.b16 %v1146
      %v1180 = vunpack.c.l.b16 %v1147
      %v1181 = vunpack.c.l.b16 %v1148
      %v1182 = vunpack.c.l.b16 %v1149
      %v1183 = vunpack.c.l.b16 %v1150
      %v1184 = vunpack.c.l.b16 %v1151
      %v1185 = vunpack.c.l.b16 %v1152
      %v1186 = vunpack.c.l.b16 %v1153
      %v1187 = vunpack.c.l.b16 %v1154
      %v1188 = vunpack.c.l.b16 %v1155
      %v1189 = vunpack.c.l.b16 %v1156
      %v1190 = vunpack.c.l.b16 %v1157
      %v1191 = vunpack.c.l.b16 %v1158
      %v1192 = vunpack.c.l.b16 %v1159
      %v1193 = vpack.c.b16 %v1178, %v1177
      %v1194 = vpack.c.b16 %v1180, %v1179
      %v1195 = vpack.c.b16 %v1182, %v1181
      %v1196 = vpack.c.b16 %v1184, %v1183
      %v1197 = vpack.c.b16 %v1186, %v1185
      %v1198 = vpack.c.b16 %v1188, %v1187
      %v1199 = vpack.c.b16 %v1190, %v1189
      %v1200 = vpack.c.b16 %v1192, %v1191
      %1209 = vmatpush.bf16.msra.mxu0 %v1200
      %1210 = vmatpush.bf16.msra.mxu0 %v1199
      %1211 = vmatpush.bf16.msra.mxu0 %v1198
      %1212 = vmatpush.bf16.msra.mxu0 %v1197
      %1213 = vmatpush.bf16.msra.mxu0 %v1196
      %1214 = vmatpush.bf16.msra.mxu0 %v1195
      %1215 = vmatpush.bf16.msra.mxu0 %v1194
      %1216 = vmatpush.bf16.msra.mxu0 %v1193
      %1217 = vmatmul.bf16.gmra.mxu0 %v920
      %v1218 = vpop.f32.mrf.mxu0
      %v1219 = vadd.f32 %v1160, %v1218
      %v1220 = vpop.f32.mrf.mxu0
      %v1221 = vadd.f32 %v1160, %v1220
      %1222 = vmatmul.bf16.gmra.mxu0 %v921
      %v1223 = vpop.f32.mrf.mxu0
      %v1224 = vadd.f32 %v1160, %v1223
      %v1225 = vpop.f32.mrf.mxu0
      %v1226 = vadd.f32 %v1160, %v1225
      %1227 = vmatmul.bf16.gmra.mxu0 %v922
      %v1228 = vpop.f32.mrf.mxu0
      %v1229 = vadd.f32 %v1160, %v1228
      %v1230 = vpop.f32.mrf.mxu0
      %1231 = vdwg.mxu0
      %v1232 = vld [vmem:[%s9] sm:$0xf]
      %v1233 = vld [vmem:[%s9 + $0x4] sm:$0xf]
      %v1234 = vld [vmem:[%s9 + $0x8] sm:$0xf]
      %v1235 = vld [vmem:[%s9 + $0xc] sm:$0xf]
      %v1236 = vld [vmem:[%s9 + $0x10] sm:$0xf]
      %v1237 = vld [vmem:[%s9 + $0x14] sm:$0xf]
      %v1238 = vld [vmem:[%s9 + $0x18] sm:$0xf]
      %v1239 = vld [vmem:[%s9 + $0x1c] sm:$0xf]
      %v1240 = vld [vmem:[%s9 + $0x20] sm:$0xf]
      %v1241 = vld [vmem:[%s9 + $0x24] sm:$0xf]
      %v1242 = vld [vmem:[%s9 + $0x28] sm:$0xf]
      %v1243 = vld [vmem:[%s9 + $0x2c] sm:$0xf]
      %v1244 = vld [vmem:[%s9 + $0x30] sm:$0xf]
      %v1245 = vld [vmem:[%s9 + $0x34] sm:$0xf]
      %v1246 = vld [vmem:[%s9 + $0x38] sm:$0xf]
      %v1247 = vld [vmem:[%s9 + $0x3c] sm:$0xf]
      %v1248 = vperm.slane %v795, 4
      %v1265 = vunpack.c.l.b16 %v1232
      %v1266 = vunpack.c.l.b16 %v1233
      %v1267 = vunpack.c.l.b16 %v1234
      %v1268 = vunpack.c.l.b16 %v1235
      %v1269 = vunpack.c.l.b16 %v1236
      %v1270 = vunpack.c.l.b16 %v1237
      %v1271 = vunpack.c.l.b16 %v1238
      %v1272 = vunpack.c.l.b16 %v1239
      %v1273 = vunpack.c.l.b16 %v1240
      %v1274 = vunpack.c.l.b16 %v1241
      %v1275 = vunpack.c.l.b16 %v1242
      %v1276 = vunpack.c.l.b16 %v1243
      %v1277 = vunpack.c.l.b16 %v1244
      %v1278 = vunpack.c.l.b16 %v1245
      %v1279 = vunpack.c.l.b16 %v1246
      %v1280 = vunpack.c.l.b16 %v1247
      %v1281 = vpack.c.b16 %v1266, %v1265
      %v1282 = vpack.c.b16 %v1268, %v1267
      %v1283 = vpack.c.b16 %v1270, %v1269
      %v1284 = vpack.c.b16 %v1272, %v1271
      %v1285 = vpack.c.b16 %v1274, %v1273
      %v1286 = vpack.c.b16 %v1276, %v1275
      %v1287 = vpack.c.b16 %v1278, %v1277
      %v1288 = vpack.c.b16 %v1280, %v1279
      %1297 = vmatpush.bf16.msra.mxu0 %v1288
      %1298 = vmatpush.bf16.msra.mxu0 %v1287
      %1299 = vmatpush.bf16.msra.mxu0 %v1286
      %1300 = vmatpush.bf16.msra.mxu0 %v1285
      %1301 = vmatpush.bf16.msra.mxu0 %v1284
      %1302 = vmatpush.bf16.msra.mxu0 %v1283
      %1303 = vmatpush.bf16.msra.mxu0 %v1282
      %1304 = vmatpush.bf16.msra.mxu0 %v1281
      %1305 = vmatmul.bf16.gmra.mxu0 %v920
      %v1306 = vpop.f32.mrf.mxu0
      %v1307 = vadd.f32 %v1248, %v1306
      %v1308 = vpop.f32.mrf.mxu0
      %v1309 = vadd.f32 %v1248, %v1308
      %1310 = vmatmul.bf16.gmra.mxu0 %v921
      %v1311 = vpop.f32.mrf.mxu0
      %v1312 = vadd.f32 %v1248, %v1311
      %v1313 = vpop.f32.mrf.mxu0
      %v1314 = vadd.f32 %v1248, %v1313
      %1315 = vmatmul.bf16.gmra.mxu0 %v922
      %v1316 = vpop.f32.mrf.mxu0
      %v1317 = vadd.f32 %v1248, %v1316
      %v1318 = vpop.f32.mrf.mxu0
      %1319 = vdwg.mxu0
      %v1320 = vld [vmem:[%s13] sm:$0xf]
      %v1321 = vld [vmem:[%s13 + $0x4] sm:$0xf]
      %v1322 = vld [vmem:[%s13 + $0x8] sm:$0xf]
      %v1323 = vld [vmem:[%s13 + $0xc] sm:$0xf]
      %v1324 = vld [vmem:[%s13 + $0x10] sm:$0xf]
      %v1325 = vld [vmem:[%s13 + $0x14] sm:$0xf]
      %v1326 = vld [vmem:[%s13 + $0x18] sm:$0xf]
      %v1327 = vld [vmem:[%s13 + $0x1c] sm:$0xf]
      %v1328 = vld [vmem:[%s13 + $0x20] sm:$0xf]
      %v1329 = vld [vmem:[%s13 + $0x24] sm:$0xf]
      %v1330 = vld [vmem:[%s13 + $0x28] sm:$0xf]
      %v1331 = vld [vmem:[%s13 + $0x2c] sm:$0xf]
      %v1332 = vld [vmem:[%s13 + $0x30] sm:$0xf]
      %v1333 = vld [vmem:[%s13 + $0x34] sm:$0xf]
      %v1334 = vld [vmem:[%s13 + $0x38] sm:$0xf]
      %v1335 = vld [vmem:[%s13 + $0x3c] sm:$0xf]
      %v1352 = vunpack.c.l.b16 %v1320
      %v1353 = vunpack.c.l.b16 %v1321
      %v1354 = vunpack.c.l.b16 %v1322
      %v1355 = vunpack.c.l.b16 %v1323
      %v1356 = vunpack.c.l.b16 %v1324
      %v1357 = vunpack.c.l.b16 %v1325
      %v1358 = vunpack.c.l.b16 %v1326
      %v1359 = vunpack.c.l.b16 %v1327
      %v1360 = vunpack.c.l.b16 %v1328
      %v1361 = vunpack.c.l.b16 %v1329
      %v1362 = vunpack.c.l.b16 %v1330
      %v1363 = vunpack.c.l.b16 %v1331
      %v1364 = vunpack.c.l.b16 %v1332
      %v1365 = vunpack.c.l.b16 %v1333
      %v1366 = vunpack.c.l.b16 %v1334
      %v1367 = vunpack.c.l.b16 %v1335
      %v1368 = vpack.c.b16 %v1353, %v1352
      %v1369 = vpack.c.b16 %v1355, %v1354
      %v1370 = vpack.c.b16 %v1357, %v1356
      %v1371 = vpack.c.b16 %v1359, %v1358
      %v1372 = vpack.c.b16 %v1361, %v1360
      %v1373 = vpack.c.b16 %v1363, %v1362
      %v1374 = vpack.c.b16 %v1365, %v1364
      %v1375 = vpack.c.b16 %v1367, %v1366
      %1384 = vmatpush.bf16.msra.mxu0 %v1375
      %1385 = vmatpush.bf16.msra.mxu0 %v1374
      %1386 = vmatpush.bf16.msra.mxu0 %v1373
      %1387 = vmatpush.bf16.msra.mxu0 %v1372
      %1388 = vmatpush.bf16.msra.mxu0 %v1371
      %1389 = vmatpush.bf16.msra.mxu0 %v1370
      %1390 = vmatpush.bf16.msra.mxu0 %v1369
      %1391 = vmatpush.bf16.msra.mxu0 %v1368
      %1392 = vmatmul.bf16.gmra.mxu0 %v920
      %v1393 = vpop.f32.mrf.mxu0
      %v1394 = vadd.f32 0.0, %v1393
      %v1395 = vpop.f32.mrf.mxu0
      %v1396 = vadd.f32 0.0, %v1395
      %1397 = vmatmul.bf16.gmra.mxu0 %v921
      %v1398 = vpop.f32.mrf.mxu0
      %v1399 = vadd.f32 0.0, %v1398
      %v1400 = vpop.f32.mrf.mxu0
      %v1401 = vadd.f32 0.0, %v1400
      %1402 = vmatmul.bf16.gmra.mxu0 %v922
      %v1403 = vpop.f32.mrf.mxu0
      %v1404 = vadd.f32 0.0, %v1403
      %v1405 = vpop.f32.mrf.mxu0
      %1406 = vdwg.mxu0
      %v1407 = vpack.c.bf16 %v1396, %v1394
      %v1408 = vpack.c.bf16 %v1401, %v1399
      %v1409 = vpack.c.bf16 %v1404, %v1404
      %v1410 = vld [vmem:[%s14] sm:$0xf]
      %v1412 = vsel %vm1102, %v1407, 0
      %v1415 = vsel %vm1102, %v1408, 0
      %v1418 = vsel %vm1102, %v1409, 0
      %v1421 = vsel %vm1112, %v1410, 0
      %1423 = vmatpush.bf16.msra.mxu0 0
      %1424 = vmatpush.bf16.msra.mxu0 0
      %1425 = vmatpush.bf16.msra.mxu0 0
      %1426 = vmatpush.bf16.msra.mxu0 0
      %1427 = vmatpush.bf16.msra.mxu0 0
      %1428 = vmatpush.bf16.msra.mxu0 0
      %1429 = vmatpush.bf16.msra.mxu0 0
      %1430 = vmatpush.bf16.msra.mxu0 %v1421
      %1431 = vmatmul.bf16.gmra.mxu0 %v1412
      %v1432 = vpop.f32.mrf.mxu0
      %v1433 = vadd.f32 0.0, %v1432
      %v1434 = vpop.f32.mrf.mxu0
      %v1435 = vadd.f32 0.0, %v1434
      %1436 = vmatmul.bf16.gmra.mxu0 %v1415
      %v1437 = vpop.f32.mrf.mxu0
      %v1438 = vadd.f32 0.0, %v1437
      %v1439 = vpop.f32.mrf.mxu0
      %v1440 = vadd.f32 0.0, %v1439
      %1441 = vmatmul.bf16.gmra.mxu0 %v1418
      %v1442 = vpop.f32.mrf.mxu0
      %v1443 = vadd.f32 0.0, %v1442
      %v1444 = vpop.f32.mrf.mxu0
      %1445 = vdwg.mxu0
      %v1446 = vadd.f32 %v1307, %v1433
      %v1447 = vadd.f32 %v1309, %v1435
      %v1448 = vadd.f32 %v1312, %v1438
      %v1449 = vadd.f32 %v1314, %v1440
      %v1450 = vadd.f32 %v1317, %v1443
      %v1451 = vmul.f32 %v1139, 0.17677669
      %v1452 = vmul.f32 %v1140, 0.17677669
      %v1453 = vmul.f32 %v1141, 0.17677669
      %v1454 = vmul.f32 %v1142, 0.17677669
      %v1455 = vmul.f32 %v1143, 0.17677669
      %v1456 = vpack.c.bf16 %v1452, %v1451
      %v1457 = vpack.c.bf16 %v1454, %v1453
      %v1458 = vpack.c.bf16 %v1455, %v1455
      %v1459 = vpack.c.bf16 %v1221, %v1219
      %v1460 = vpack.c.bf16 %v1226, %v1224
      %v1461 = vpack.c.bf16 %v1229, %v1229
      %v1462 = vpack.c.bf16 %v1447, %v1446
      %v1463 = vpack.c.bf16 %v1449, %v1448
      %v1464 = vpack.c.bf16 %v1450, %v1450
      %vm1465 = vcmask 261120
      %v1467 = vsel %vm1465, %v1456, 0
      %v1470 = vsel %vm1465, %v1457, 0
      %v1473 = vsel %vm1465, %v1458, 0
      %v1476 = vsel %vm1465, %v1459, 0
      %v1479 = vsel %vm1465, %v1460, 0
      %v1482 = vsel %vm1465, %v1461, 0
      %1484 = vmatpush.bf16.xpose.msra.mxu0 0
      %1485 = vmatpush.bf16.xpose.msra.mxu0 0
      %1486 = vmatpush.bf16.xpose.msra.mxu0 0
      %1487 = vmatpush.bf16.xpose.msra.mxu0 0
      %1488 = vmatpush.bf16.xpose.msra.mxu0 0
      %1489 = vmatpush.bf16.xpose.msra.mxu0 %v1482
      %1490 = vmatpush.bf16.xpose.msra.mxu0 %v1479
      %1491 = vmatpush.bf16.xpose.msra.mxu0 %v1476
      %1492 = vmatmul.bf16.gmra.mxu0 %v1467
      %v1493 = vpop.f32.mrf.mxu0
      %v1494 = vadd.f32 %v790, %v1493
      %v1495 = vpop.f32.mrf.mxu0
      %v1496 = vadd.f32 %v791, %v1495
      %1497 = vmatmul.bf16.gmra.mxu0 %v1470
      %v1498 = vpop.f32.mrf.mxu0
      %v1499 = vadd.f32 %v792, %v1498
      %v1500 = vpop.f32.mrf.mxu0
      %v1501 = vadd.f32 %v793, %v1500
      %1502 = vmatmul.bf16.gmra.mxu0 %v1473
      %v1503 = vpop.f32.mrf.mxu0
      %v1504 = vadd.f32 %v794, %v1503
      %v1505 = vpop.f32.mrf.mxu0
      %1506 = vdwg.mxu0
      %vm1507 = vcmask 277504
      %v1508 = vsel %vm1507, %v1494, -inf
      %1509 = vmax.xlane.f32.xlu0 %v1508
      %v1510 = vpop.xlane.xlu0 %1509
      %v1511 = vsel %vm1507, %v1496, -inf
      %1512 = vmax.xlane.f32.xlu0 %v1511
      %v1513 = vpop.xlane.xlu0 %1512
      %v1514 = vsel %vm1507, %v1499, -inf
      %1515 = vmax.xlane.f32.xlu0 %v1514
      %v1516 = vpop.xlane.xlu0 %1515
      %v1517 = vsel %vm1507, %v1501, -inf
      %1518 = vmax.xlane.f32.xlu0 %v1517
      %v1519 = vpop.xlane.xlu0 %1518
      %vm1520 = vcmask 271360
      %v1521 = vsel %vm1520, %v1504, -inf
      %1522 = vmax.xlane.f32.xlu0 %v1521
      %v1523 = vpop.xlane.xlu0 %1522
      %v1524 = vsub.f32 %v1494, %v1510
      %v1525 = vsub.f32 %v1496, %v1513
      %v1526 = vsub.f32 %v1499, %v1516
      %v1527 = vsub.f32 %v1501, %v1519
      %v1528 = vsub.f32 %v1504, %v1523
      %v1529 = vmul.f32 %v1524, 1.442695
      %v1530 = vpow.pop %v1529
      %v1531 = vmul.f32 %v1525, 1.442695
      %v1532 = vpow.pop %v1531
      %v1533 = vmul.f32 %v1526, 1.442695
      %v1534 = vpow.pop %v1533
      %v1535 = vmul.f32 %v1527, 1.442695
      %v1536 = vpow.pop %v1535
      %v1537 = vmul.f32 %v1528, 1.442695
      %v1538 = vpow.pop %v1537
      %v1539 = vsel %vm1507, %v1530, 0.0
      %1540 = vadd.xlane.f32.xlu0 %v1539
      %v1541 = vpop.xlane.xlu0 %1540
      %v1542 = vsel %vm1507, %v1532, 0.0
      %1543 = vadd.xlane.f32.xlu0 %v1542
      %v1544 = vpop.xlane.xlu0 %1543
      %v1545 = vsel %vm1507, %v1534, 0.0
      %1546 = vadd.xlane.f32.xlu0 %v1545
      %v1547 = vpop.xlane.xlu0 %1546
      %v1548 = vsel %vm1507, %v1536, 0.0
      %1549 = vadd.xlane.f32.xlu0 %v1548
      %v1550 = vpop.xlane.xlu0 %1549
      %v1551 = vsel %vm1520, %v1538, 0.0
      %1552 = vadd.xlane.f32.xlu0 %v1551
      %v1553 = vpop.xlane.xlu0 %1552
      %v1554 = vrcp.pop %v1541
      %v1555 = vrcp.pop %v1544
      %v1556 = vrcp.pop %v1547
      %v1557 = vrcp.pop %v1550
      %v1558 = vrcp.pop %v1553
      %v1559 = vmul.f32 %v1530, %v1554
      %v1560 = vmul.f32 %v1532, %v1555
      %v1561 = vmul.f32 %v1534, %v1556
      %v1562 = vmul.f32 %v1536, %v1557
      %v1563 = vmul.f32 %v1538, %v1558
      %v1564 = vpack.c.bf16 %v1560, %v1559
      %v1565 = vpack.c.bf16 %v1562, %v1561
      %v1566 = vpack.c.bf16 %v1563, %v1563
      %v1568 = vsel %vm1507, %v1564, 0
      %v1571 = vsel %vm1507, %v1565, 0
      %v1574 = vsel %vm1507, %v1566, 0
      %vm1576 = vcmask 1040384
      %v1578 = vsel %vm1576, %v1464, 0
      %1580 = vmatpush.bf16.msra.mxu0 0
      %1581 = vmatpush.bf16.msra.mxu0 0
      %1582 = vmatpush.bf16.msra.mxu0 0
      %1583 = vmatpush.bf16.msra.mxu0 0
      %1584 = vmatpush.bf16.msra.mxu0 0
      %1585 = vmatpush.bf16.msra.mxu0 %v1578
      %1586 = vmatpush.bf16.msra.mxu0 %v1463
      %1587 = vmatpush.bf16.msra.mxu0 %v1462
      %1588 = vmatmul.bf16.gmra.mxu0 %v1568
      %v1589 = vpop.f32.mrf.mxu0
      %v1590 = vadd.f32 0.0, %v1589
      %v1591 = vpop.f32.mrf.mxu0
      %v1592 = vadd.f32 0.0, %v1591
      %1593 = vmatmul.bf16.gmra.mxu0 %v1571
      %v1594 = vpop.f32.mrf.mxu0
      %v1595 = vadd.f32 0.0, %v1594
      %v1596 = vpop.f32.mrf.mxu0
      %v1597 = vadd.f32 0.0, %v1596
      %1598 = vmatmul.bf16.gmra.mxu0 %v1574
      %v1599 = vpop.f32.mrf.mxu0
      %v1600 = vadd.f32 0.0, %v1599
      %v1601 = vpop.f32.mrf.mxu0
      %1602 = vdwg.mxu0
      %1606 = vrot.lane.b32.xlu0 %v1456, 96
      %v1607 = vpop.permute.xlu0 %1606
      %1608 = vrot.lane.b32.xlu0 %v1457, 96
      %v1609 = vpop.permute.xlu0 %1608
      %1610 = vrot.lane.b32.xlu0 %v1458, 96
      %v1611 = vpop.permute.xlu0 %1610
      %1615 = vrot.lane.b32.xlu0 %v1459, 96
      %v1616 = vpop.permute.xlu0 %1615
      %1617 = vrot.lane.b32.xlu0 %v1460, 96
      %v1618 = vpop.permute.xlu0 %1617
      %1619 = vrot.lane.b32.xlu0 %v1461, 96
      %v1620 = vpop.permute.xlu0 %1619
      %v1622 = vsel %vm1465, %v1607, 0
      %v1625 = vsel %vm1465, %v1609, 0
      %v1628 = vsel %vm1465, %v1611, 0
      %v1631 = vsel %vm1465, %v1616, 0
      %v1634 = vsel %vm1465, %v1618, 0
      %v1637 = vsel %vm1465, %v1620, 0
      %1639 = vmatpush.bf16.xpose.msra.mxu0 0
      %1640 = vmatpush.bf16.xpose.msra.mxu0 0
      %1641 = vmatpush.bf16.xpose.msra.mxu0 0
      %1642 = vmatpush.bf16.xpose.msra.mxu0 0
      %1643 = vmatpush.bf16.xpose.msra.mxu0 0
      %1644 = vmatpush.bf16.xpose.msra.mxu0 %v1637
      %1645 = vmatpush.bf16.xpose.msra.mxu0 %v1634
      %1646 = vmatpush.bf16.xpose.msra.mxu0 %v1631
      %1647 = vmatmul.bf16.gmra.mxu0 %v1622
      %v1648 = vpop.f32.mrf.mxu0
      %v1649 = vadd.f32 %v790, %v1648
      %v1650 = vpop.f32.mrf.mxu0
      %v1651 = vadd.f32 %v791, %v1650
      %1652 = vmatmul.bf16.gmra.mxu0 %v1625
      %v1653 = vpop.f32.mrf.mxu0
      %v1654 = vadd.f32 %v792, %v1653
      %v1655 = vpop.f32.mrf.mxu0
      %v1656 = vadd.f32 %v793, %v1655
      %1657 = vmatmul.bf16.gmra.mxu0 %v1628
      %v1658 = vpop.f32.mrf.mxu0
      %v1659 = vadd.f32 %v794, %v1658
      %v1660 = vpop.f32.mrf.mxu0
      %1661 = vdwg.mxu0
      %v1662 = vsel %vm1507, %v1649, -inf
      %1663 = vmax.xlane.f32.xlu0 %v1662
      %v1664 = vpop.xlane.xlu0 %1663
      %v1665 = vsel %vm1507, %v1651, -inf
      %1666 = vmax.xlane.f32.xlu0 %v1665
      %v1667 = vpop.xlane.xlu0 %1666
      %v1668 = vsel %vm1507, %v1654, -inf
      %1669 = vmax.xlane.f32.xlu0 %v1668
      %v1670 = vpop.xlane.xlu0 %1669
      %v1671 = vsel %vm1507, %v1656, -inf
      %1672 = vmax.xlane.f32.xlu0 %v1671
      %v1673 = vpop.xlane.xlu0 %1672
      %v1674 = vsel %vm1520, %v1659, -inf
      %1675 = vmax.xlane.f32.xlu0 %v1674
      %v1676 = vpop.xlane.xlu0 %1675
      %v1677 = vsub.f32 %v1649, %v1664
      %v1678 = vsub.f32 %v1651, %v1667
      %v1679 = vsub.f32 %v1654, %v1670
      %v1680 = vsub.f32 %v1656, %v1673
      %v1681 = vsub.f32 %v1659, %v1676
      %v1682 = vmul.f32 %v1677, 1.442695
      %v1683 = vpow.pop %v1682
      %v1684 = vmul.f32 %v1678, 1.442695
      %v1685 = vpow.pop %v1684
      %v1686 = vmul.f32 %v1679, 1.442695
      %v1687 = vpow.pop %v1686
      %v1688 = vmul.f32 %v1680, 1.442695
      %v1689 = vpow.pop %v1688
      %v1690 = vmul.f32 %v1681, 1.442695
      %v1691 = vpow.pop %v1690
      %v1692 = vsel %vm1507, %v1683, 0.0
      %1693 = vadd.xlane.f32.xlu0 %v1692
      %v1694 = vpop.xlane.xlu0 %1693
      %v1695 = vsel %vm1507, %v1685, 0.0
      %1696 = vadd.xlane.f32.xlu0 %v1695
      %v1697 = vpop.xlane.xlu0 %1696
      %v1698 = vsel %vm1507, %v1687, 0.0
      %1699 = vadd.xlane.f32.xlu0 %v1698
      %v1700 = vpop.xlane.xlu0 %1699
      %v1701 = vsel %vm1507, %v1689, 0.0
      %1702 = vadd.xlane.f32.xlu0 %v1701
      %v1703 = vpop.xlane.xlu0 %1702
      %v1704 = vsel %vm1520, %v1691, 0.0
      %1705 = vadd.xlane.f32.xlu0 %v1704
      %v1706 = vpop.xlane.xlu0 %1705
      %v1707 = vrcp.pop %v1694
      %v1708 = vrcp.pop %v1697
      %v1709 = vrcp.pop %v1700
      %v1710 = vrcp.pop %v1703
      %v1711 = vrcp.pop %v1706
      %v1712 = vmul.f32 %v1683, %v1707
      %v1713 = vmul.f32 %v1685, %v1708
      %v1714 = vmul.f32 %v1687, %v1709
      %v1715 = vmul.f32 %v1689, %v1710
      %v1716 = vmul.f32 %v1691, %v1711
      %v1717 = vpack.c.bf16 %v1713, %v1712
      %v1718 = vpack.c.bf16 %v1715, %v1714
      %v1719 = vpack.c.bf16 %v1716, %v1716
      %1723 = vrot.lane.b32.xlu0 %v1462, 96
      %v1724 = vpop.permute.xlu0 %1723
      %1725 = vrot.lane.b32.xlu0 %v1463, 96
      %v1726 = vpop.permute.xlu0 %1725
      %1727 = vrot.lane.b32.xlu0 %v1464, 96
      %v1728 = vpop.permute.xlu0 %1727
      %v1732 = vsel %vm1507, %v1717, 0
      %v1735 = vsel %vm1507, %v1718, 0
      %v1738 = vsel %vm1507, %v1719, 0
      %v1741 = vsel %vm1576, %v1728, 0
      %1743 = vmatpush.bf16.msra.mxu0 0
      %1744 = vmatpush.bf16.msra.mxu0 0
      %1745 = vmatpush.bf16.msra.mxu0 0
      %1746 = vmatpush.bf16.msra.mxu0 0
      %1747 = vmatpush.bf16.msra.mxu0 0
      %1748 = vmatpush.bf16.msra.mxu0 %v1741
      %1749 = vmatpush.bf16.msra.mxu0 %v1726
      %1750 = vmatpush.bf16.msra.mxu0 %v1724
      %1751 = vmatmul.bf16.gmra.mxu0 %v1732
      %v1752 = vpop.f32.mrf.mxu0
      %v1753 = vadd.f32 0.0, %v1752
      %v1754 = vpop.f32.mrf.mxu0
      %v1755 = vadd.f32 0.0, %v1754
      %1756 = vmatmul.bf16.gmra.mxu0 %v1735
      %v1757 = vpop.f32.mrf.mxu0
      %v1758 = vadd.f32 0.0, %v1757
      %v1759 = vpop.f32.mrf.mxu0
      %v1760 = vadd.f32 0.0, %v1759
      %1761 = vmatmul.bf16.gmra.mxu0 %v1738
      %v1762 = vpop.f32.mrf.mxu0
      %v1763 = vadd.f32 0.0, %v1762
      %v1764 = vpop.f32.mrf.mxu0
      %1765 = vdwg.mxu0
      %1766 = vrot.lane.b32.xlu0 %v1456, 64
      %v1767 = vpop.permute.xlu0 %1766
      %1768 = vrot.lane.b32.xlu0 %v1457, 64
      %v1769 = vpop.permute.xlu0 %1768
      %1770 = vrot.lane.b32.xlu0 %v1458, 64
      %v1771 = vpop.permute.xlu0 %1770
      %1772 = vrot.lane.b32.xlu0 %v1459, 64
      %v1773 = vpop.permute.xlu0 %1772
      %1774 = vrot.lane.b32.xlu0 %v1460, 64
      %v1775 = vpop.permute.xlu0 %1774
      %1776 = vrot.lane.b32.xlu0 %v1461, 64
      %v1777 = vpop.permute.xlu0 %1776
      %v1779 = vsel %vm1465, %v1767, 0
      %v1782 = vsel %vm1465, %v1769, 0
      %v1785 = vsel %vm1465, %v1771, 0
      %v1788 = vsel %vm1465, %v1773, 0
      %v1791 = vsel %vm1465, %v1775, 0
      %v1794 = vsel %vm1465, %v1777, 0
      %1796 = vmatpush.bf16.xpose.msra.mxu0 0
      %1797 = vmatpush.bf16.xpose.msra.mxu0 0
      %1798 = vmatpush.bf16.xpose.msra.mxu0 0
      %1799 = vmatpush.bf16.xpose.msra.mxu0 0
      %1800 = vmatpush.bf16.xpose.msra.mxu0 0
      %1801 = vmatpush.bf16.xpose.msra.mxu0 %v1794
      %1802 = vmatpush.bf16.xpose.msra.mxu0 %v1791
      %1803 = vmatpush.bf16.xpose.msra.mxu0 %v1788
      %1804 = vmatmul.bf16.gmra.mxu0 %v1779
      %v1805 = vpop.f32.mrf.mxu0
      %v1806 = vadd.f32 %v790, %v1805
      %v1807 = vpop.f32.mrf.mxu0
      %v1808 = vadd.f32 %v791, %v1807
      %1809 = vmatmul.bf16.gmra.mxu0 %v1782
      %v1810 = vpop.f32.mrf.mxu0
      %v1811 = vadd.f32 %v792, %v1810
      %v1812 = vpop.f32.mrf.mxu0
      %v1813 = vadd.f32 %v793, %v1812
      %1814 = vmatmul.bf16.gmra.mxu0 %v1785
      %v1815 = vpop.f32.mrf.mxu0
      %v1816 = vadd.f32 %v794, %v1815
      %v1817 = vpop.f32.mrf.mxu0
      %1818 = vdwg.mxu0
      %v1819 = vsel %vm1507, %v1806, -inf
      %1820 = vmax.xlane.f32.xlu0 %v1819
      %v1821 = vpop.xlane.xlu0 %1820
      %v1822 = vsel %vm1507, %v1808, -inf
      %1823 = vmax.xlane.f32.xlu0 %v1822
      %v1824 = vpop.xlane.xlu0 %1823
      %v1825 = vsel %vm1507, %v1811, -inf
      %1826 = vmax.xlane.f32.xlu0 %v1825
      %v1827 = vpop.xlane.xlu0 %1826
      %v1828 = vsel %vm1507, %v1813, -inf
      %1829 = vmax.xlane.f32.xlu0 %v1828
      %v1830 = vpop.xlane.xlu0 %1829
      %v1831 = vsel %vm1520, %v1816, -inf
      %1832 = vmax.xlane.f32.xlu0 %v1831
      %v1833 = vpop.xlane.xlu0 %1832
      %v1834 = vsub.f32 %v1806, %v1821
      %v1835 = vsub.f32 %v1808, %v1824
      %v1836 = vsub.f32 %v1811, %v1827
      %v1837 = vsub.f32 %v1813, %v1830
      %v1838 = vsub.f32 %v1816, %v1833
      %v1839 = vmul.f32 %v1834, 1.442695
      %v1840 = vpow.pop %v1839
      %v1841 = vmul.f32 %v1835, 1.442695
      %v1842 = vpow.pop %v1841
      %v1843 = vmul.f32 %v1836, 1.442695
      %v1844 = vpow.pop %v1843
      %v1845 = vmul.f32 %v1837, 1.442695
      %v1846 = vpow.pop %v1845
      %v1847 = vmul.f32 %v1838, 1.442695
      %v1848 = vpow.pop %v1847
      %v1849 = vsel %vm1507, %v1840, 0.0
      %1850 = vadd.xlane.f32.xlu0 %v1849
      %v1851 = vpop.xlane.xlu0 %1850
      %v1852 = vsel %vm1507, %v1842, 0.0
      %1853 = vadd.xlane.f32.xlu0 %v1852
      %v1854 = vpop.xlane.xlu0 %1853
      %v1855 = vsel %vm1507, %v1844, 0.0
      %1856 = vadd.xlane.f32.xlu0 %v1855
      %v1857 = vpop.xlane.xlu0 %1856
      %v1858 = vsel %vm1507, %v1846, 0.0
      %1859 = vadd.xlane.f32.xlu0 %v1858
      %v1860 = vpop.xlane.xlu0 %1859
      %v1861 = vsel %vm1520, %v1848, 0.0
      %1862 = vadd.xlane.f32.xlu0 %v1861
      %v1863 = vpop.xlane.xlu0 %1862
      %v1864 = vrcp.pop %v1851
      %v1865 = vrcp.pop %v1854
      %v1866 = vrcp.pop %v1857
      %v1867 = vrcp.pop %v1860
      %v1868 = vrcp.pop %v1863
      %v1869 = vmul.f32 %v1840, %v1864
      %v1870 = vmul.f32 %v1842, %v1865
      %v1871 = vmul.f32 %v1844, %v1866
      %v1872 = vmul.f32 %v1846, %v1867
      %v1873 = vmul.f32 %v1848, %v1868
      %v1874 = vpack.c.bf16 %v1870, %v1869
      %v1875 = vpack.c.bf16 %v1872, %v1871
      %v1876 = vpack.c.bf16 %v1873, %v1873
      %1877 = vrot.lane.b32.xlu0 %v1462, 64
      %v1878 = vpop.permute.xlu0 %1877
      %1879 = vrot.lane.b32.xlu0 %v1463, 64
      %v1880 = vpop.permute.xlu0 %1879
      %1881 = vrot.lane.b32.xlu0 %v1464, 64
      %v1882 = vpop.permute.xlu0 %1881
      %v1886 = vsel %vm1507, %v1874, 0
      %v1889 = vsel %vm1507, %v1875, 0
      %v1892 = vsel %vm1507, %v1876, 0
      %v1895 = vsel %vm1576, %v1882, 0
      %1897 = vmatpush.bf16.msra.mxu0 0
      %1898 = vmatpush.bf16.msra.mxu0 0
      %1899 = vmatpush.bf16.msra.mxu0 0
      %1900 = vmatpush.bf16.msra.mxu0 0
      %1901 = vmatpush.bf16.msra.mxu0 0
      %1902 = vmatpush.bf16.msra.mxu0 %v1895
      %1903 = vmatpush.bf16.msra.mxu0 %v1880
      %1904 = vmatpush.bf16.msra.mxu0 %v1878
      %1905 = vmatmul.bf16.gmra.mxu0 %v1886
      %v1906 = vpop.f32.mrf.mxu0
      %v1907 = vadd.f32 0.0, %v1906
      %v1908 = vpop.f32.mrf.mxu0
      %v1909 = vadd.f32 0.0, %v1908
      %1910 = vmatmul.bf16.gmra.mxu0 %v1889
      %v1911 = vpop.f32.mrf.mxu0
      %v1912 = vadd.f32 0.0, %v1911
      %v1913 = vpop.f32.mrf.mxu0
      %v1914 = vadd.f32 0.0, %v1913
      %1915 = vmatmul.bf16.gmra.mxu0 %v1892
      %v1916 = vpop.f32.mrf.mxu0
      %v1917 = vadd.f32 0.0, %v1916
      %v1918 = vpop.f32.mrf.mxu0
      %1919 = vdwg.mxu0
      %1920 = vrot.lane.b32.xlu0 %v1456, 32
      %v1921 = vpop.permute.xlu0 %1920
      %1922 = vrot.lane.b32.xlu0 %v1457, 32
      %v1923 = vpop.permute.xlu0 %1922
      %1924 = vrot.lane.b32.xlu0 %v1458, 32
      %v1925 = vpop.permute.xlu0 %1924
      %1926 = vrot.lane.b32.xlu0 %v1459, 32
      %v1927 = vpop.permute.xlu0 %1926
      %1928 = vrot.lane.b32.xlu0 %v1460, 32
      %v1929 = vpop.permute.xlu0 %1928
      %1930 = vrot.lane.b32.xlu0 %v1461, 32
      %v1931 = vpop.permute.xlu0 %1930
      %v1933 = vsel %vm1465, %v1921, 0
      %v1936 = vsel %vm1465, %v1923, 0
      %v1939 = vsel %vm1465, %v1925, 0
      %v1942 = vsel %vm1465, %v1927, 0
      %v1945 = vsel %vm1465, %v1929, 0
      %v1948 = vsel %vm1465, %v1931, 0
      %1950 = vmatpush.bf16.xpose.msra.mxu0 0
      %1951 = vmatpush.bf16.xpose.msra.mxu0 0
      %1952 = vmatpush.bf16.xpose.msra.mxu0 0
      %1953 = vmatpush.bf16.xpose.msra.mxu0 0
      %1954 = vmatpush.bf16.xpose.msra.mxu0 0
      %1955 = vmatpush.bf16.xpose.msra.mxu0 %v1948
      %1956 = vmatpush.bf16.xpose.msra.mxu0 %v1945
      %1957 = vmatpush.bf16.xpose.msra.mxu0 %v1942
      %1958 = vmatmul.bf16.gmra.mxu0 %v1933
      %v1959 = vpop.f32.mrf.mxu0
      %v1960 = vadd.f32 %v790, %v1959
      %v1961 = vpop.f32.mrf.mxu0
      %v1962 = vadd.f32 %v791, %v1961
      %1963 = vmatmul.bf16.gmra.mxu0 %v1936
      %v1964 = vpop.f32.mrf.mxu0
      %v1965 = vadd.f32 %v792, %v1964
      %v1966 = vpop.f32.mrf.mxu0
      %v1967 = vadd.f32 %v793, %v1966
      %1968 = vmatmul.bf16.gmra.mxu0 %v1939
      %v1969 = vpop.f32.mrf.mxu0
      %v1970 = vadd.f32 %v794, %v1969
      %v1971 = vpop.f32.mrf.mxu0
      %1972 = vdwg.mxu0
      %v1973 = vsel %vm1507, %v1960, -inf
      %1974 = vmax.xlane.f32.xlu0 %v1973
      %v1975 = vpop.xlane.xlu0 %1974
      %v1976 = vsel %vm1507, %v1962, -inf
      %1977 = vmax.xlane.f32.xlu0 %v1976
      %v1978 = vpop.xlane.xlu0 %1977
      %v1979 = vsel %vm1507, %v1965, -inf
      %1980 = vmax.xlane.f32.xlu0 %v1979
      %v1981 = vpop.xlane.xlu0 %1980
      %v1982 = vsel %vm1507, %v1967, -inf
      %1983 = vmax.xlane.f32.xlu0 %v1982
      %v1984 = vpop.xlane.xlu0 %1983
      %v1985 = vsel %vm1520, %v1970, -inf
      %1986 = vmax.xlane.f32.xlu0 %v1985
      %v1987 = vpop.xlane.xlu0 %1986
      %v1988 = vsub.f32 %v1960, %v1975
      %v1989 = vsub.f32 %v1962, %v1978
      %v1990 = vsub.f32 %v1965, %v1981
      %v1991 = vsub.f32 %v1967, %v1984
      %v1992 = vsub.f32 %v1970, %v1987
      %v1993 = vmul.f32 %v1988, 1.442695
      %v1994 = vpow.pop %v1993
      %v1995 = vmul.f32 %v1989, 1.442695
      %v1996 = vpow.pop %v1995
      %v1997 = vmul.f32 %v1990, 1.442695
      %v1998 = vpow.pop %v1997
      %v1999 = vmul.f32 %v1991, 1.442695
      %v2000 = vpow.pop %v1999
      %v2001 = vmul.f32 %v1992, 1.442695
      %v2002 = vpow.pop %v2001
      %v2003 = vsel %vm1507, %v1994, 0.0
      %2004 = vadd.xlane.f32.xlu0 %v2003
      %v2005 = vpop.xlane.xlu0 %2004
      %v2006 = vsel %vm1507, %v1996, 0.0
      %2007 = vadd.xlane.f32.xlu0 %v2006
      %v2008 = vpop.xlane.xlu0 %2007
      %v2009 = vsel %vm1507, %v1998, 0.0
      %2010 = vadd.xlane.f32.xlu0 %v2009
      %v2011 = vpop.xlane.xlu0 %2010
      %v2012 = vsel %vm1507, %v2000, 0.0
      %2013 = vadd.xlane.f32.xlu0 %v2012
      %v2014 = vpop.xlane.xlu0 %2013
      %v2015 = vsel %vm1520, %v2002, 0.0
      %2016 = vadd.xlane.f32.xlu0 %v2015
      %v2017 = vpop.xlane.xlu0 %2016
      %v2018 = vrcp.pop %v2005
      %v2019 = vrcp.pop %v2008
      %v2020 = vrcp.pop %v2011
      %v2021 = vrcp.pop %v2014
      %v2022 = vrcp.pop %v2017
      %v2023 = vmul.f32 %v1994, %v2018
      %v2024 = vmul.f32 %v1996, %v2019
      %v2025 = vmul.f32 %v1998, %v2020
      %v2026 = vmul.f32 %v2000, %v2021
      %v2027 = vmul.f32 %v2002, %v2022
      %v2028 = vpack.c.bf16 %v2024, %v2023
      %v2029 = vpack.c.bf16 %v2026, %v2025
      %v2030 = vpack.c.bf16 %v2027, %v2027
      %2031 = vrot.lane.b32.xlu0 %v1462, 32
      %v2032 = vpop.permute.xlu0 %2031
      %2033 = vrot.lane.b32.xlu0 %v1463, 32
      %v2034 = vpop.permute.xlu0 %2033
      %2035 = vrot.lane.b32.xlu0 %v1464, 32
      %v2036 = vpop.permute.xlu0 %2035
      %v2040 = vsel %vm1507, %v2028, 0
      %v2043 = vsel %vm1507, %v2029, 0
      %v2046 = vsel %vm1507, %v2030, 0
      %v2049 = vsel %vm1576, %v2036, 0
      %2051 = vmatpush.bf16.msra.mxu0 0
      %2052 = vmatpush.bf16.msra.mxu0 0
      %2053 = vmatpush.bf16.msra.mxu0 0
      %2054 = vmatpush.bf16.msra.mxu0 0
      %2055 = vmatpush.bf16.msra.mxu0 0
      %2056 = vmatpush.bf16.msra.mxu0 %v2049
      %2057 = vmatpush.bf16.msra.mxu0 %v2034
      %2058 = vmatpush.bf16.msra.mxu0 %v2032
      %2059 = vmatmul.bf16.gmra.mxu0 %v2040
      %v2060 = vpop.f32.mrf.mxu0
      %v2061 = vadd.f32 0.0, %v2060
      %v2062 = vpop.f32.mrf.mxu0
      %v2063 = vadd.f32 0.0, %v2062
      %2064 = vmatmul.bf16.gmra.mxu0 %v2043
      %v2065 = vpop.f32.mrf.mxu0
      %v2066 = vadd.f32 0.0, %v2065
      %v2067 = vpop.f32.mrf.mxu0
      %v2068 = vadd.f32 0.0, %v2067
      %2069 = vmatmul.bf16.gmra.mxu0 %v2046
      %v2070 = vpop.f32.mrf.mxu0
      %v2071 = vadd.f32 0.0, %v2070
      %v2072 = vpop.f32.mrf.mxu0
      %2073 = vdwg.mxu0
      %2079 = vrot.lane.b32.xlu0 %v1753, 32
      %v2080 = vpop.permute.xlu0 %2079
      %2081 = vrot.lane.b32.xlu0 %v1755, 32
      %v2082 = vpop.permute.xlu0 %2081
      %2083 = vrot.lane.b32.xlu0 %v1758, 32
      %v2084 = vpop.permute.xlu0 %2083
      %2085 = vrot.lane.b32.xlu0 %v1760, 32
      %v2086 = vpop.permute.xlu0 %2085
      %2087 = vrot.lane.b32.xlu0 %v1763, 32
      %v2088 = vpop.permute.xlu0 %2087
      %2099 = vrot.lane.b32.xlu0 %v1907, 64
      %v2100 = vpop.permute.xlu0 %2099
      %2101 = vrot.lane.b32.xlu0 %v1909, 64
      %v2102 = vpop.permute.xlu0 %2101
      %2103 = vrot.lane.b32.xlu0 %v1912, 64
      %v2104 = vpop.permute.xlu0 %2103
      %2105 = vrot.lane.b32.xlu0 %v1914, 64
      %v2106 = vpop.permute.xlu0 %2105
      %2107 = vrot.lane.b32.xlu0 %v1917, 64
      %v2108 = vpop.permute.xlu0 %2107
      %2119 = vrot.lane.b32.xlu0 %v2061, 96
      %v2120 = vpop.permute.xlu0 %2119
      %2121 = vrot.lane.b32.xlu0 %v2063, 96
      %v2122 = vpop.permute.xlu0 %2121
      %2123 = vrot.lane.b32.xlu0 %v2066, 96
      %v2124 = vpop.permute.xlu0 %2123
      %2125 = vrot.lane.b32.xlu0 %v2068, 96
      %v2126 = vpop.permute.xlu0 %2125
      %2127 = vrot.lane.b32.xlu0 %v2071, 96
      %v2128 = vpop.permute.xlu0 %2127
      %v2134 = vsel %vm1465, %v1590, %v2080
      %v2135 = vsel %vm1465, %v1592, %v2082
      %v2136 = vsel %vm1465, %v1595, %v2084
      %v2137 = vsel %vm1465, %v1597, %v2086
      %v2138 = vsel %vm1465, %v1600, %v2088
      %v2139 = vsel %vm734, %v2134, %v2100
      %v2140 = vsel %vm734, %v2135, %v2102
      %v2141 = vsel %vm734, %v2136, %v2104
      %v2142 = vsel %vm734, %v2137, %v2106
      %v2143 = vsel %vm734, %v2138, %v2108
      %vm2144 = vcmask 785408
      %v2145 = vsel %vm2144, %v2139, %v2120
      %v2146 = vsel %vm2144, %v2140, %v2122
      %v2147 = vsel %vm2144, %v2141, %v2124
      %v2148 = vsel %vm2144, %v2142, %v2126
      %v2149 = vsel %vm2144, %v2143, %v2128
      %v2150 = vpack.c.bf16 %v2146, %v2145
      %v2151 = vpack.c.bf16 %v2148, %v2147
      %v2152 = vpack.c.bf16 %v2149, %v2149
      %v2153 = vld [vmem:[%s10] sm:$0xf]
      %v2154 = vld [vmem:[%s10 + $0x4] sm:$0xf]
      %v2155 = vld [vmem:[%s10 + $0x8] sm:$0xf]
      %v2156 = vld [vmem:[%s10 + $0xc] sm:$0xf]
      %v2157 = vld [vmem:[%s10 + $0x10] sm:$0xf]
      %v2158 = vld [vmem:[%s10 + $0x14] sm:$0xf]
      %v2159 = vld [vmem:[%s10 + $0x18] sm:$0xf]
      %v2160 = vld [vmem:[%s10 + $0x1c] sm:$0xf]
      %v2161 = vld [vmem:[%s10 + $0x20] sm:$0xf]
      %v2162 = vld [vmem:[%s10 + $0x24] sm:$0xf]
      %v2163 = vld [vmem:[%s10 + $0x28] sm:$0xf]
      %v2164 = vld [vmem:[%s10 + $0x2c] sm:$0xf]
      %v2165 = vld [vmem:[%s10 + $0x30] sm:$0xf]
      %v2166 = vld [vmem:[%s10 + $0x34] sm:$0xf]
      %v2167 = vld [vmem:[%s10 + $0x38] sm:$0xf]
      %v2168 = vld [vmem:[%s10 + $0x3c] sm:$0xf]
      %v2169 = vperm.slane %v795, 5
      %v2186 = vunpack.c.l.b16 %v2153
      %v2187 = vunpack.c.l.b16 %v2154
      %v2188 = vunpack.c.l.b16 %v2155
      %v2189 = vunpack.c.l.b16 %v2156
      %v2190 = vunpack.c.l.b16 %v2157
      %v2191 = vunpack.c.l.b16 %v2158
      %v2192 = vunpack.c.l.b16 %v2159
      %v2193 = vunpack.c.l.b16 %v2160
      %v2194 = vunpack.c.l.b16 %v2161
      %v2195 = vunpack.c.l.b16 %v2162
      %v2196 = vunpack.c.l.b16 %v2163
      %v2197 = vunpack.c.l.b16 %v2164
      %v2198 = vunpack.c.l.b16 %v2165
      %v2199 = vunpack.c.l.b16 %v2166
      %v2200 = vunpack.c.l.b16 %v2167
      %v2201 = vunpack.c.l.b16 %v2168
      %v2202 = vpack.c.b16 %v2187, %v2186
      %v2203 = vpack.c.b16 %v2189, %v2188
      %v2204 = vpack.c.b16 %v2191, %v2190
      %v2205 = vpack.c.b16 %v2193, %v2192
      %v2206 = vpack.c.b16 %v2195, %v2194
      %v2207 = vpack.c.b16 %v2197, %v2196
      %v2208 = vpack.c.b16 %v2199, %v2198
      %v2209 = vpack.c.b16 %v2201, %v2200
      %2218 = vmatpush.bf16.msra.mxu0 %v2209
      %2219 = vmatpush.bf16.msra.mxu0 %v2208
      %2220 = vmatpush.bf16.msra.mxu0 %v2207
      %2221 = vmatpush.bf16.msra.mxu0 %v2206
      %2222 = vmatpush.bf16.msra.mxu0 %v2205
      %2223 = vmatpush.bf16.msra.mxu0 %v2204
      %2224 = vmatpush.bf16.msra.mxu0 %v2203
      %2225 = vmatpush.bf16.msra.mxu0 %v2202
      %2226 = vmatmul.bf16.gmra.mxu0 %v2150
      %v2227 = vpop.f32.mrf.mxu0
      %v2228 = vadd.f32 %v2169, %v2227
      %v2229 = vpop.f32.mrf.mxu0
      %v2230 = vadd.f32 %v2169, %v2229
      %2231 = vmatmul.bf16.gmra.mxu0 %v2151
      %v2232 = vpop.f32.mrf.mxu0
      %v2233 = vadd.f32 %v2169, %v2232
      %v2234 = vpop.f32.mrf.mxu0
      %v2235 = vadd.f32 %v2169, %v2234
      %2236 = vmatmul.bf16.gmra.mxu0 %v2152
      %v2237 = vpop.f32.mrf.mxu0
      %v2238 = vadd.f32 %v2169, %v2237
      %v2239 = vpop.f32.mrf.mxu0
      %2240 = vdwg.mxu0
      %v2241 = vadd.f32 %v2228, %v777
      %v2242 = vadd.f32 %v2230, %v779
      %v2243 = vadd.f32 %v2233, %v782
      %v2244 = vadd.f32 %v2235, %v784
      %v2245 = vadd.f32 %v2238, %v787
      %2246 = vadd.xlane.f32.xlu0 %v2241
      %v2247 = vpop.xlane.xlu0 %2246
      %2248 = vadd.xlane.f32.xlu0 %v2242
      %v2249 = vpop.xlane.xlu0 %2248
      %2250 = vadd.xlane.f32.xlu0 %v2243
      %v2251 = vpop.xlane.xlu0 %2250
      %2252 = vadd.xlane.f32.xlu0 %v2244
      %v2253 = vpop.xlane.xlu0 %2252
      %v2254 = vsel %vm806, %v2245, 0.0
      %2255 = vadd.xlane.f32.xlu0 %v2254
      %v2256 = vpop.xlane.xlu0 %2255
      %v2257 = vmul.f32 %v2247, %v816
      %v2258 = vmul.f32 %v2249, %v816
      %v2259 = vmul.f32 %v2251, %v816
      %v2260 = vmul.f32 %v2253, %v816
      %v2261 = vmul.f32 %v2256, %v816
      %v2262 = vsub.f32 %v2241, %v2257
      %v2263 = vsub.f32 %v2242, %v2258
      %v2264 = vsub.f32 %v2243, %v2259
      %v2265 = vsub.f32 %v2244, %v2260
      %v2266 = vsub.f32 %v2245, %v2261
      %v2267 = vmul.f32 %v2262, %v2262
      %v2268 = vmul.f32 %v2263, %v2263
      %v2269 = vmul.f32 %v2264, %v2264
      %v2270 = vmul.f32 %v2265, %v2265
      %v2271 = vmul.f32 %v2266, %v2266
      %2272 = vadd.xlane.f32.xlu0 %v2267
      %v2273 = vpop.xlane.xlu0 %2272
      %2274 = vadd.xlane.f32.xlu0 %v2268
      %v2275 = vpop.xlane.xlu0 %2274
      %2276 = vadd.xlane.f32.xlu0 %v2269
      %v2277 = vpop.xlane.xlu0 %2276
      %2278 = vadd.xlane.f32.xlu0 %v2270
      %v2279 = vpop.xlane.xlu0 %2278
      %v2280 = vsel %vm806, %v2271, 0.0
      %2281 = vadd.xlane.f32.xlu0 %v2280
      %v2282 = vpop.xlane.xlu0 %2281
      %v2283 = vmul.f32 %v2273, %v816
      %v2284 = vmul.f32 %v2275, %v816
      %v2285 = vmul.f32 %v2277, %v816
      %v2286 = vmul.f32 %v2279, %v816
      %v2287 = vmul.f32 %v2282, %v816
      %v2288 = vadd.f32 %v2283, 1e-12
      %v2289 = vadd.f32 %v2284, 1e-12
      %v2290 = vadd.f32 %v2285, 1e-12
      %v2291 = vadd.f32 %v2286, 1e-12
      %v2292 = vadd.f32 %v2287, 1e-12
      %v2293 = vrsqrt.pop %v2288
      %v2294 = vmul.f32 %v2293, %v2288
      %v2295 = vmul.f32 %v2294, %v2293
      %v2296 = vmul.f32 0.5, %v2295
      %v2297 = vsub.f32 1.5, %v2296
      %v2298 = vmul.f32 %v2293, %v2297
      %vm2299 = vweird.f32 %v2288
      %vm2300 = vweird.f32 %v2293
      %vm2301 = vmor %vm2299, %vm2300
      %v2302 = vsel %vm2301, %v2293, %v2298
      %v2303 = vrsqrt.pop %v2289
      %v2304 = vmul.f32 %v2303, %v2289
      %v2305 = vmul.f32 %v2304, %v2303
      %v2306 = vmul.f32 0.5, %v2305
      %v2307 = vsub.f32 1.5, %v2306
      %v2308 = vmul.f32 %v2303, %v2307
      %vm2309 = vweird.f32 %v2289
      %vm2310 = vweird.f32 %v2303
      %vm2311 = vmor %vm2309, %vm2310
      %v2312 = vsel %vm2311, %v2303, %v2308
      %v2313 = vrsqrt.pop %v2290
      %v2314 = vmul.f32 %v2313, %v2290
      %v2315 = vmul.f32 %v2314, %v2313
      %v2316 = vmul.f32 0.5, %v2315
      %v2317 = vsub.f32 1.5, %v2316
      %v2318 = vmul.f32 %v2313, %v2317
      %vm2319 = vweird.f32 %v2290
      %vm2320 = vweird.f32 %v2313
      %vm2321 = vmor %vm2319, %vm2320
      %v2322 = vsel %vm2321, %v2313, %v2318
      %v2323 = vrsqrt.pop %v2291
      %v2324 = vmul.f32 %v2323, %v2291
      %v2325 = vmul.f32 %v2324, %v2323
      %v2326 = vmul.f32 0.5, %v2325
      %v2327 = vsub.f32 1.5, %v2326
      %v2328 = vmul.f32 %v2323, %v2327
      %vm2329 = vweird.f32 %v2291
      %vm2330 = vweird.f32 %v2323
      %vm2331 = vmor %vm2329, %vm2330
      %v2332 = vsel %vm2331, %v2323, %v2328
      %v2333 = vrsqrt.pop %v2292
      %v2334 = vmul.f32 %v2333, %v2292
      %v2335 = vmul.f32 %v2334, %v2333
      %v2336 = vmul.f32 0.5, %v2335
      %v2337 = vsub.f32 1.5, %v2336
      %v2338 = vmul.f32 %v2333, %v2337
      %vm2339 = vweird.f32 %v2292
      %vm2340 = vweird.f32 %v2333
      %vm2341 = vmor %vm2339, %vm2340
      %v2342 = vsel %vm2341, %v2333, %v2338
      %v2343 = vmul.f32 %v2262, %v2302
      %v2344 = vmul.f32 %v2263, %v2312
      %v2345 = vmul.f32 %v2264, %v2322
      %v2346 = vmul.f32 %v2265, %v2332
      %v2347 = vmul.f32 %v2266, %v2342
      %v2348 = vperm.slane %v795, 6
      %v2349 = vmul.f32 %v2343, %v2348
      %v2350 = vmul.f32 %v2344, %v2348
      %v2351 = vmul.f32 %v2345, %v2348
      %v2352 = vmul.f32 %v2346, %v2348
      %v2353 = vmul.f32 %v2347, %v2348
      %v2354 = vperm.slane %v795, 7
      %v2355 = vadd.f32 %v2349, %v2354
      %v2356 = vadd.f32 %v2350, %v2354
      %v2357 = vadd.f32 %v2351, %v2354
      %v2358 = vadd.f32 %v2352, %v2354
      %v2359 = vadd.f32 %v2353, %v2354
      %v2360 = vpack.c.bf16 %v2356, %v2355
      %v2361 = vpack.c.bf16 %v2358, %v2357
      %v2362 = vpack.c.bf16 %v2359, %v2359
      %v2363 = vld [vmem:[%s15] sm:$0xff]
      %v2364 = vld [vmem:[%s15 + $0x8] sm:$0xff]
      %v2365 = vld [vmem:[%s15 + $0x10] sm:$0xff]
      %v2366 = vld [vmem:[%s15 + $0x18] sm:$0xff]
      %v2367 = vld [vmem:[%s15 + $0x20] sm:$0xff]
      %v2368 = vld [vmem:[%s15 + $0x28] sm:$0xff]
      %v2369 = vld [vmem:[%s15 + $0x30] sm:$0xff]
      %v2370 = vld [vmem:[%s15 + $0x38] sm:$0xff]
      %v2371 = vld [vmem:[%s15 + $0x40] sm:$0xff]
      %v2372 = vld [vmem:[%s15 + $0x48] sm:$0xff]
      %v2373 = vld [vmem:[%s15 + $0x50] sm:$0xff]
      %v2374 = vld [vmem:[%s15 + $0x58] sm:$0xff]
      %v2375 = vld [vmem:[%s15 + $0x60] sm:$0xff]
      %v2376 = vld [vmem:[%s15 + $0x68] sm:$0xff]
      %v2377 = vld [vmem:[%s15 + $0x70] sm:$0xff]
      %v2378 = vld [vmem:[%s15 + $0x78] sm:$0xff]
      %v2380 = vperm.slane %v797, 0
      %v2381 = vperm.slane %v797, 1
      %v2400 = vunpack.c.l.b16 %v2363
      %v2401 = vunpack.c.h.b16 %v2363
      %v2402 = vunpack.c.l.b16 %v2364
      %v2403 = vunpack.c.h.b16 %v2364
      %v2404 = vunpack.c.l.b16 %v2365
      %v2405 = vunpack.c.h.b16 %v2365
      %v2406 = vunpack.c.l.b16 %v2366
      %v2407 = vunpack.c.h.b16 %v2366
      %v2408 = vunpack.c.l.b16 %v2367
      %v2409 = vunpack.c.h.b16 %v2367
      %v2410 = vunpack.c.l.b16 %v2368
      %v2411 = vunpack.c.h.b16 %v2368
      %v2412 = vunpack.c.l.b16 %v2369
      %v2413 = vunpack.c.h.b16 %v2369
      %v2414 = vunpack.c.l.b16 %v2370
      %v2415 = vunpack.c.h.b16 %v2370
      %v2416 = vunpack.c.l.b16 %v2371
      %v2417 = vunpack.c.h.b16 %v2371
      %v2418 = vunpack.c.l.b16 %v2372
      %v2419 = vunpack.c.h.b16 %v2372
      %v2420 = vunpack.c.l.b16 %v2373
      %v2421 = vunpack.c.h.b16 %v2373
      %v2422 = vunpack.c.l.b16 %v2374
      %v2423 = vunpack.c.h.b16 %v2374
      %v2424 = vunpack.c.l.b16 %v2375
      %v2425 = vunpack.c.h.b16 %v2375
      %v2426 = vunpack.c.l.b16 %v2376
      %v2427 = vunpack.c.h.b16 %v2376
      %v2428 = vunpack.c.l.b16 %v2377
      %v2429 = vunpack.c.h.b16 %v2377
      %v2430 = vunpack.c.l.b16 %v2378
      %v2431 = vunpack.c.h.b16 %v2378
      %v2432 = vpack.c.b16 %v2402, %v2400
      %v2433 = vpack.c.b16 %v2403, %v2401
      %v2434 = vpack.c.b16 %v2406, %v2404
      %v2435 = vpack.c.b16 %v2407, %v2405
      %v2436 = vpack.c.b16 %v2410, %v2408
      %v2437 = vpack.c.b16 %v2411, %v2409
      %v2438 = vpack.c.b16 %v2414, %v2412
      %v2439 = vpack.c.b16 %v2415, %v2413
      %v2440 = vpack.c.b16 %v2418, %v2416
      %v2441 = vpack.c.b16 %v2419, %v2417
      %v2442 = vpack.c.b16 %v2422, %v2420
      %v2443 = vpack.c.b16 %v2423, %v2421
      %v2444 = vpack.c.b16 %v2426, %v2424
      %v2445 = vpack.c.b16 %v2427, %v2425
      %v2446 = vpack.c.b16 %v2430, %v2428
      %v2447 = vpack.c.b16 %v2431, %v2429
      %2464 = vmatpush.bf16.msra.mxu0 %v2446
      %2465 = vmatpush.bf16.msra.mxu0 %v2444
      %2466 = vmatpush.bf16.msra.mxu0 %v2442
      %2467 = vmatpush.bf16.msra.mxu0 %v2440
      %2468 = vmatpush.bf16.msra.mxu0 %v2438
      %2469 = vmatpush.bf16.msra.mxu0 %v2436
      %2470 = vmatpush.bf16.msra.mxu0 %v2434
      %2471 = vmatpush.bf16.msra.mxu0 %v2432
      %2472 = vmatmul.bf16.gmra.mxu0 %v2360
      %v2473 = vpop.f32.mrf.mxu0
      %v2474 = vadd.f32 %v2380, %v2473
      %v2475 = vpop.f32.mrf.mxu0
      %v2476 = vadd.f32 %v2380, %v2475
      %2477 = vmatmul.bf16.gmra.mxu0 %v2361
      %v2478 = vpop.f32.mrf.mxu0
      %v2479 = vadd.f32 %v2380, %v2478
      %v2480 = vpop.f32.mrf.mxu0
      %v2481 = vadd.f32 %v2380, %v2480
      %2482 = vmatmul.bf16.gmra.mxu0 %v2362
      %v2483 = vpop.f32.mrf.mxu0
      %v2484 = vadd.f32 %v2380, %v2483
      %v2485 = vpop.f32.mrf.mxu0
      %2486 = vdwg.mxu0
      %2487 = vmatpush.bf16.msra.mxu0 %v2447
      %2488 = vmatpush.bf16.msra.mxu0 %v2445
      %2489 = vmatpush.bf16.msra.mxu0 %v2443
      %2490 = vmatpush.bf16.msra.mxu0 %v2441
      %2491 = vmatpush.bf16.msra.mxu0 %v2439
      %2492 = vmatpush.bf16.msra.mxu0 %v2437
      %2493 = vmatpush.bf16.msra.mxu0 %v2435
      %2494 = vmatpush.bf16.msra.mxu0 %v2433
      %2495 = vmatmul.bf16.gmra.mxu0 %v2360
      %v2496 = vpop.f32.mrf.mxu0
      %v2497 = vadd.f32 %v2381, %v2496
      %v2498 = vpop.f32.mrf.mxu0
      %v2499 = vadd.f32 %v2381, %v2498
      %2500 = vmatmul.bf16.gmra.mxu0 %v2361
      %v2501 = vpop.f32.mrf.mxu0
      %v2502 = vadd.f32 %v2381, %v2501
      %v2503 = vpop.f32.mrf.mxu0
      %v2504 = vadd.f32 %v2381, %v2503
      %2505 = vmatmul.bf16.gmra.mxu0 %v2362
      %v2506 = vpop.f32.mrf.mxu0
      %v2507 = vadd.f32 %v2381, %v2506
      %v2508 = vpop.f32.mrf.mxu0
      %2509 = vdwg.mxu0
      %v2510 = vmul.f32 %v2474, 0.5
      %v2511 = vmul.f32 %v2497, 0.5
      %v2512 = vmul.f32 %v2476, 0.5
      %v2513 = vmul.f32 %v2499, 0.5
      %v2514 = vmul.f32 %v2479, 0.5
      %v2515 = vmul.f32 %v2502, 0.5
      %v2516 = vmul.f32 %v2481, 0.5
      %v2517 = vmul.f32 %v2504, 0.5
      %v2518 = vmul.f32 %v2484, 0.5
      %v2519 = vmul.f32 %v2507, 0.5
      %v2520 = vmul.f32 %v2474, 0.044715
      %v2521 = vmul.f32 %v2497, 0.044715
      %v2522 = vmul.f32 %v2476, 0.044715
      %v2523 = vmul.f32 %v2499, 0.044715
      %v2524 = vmul.f32 %v2479, 0.044715
      %v2525 = vmul.f32 %v2502, 0.044715
      %v2526 = vmul.f32 %v2481, 0.044715
      %v2527 = vmul.f32 %v2504, 0.044715
      %v2528 = vmul.f32 %v2484, 0.044715
      %v2529 = vmul.f32 %v2507, 0.044715
      %v2530 = vmul.f32 %v2520, %v2474
      %v2531 = vmul.f32 %v2521, %v2497
      %v2532 = vmul.f32 %v2522, %v2476
      %v2533 = vmul.f32 %v2523, %v2499
      %v2534 = vmul.f32 %v2524, %v2479
      %v2535 = vmul.f32 %v2525, %v2502
      %v2536 = vmul.f32 %v2526, %v2481
      %v2537 = vmul.f32 %v2527, %v2504
      %v2538 = vmul.f32 %v2528, %v2484
      %v2539 = vmul.f32 %v2529, %v2507
      %v2540 = vmul.f32 %v2530, %v2474
      %v2541 = vmul.f32 %v2531, %v2497
      %v2542 = vmul.f32 %v2532, %v2476
      %v2543 = vmul.f32 %v2533, %v2499
      %v2544 = vmul.f32 %v2534, %v2479
      %v2545 = vmul.f32 %v2535, %v2502
      %v2546 = vmul.f32 %v2536, %v2481
      %v2547 = vmul.f32 %v2537, %v2504
      %v2548 = vmul.f32 %v2538, %v2484
      %v2549 = vmul.f32 %v2539, %v2507
      %v2550 = vadd.f32 %v2474, %v2540
      %v2551 = vadd.f32 %v2497, %v2541
      %v2552 = vadd.f32 %v2476, %v2542
      %v2553 = vadd.f32 %v2499, %v2543
      %v2554 = vadd.f32 %v2479, %v2544
      %v2555 = vadd.f32 %v2502, %v2545
      %v2556 = vadd.f32 %v2481, %v2546
      %v2557 = vadd.f32 %v2504, %v2547
      %v2558 = vadd.f32 %v2484, %v2548
      %v2559 = vadd.f32 %v2507, %v2549
      %v2560 = vmul.f32 %v2550, 0.7978846
      %v2561 = vmul.f32 %v2551, 0.7978846
      %v2562 = vmul.f32 %v2552, 0.7978846
      %v2563 = vmul.f32 %v2553, 0.7978846
      %v2564 = vmul.f32 %v2554, 0.7978846
      %v2565 = vmul.f32 %v2555, 0.7978846
      %v2566 = vmul.f32 %v2556, 0.7978846
      %v2567 = vmul.f32 %v2557, 0.7978846
      %v2568 = vmul.f32 %v2558, 0.7978846
      %v2569 = vmul.f32 %v2559, 0.7978846
      %v2570 = vtanh.pop %v2560
      %v2571 = vtanh.pop %v2561
      %v2572 = vtanh.pop %v2562
      %v2573 = vtanh.pop %v2563
      %v2574 = vtanh.pop %v2564
      %v2575 = vtanh.pop %v2565
      %v2576 = vtanh.pop %v2566
      %v2577 = vtanh.pop %v2567
      %v2578 = vtanh.pop %v2568
      %v2579 = vtanh.pop %v2569
      %v2580 = vadd.f32 %v2570, 1.0
      %v2581 = vadd.f32 %v2571, 1.0
      %v2582 = vadd.f32 %v2572, 1.0
      %v2583 = vadd.f32 %v2573, 1.0
      %v2584 = vadd.f32 %v2574, 1.0
      %v2585 = vadd.f32 %v2575, 1.0
      %v2586 = vadd.f32 %v2576, 1.0
      %v2587 = vadd.f32 %v2577, 1.0
      %v2588 = vadd.f32 %v2578, 1.0
      %v2589 = vadd.f32 %v2579, 1.0
      %v2590 = vmul.f32 %v2510, %v2580
      %v2591 = vmul.f32 %v2511, %v2581
      %v2592 = vmul.f32 %v2512, %v2582
      %v2593 = vmul.f32 %v2513, %v2583
      %v2594 = vmul.f32 %v2514, %v2584
      %v2595 = vmul.f32 %v2515, %v2585
      %v2596 = vmul.f32 %v2516, %v2586
      %v2597 = vmul.f32 %v2517, %v2587
      %v2598 = vmul.f32 %v2518, %v2588
      %v2599 = vmul.f32 %v2519, %v2589
      %v2600 = vpack.c.bf16 %v2592, %v2590
      %v2601 = vpack.c.bf16 %v2593, %v2591
      %v2602 = vpack.c.bf16 %v2596, %v2594
      %v2603 = vpack.c.bf16 %v2597, %v2595
      %v2604 = vpack.c.bf16 %v2598, %v2598
      %v2605 = vpack.c.bf16 %v2599, %v2599
      %v2606 = vld [vmem:[%s16] sm:$0xf]
      %v2607 = vld [vmem:[%s16 + $0x4] sm:$0xf]
      %v2608 = vld [vmem:[%s16 + $0x8] sm:$0xf]
      %v2609 = vld [vmem:[%s16 + $0xc] sm:$0xf]
      %v2610 = vld [vmem:[%s16 + $0x10] sm:$0xf]
      %v2611 = vld [vmem:[%s16 + $0x14] sm:$0xf]
      %v2612 = vld [vmem:[%s16 + $0x18] sm:$0xf]
      %v2613 = vld [vmem:[%s16 + $0x1c] sm:$0xf]
      %v2614 = vld [vmem:[%s16 + $0x20] sm:$0xf]
      %v2615 = vld [vmem:[%s16 + $0x24] sm:$0xf]
      %v2616 = vld [vmem:[%s16 + $0x28] sm:$0xf]
      %v2617 = vld [vmem:[%s16 + $0x2c] sm:$0xf]
      %v2618 = vld [vmem:[%s16 + $0x30] sm:$0xf]
      %v2619 = vld [vmem:[%s16 + $0x34] sm:$0xf]
      %v2620 = vld [vmem:[%s16 + $0x38] sm:$0xf]
      %v2621 = vld [vmem:[%s16 + $0x3c] sm:$0xf]
      %v2622 = vld [vmem:[%s16 + $0x40] sm:$0xf]
      %v2623 = vld [vmem:[%s16 + $0x44] sm:$0xf]
      %v2624 = vld [vmem:[%s16 + $0x48] sm:$0xf]
      %v2625 = vld [vmem:[%s16 + $0x4c] sm:$0xf]
      %v2626 = vld [vmem:[%s16 + $0x50] sm:$0xf]
      %v2627 = vld [vmem:[%s16 + $0x54] sm:$0xf]
      %v2628 = vld [vmem:[%s16 + $0x58] sm:$0xf]
      %v2629 = vld [vmem:[%s16 + $0x5c] sm:$0xf]
      %v2630 = vld [vmem:[%s16 + $0x60] sm:$0xf]
      %v2631 = vld [vmem:[%s16 + $0x64] sm:$0xf]
      %v2632 = vld [vmem:[%s16 + $0x68] sm:$0xf]
      %v2633 = vld [vmem:[%s16 + $0x6c] sm:$0xf]
      %v2634 = vld [vmem:[%s16 + $0x70] sm:$0xf]
      %v2635 = vld [vmem:[%s16 + $0x74] sm:$0xf]
      %v2636 = vld [vmem:[%s16 + $0x78] sm:$0xf]
      %v2637 = vld [vmem:[%s16 + $0x7c] sm:$0xf]
      %v2638 = vperm.slane %v796, 0
      %v2671 = vunpack.c.l.b16 %v2606
      %v2672 = vunpack.c.l.b16 %v2607
      %v2673 = vunpack.c.l.b16 %v2608
      %v2674 = vunpack.c.l.b16 %v2609
      %v2675 = vunpack.c.l.b16 %v2610
      %v2676 = vunpack.c.l.b16 %v2611
      %v2677 = vunpack.c.l.b16 %v2612
      %v2678 = vunpack.c.l.b16 %v2613
      %v2679 = vunpack.c.l.b16 %v2614
      %v2680 = vunpack.c.l.b16 %v2615
      %v2681 = vunpack.c.l.b16 %v2616
      %v2682 = vunpack.c.l.b16 %v2617
      %v2683 = vunpack.c.l.b16 %v2618
      %v2684 = vunpack.c.l.b16 %v2619
      %v2685 = vunpack.c.l.b16 %v2620
      %v2686 = vunpack.c.l.b16 %v2621
      %v2687 = vunpack.c.l.b16 %v2622
      %v2688 = vunpack.c.l.b16 %v2623
      %v2689 = vunpack.c.l.b16 %v2624
      %v2690 = vunpack.c.l.b16 %v2625
      %v2691 = vunpack.c.l.b16 %v2626
      %v2692 = vunpack.c.l.b16 %v2627
      %v2693 = vunpack.c.l.b16 %v2628
      %v2694 = vunpack.c.l.b16 %v2629
      %v2695 = vunpack.c.l.b16 %v2630
      %v2696 = vunpack.c.l.b16 %v2631
      %v2697 = vunpack.c.l.b16 %v2632
      %v2698 = vunpack.c.l.b16 %v2633
      %v2699 = vunpack.c.l.b16 %v2634
      %v2700 = vunpack.c.l.b16 %v2635
      %v2701 = vunpack.c.l.b16 %v2636
      %v2702 = vunpack.c.l.b16 %v2637
      %v2703 = vpack.c.b16 %v2672, %v2671
      %v2704 = vpack.c.b16 %v2674, %v2673
      %v2705 = vpack.c.b16 %v2676, %v2675
      %v2706 = vpack.c.b16 %v2678, %v2677
      %v2707 = vpack.c.b16 %v2680, %v2679
      %v2708 = vpack.c.b16 %v2682, %v2681
      %v2709 = vpack.c.b16 %v2684, %v2683
      %v2710 = vpack.c.b16 %v2686, %v2685
      %v2711 = vpack.c.b16 %v2688, %v2687
      %v2712 = vpack.c.b16 %v2690, %v2689
      %v2713 = vpack.c.b16 %v2692, %v2691
      %v2714 = vpack.c.b16 %v2694, %v2693
      %v2715 = vpack.c.b16 %v2696, %v2695
      %v2716 = vpack.c.b16 %v2698, %v2697
      %v2717 = vpack.c.b16 %v2700, %v2699
      %v2718 = vpack.c.b16 %v2702, %v2701
      %2735 = vmatpush.bf16.msra.mxu0 %v2710
      %2736 = vmatpush.bf16.msra.mxu0 %v2709
      %2737 = vmatpush.bf16.msra.mxu0 %v2708
      %2738 = vmatpush.bf16.msra.mxu0 %v2707
      %2739 = vmatpush.bf16.msra.mxu0 %v2706
      %2740 = vmatpush.bf16.msra.mxu0 %v2705
      %2741 = vmatpush.bf16.msra.mxu0 %v2704
      %2742 = vmatpush.bf16.msra.mxu0 %v2703
      %2743 = vmatmul.bf16.gmra.mxu0 %v2600
      %v2744 = vpop.f32.mrf.mxu0
      %v2745 = vadd.f32 %v2638, %v2744
      %v2746 = vpop.f32.mrf.mxu0
      %v2747 = vadd.f32 %v2638, %v2746
      %2748 = vmatmul.bf16.gmra.mxu0 %v2602
      %v2749 = vpop.f32.mrf.mxu0
      %v2750 = vadd.f32 %v2638, %v2749
      %v2751 = vpop.f32.mrf.mxu0
      %v2752 = vadd.f32 %v2638, %v2751
      %2753 = vmatmul.bf16.gmra.mxu0 %v2604
      %v2754 = vpop.f32.mrf.mxu0
      %v2755 = vadd.f32 %v2638, %v2754
      %v2756 = vpop.f32.mrf.mxu0
      %2757 = vdwg.mxu0
      %2758 = vmatpush.bf16.msra.mxu0 %v2718
      %2759 = vmatpush.bf16.msra.mxu0 %v2717
      %2760 = vmatpush.bf16.msra.mxu0 %v2716
      %2761 = vmatpush.bf16.msra.mxu0 %v2715
      %2762 = vmatpush.bf16.msra.mxu0 %v2714
      %2763 = vmatpush.bf16.msra.mxu0 %v2713
      %2764 = vmatpush.bf16.msra.mxu0 %v2712
      %2765 = vmatpush.bf16.msra.mxu0 %v2711
      %2766 = vmatmul.bf16.gmra.mxu0 %v2601
      %v2767 = vpop.f32.mrf.mxu0
      %v2768 = vadd.f32 %v2745, %v2767
      %v2769 = vpop.f32.mrf.mxu0
      %v2770 = vadd.f32 %v2747, %v2769
      %2771 = vmatmul.bf16.gmra.mxu0 %v2603
      %v2772 = vpop.f32.mrf.mxu0
      %v2773 = vadd.f32 %v2750, %v2772
      %v2774 = vpop.f32.mrf.mxu0
      %v2775 = vadd.f32 %v2752, %v2774
      %2776 = vmatmul.bf16.gmra.mxu0 %v2605
      %v2777 = vpop.f32.mrf.mxu0
      %v2778 = vadd.f32 %v2755, %v2777
      %v2779 = vpop.f32.mrf.mxu0
      %2780 = vdwg.mxu0
      %v2781 = vadd.f32 %v2768, %v2241
      %v2782 = vadd.f32 %v2770, %v2242
      %v2783 = vadd.f32 %v2773, %v2243
      %v2784 = vadd.f32 %v2775, %v2244
      %v2785 = vadd.f32 %v2778, %v2245
      %s2786 = scalar_lea.vmem %s17, 16
      %v2787 = vld [vmem:[%s2786] sm:$0xff]
      %v2788 = vld [vmem:[%s2786 + $0x8] sm:$0x1]
      %s2789 = scalar_lea.vmem %s18, 2
      %v2790 = vld [vmem:[%s2789] sm:$0x3]
      %2791 = vadd.xlane.f32.xlu0 %v2781
      %v2792 = vpop.xlane.xlu0 %2791
      %2793 = vadd.xlane.f32.xlu0 %v2782
      %v2794 = vpop.xlane.xlu0 %2793
      %2795 = vadd.xlane.f32.xlu0 %v2783
      %v2796 = vpop.xlane.xlu0 %2795
      %2797 = vadd.xlane.f32.xlu0 %v2784
      %v2798 = vpop.xlane.xlu0 %2797
      %v2799 = vsel %vm806, %v2785, 0.0
      %2800 = vadd.xlane.f32.xlu0 %v2799
      %v2801 = vpop.xlane.xlu0 %2800
      %v2802 = vmul.f32 %v2792, %v816
      %v2803 = vmul.f32 %v2794, %v816
      %v2804 = vmul.f32 %v2796, %v816
      %v2805 = vmul.f32 %v2798, %v816
      %v2806 = vmul.f32 %v2801, %v816
      %v2807 = vsub.f32 %v2781, %v2802
      %v2808 = vsub.f32 %v2782, %v2803
      %v2809 = vsub.f32 %v2783, %v2804
      %v2810 = vsub.f32 %v2784, %v2805
      %v2811 = vsub.f32 %v2785, %v2806
      %v2812 = vmul.f32 %v2807, %v2807
      %v2813 = vmul.f32 %v2808, %v2808
      %v2814 = vmul.f32 %v2809, %v2809
      %v2815 = vmul.f32 %v2810, %v2810
      %v2816 = vmul.f32 %v2811, %v2811
      %2817 = vadd.xlane.f32.xlu0 %v2812
      %v2818 = vpop.xlane.xlu0 %2817
      %2819 = vadd.xlane.f32.xlu0 %v2813
      %v2820 = vpop.xlane.xlu0 %2819
      %2821 = vadd.xlane.f32.xlu0 %v2814
      %v2822 = vpop.xlane.xlu0 %2821
      %2823 = vadd.xlane.f32.xlu0 %v2815
      %v2824 = vpop.xlane.xlu0 %2823
      %v2825 = vsel %vm806, %v2816, 0.0
      %2826 = vadd.xlane.f32.xlu0 %v2825
      %v2827 = vpop.xlane.xlu0 %2826
      %v2828 = vmul.f32 %v2818, %v816
      %v2829 = vmul.f32 %v2820, %v816
      %v2830 = vmul.f32 %v2822, %v816
      %v2831 = vmul.f32 %v2824, %v816
      %v2832 = vmul.f32 %v2827, %v816
      %v2833 = vadd.f32 %v2828, 1e-12
      %v2834 = vadd.f32 %v2829, 1e-12
      %v2835 = vadd.f32 %v2830, 1e-12
      %v2836 = vadd.f32 %v2831, 1e-12
      %v2837 = vadd.f32 %v2832, 1e-12
      %v2838 = vrsqrt.pop %v2833
      %v2839 = vmul.f32 %v2838, %v2833
      %v2840 = vmul.f32 %v2839, %v2838
      %v2841 = vmul.f32 0.5, %v2840
      %v2842 = vsub.f32 1.5, %v2841
      %v2843 = vmul.f32 %v2838, %v2842
      %vm2844 = vweird.f32 %v2833
      %vm2845 = vweird.f32 %v2838
      %vm2846 = vmor %vm2844, %vm2845
      %v2847 = vsel %vm2846, %v2838, %v2843
      %v2848 = vrsqrt.pop %v2834
      %v2849 = vmul.f32 %v2848, %v2834
      %v2850 = vmul.f32 %v2849, %v2848
      %v2851 = vmul.f32 0.5, %v2850
      %v2852 = vsub.f32 1.5, %v2851
      %v2853 = vmul.f32 %v2848, %v2852
      %vm2854 = vweird.f32 %v2834
      %vm2855 = vweird.f32 %v2848
      %vm2856 = vmor %vm2854, %vm2855
      %v2857 = vsel %vm2856, %v2848, %v2853
      %v2858 = vrsqrt.pop %v2835
      %v2859 = vmul.f32 %v2858, %v2835
      %v2860 = vmul.f32 %v2859, %v2858
      %v2861 = vmul.f32 0.5, %v2860
      %v2862 = vsub.f32 1.5, %v2861
      %v2863 = vmul.f32 %v2858, %v2862
      %vm2864 = vweird.f32 %v2835
      %vm2865 = vweird.f32 %v2858
      %vm2866 = vmor %vm2864, %vm2865
      %v2867 = vsel %vm2866, %v2858, %v2863
      %v2868 = vrsqrt.pop %v2836
      %v2869 = vmul.f32 %v2868, %v2836
      %v2870 = vmul.f32 %v2869, %v2868
      %v2871 = vmul.f32 0.5, %v2870
      %v2872 = vsub.f32 1.5, %v2871
      %v2873 = vmul.f32 %v2868, %v2872
      %vm2874 = vweird.f32 %v2836
      %vm2875 = vweird.f32 %v2868
      %vm2876 = vmor %vm2874, %vm2875
      %v2877 = vsel %vm2876, %v2868, %v2873
      %v2878 = vrsqrt.pop %v2837
      %v2879 = vmul.f32 %v2878, %v2837
      %v2880 = vmul.f32 %v2879, %v2878
      %v2881 = vmul.f32 0.5, %v2880
      %v2882 = vsub.f32 1.5, %v2881
      %v2883 = vmul.f32 %v2878, %v2882
      %vm2884 = vweird.f32 %v2837
      %vm2885 = vweird.f32 %v2878
      %vm2886 = vmor %vm2884, %vm2885
      %v2887 = vsel %vm2886, %v2878, %v2883
      %v2888 = vmul.f32 %v2807, %v2847
      %v2889 = vmul.f32 %v2808, %v2857
      %v2890 = vmul.f32 %v2809, %v2867
      %v2891 = vmul.f32 %v2810, %v2877
      %v2892 = vmul.f32 %v2811, %v2887
      %v2893 = vperm.slane %v2787, 0
      %v2894 = vmul.f32 %v2888, %v2893
      %v2895 = vmul.f32 %v2889, %v2893
      %v2896 = vmul.f32 %v2890, %v2893
      %v2897 = vmul.f32 %v2891, %v2893
      %v2898 = vmul.f32 %v2892, %v2893
      %v2899 = vperm.slane %v2787, 1
      %v2900 = vadd.f32 %v2894, %v2899
      %v2901 = vadd.f32 %v2895, %v2899
      %v2902 = vadd.f32 %v2896, %v2899
      %v2903 = vadd.f32 %v2897, %v2899
      %v2904 = vadd.f32 %v2898, %v2899
      %v2905 = vpack.c.bf16 %v2901, %v2900
      %v2906 = vpack.c.bf16 %v2903, %v2902
      %v2907 = vpack.c.bf16 %v2904, %v2904
      %s2908 = scalar_lea.vmem %s7, 64
      %v2909 = vld [vmem:[%s2908] sm:$0xf]
      %v2910 = vld [vmem:[%s2908 + $0x4] sm:$0xf]
      %v2911 = vld [vmem:[%s2908 + $0x8] sm:$0xf]
      %v2912 = vld [vmem:[%s2908 + $0xc] sm:$0xf]
      %v2913 = vld [vmem:[%s2908 + $0x10] sm:$0xf]
      %v2914 = vld [vmem:[%s2908 + $0x14] sm:$0xf]
      %v2915 = vld [vmem:[%s2908 + $0x18] sm:$0xf]
      %v2916 = vld [vmem:[%s2908 + $0x1c] sm:$0xf]
      %v2917 = vld [vmem:[%s2908 + $0x20] sm:$0xf]
      %v2918 = vld [vmem:[%s2908 + $0x24] sm:$0xf]
      %v2919 = vld [vmem:[%s2908 + $0x28] sm:$0xf]
      %v2920 = vld [vmem:[%s2908 + $0x2c] sm:$0xf]
      %v2921 = vld [vmem:[%s2908 + $0x30] sm:$0xf]
      %v2922 = vld [vmem:[%s2908 + $0x34] sm:$0xf]
      %v2923 = vld [vmem:[%s2908 + $0x38] sm:$0xf]
      %v2924 = vld [vmem:[%s2908 + $0x3c] sm:$0xf]
      %v2925 = vperm.slane %v2787, 2
      %v2942 = vunpack.c.l.b16 %v2909
      %v2943 = vunpack.c.l.b16 %v2910
      %v2944 = vunpack.c.l.b16 %v2911
      %v2945 = vunpack.c.l.b16 %v2912
      %v2946 = vunpack.c.l.b16 %v2913
      %v2947 = vunpack.c.l.b16 %v2914
      %v2948 = vunpack.c.l.b16 %v2915
      %v2949 = vunpack.c.l.b16 %v2916
      %v2950 = vunpack.c.l.b16 %v2917
      %v2951 = vunpack.c.l.b16 %v2918
      %v2952 = vunpack.c.l.b16 %v2919
      %v2953 = vunpack.c.l.b16 %v2920
      %v2954 = vunpack.c.l.b16 %v2921
      %v2955 = vunpack.c.l.b16 %v2922
      %v2956 = vunpack.c.l.b16 %v2923
      %v2957 = vunpack.c.l.b16 %v2924
      %v2958 = vpack.c.b16 %v2943, %v2942
      %v2959 = vpack.c.b16 %v2945, %v2944
      %v2960 = vpack.c.b16 %v2947, %v2946
      %v2961 = vpack.c.b16 %v2949, %v2948
      %v2962 = vpack.c.b16 %v2951, %v2950
      %v2963 = vpack.c.b16 %v2953, %v2952
      %v2964 = vpack.c.b16 %v2955, %v2954
      %v2965 = vpack.c.b16 %v2957, %v2956
      %2974 = vmatpush.bf16.msra.mxu0 %v2965
      %2975 = vmatpush.bf16.msra.mxu0 %v2964
      %2976 = vmatpush.bf16.msra.mxu0 %v2963
      %2977 = vmatpush.bf16.msra.mxu0 %v2962
      %2978 = vmatpush.bf16.msra.mxu0 %v2961
      %2979 = vmatpush.bf16.msra.mxu0 %v2960
      %2980 = vmatpush.bf16.msra.mxu0 %v2959
      %2981 = vmatpush.bf16.msra.mxu0 %v2958
      %2982 = vmatmul.bf16.gmra.mxu0 %v2905
      %v2983 = vpop.f32.mrf.mxu0
      %v2984 = vadd.f32 %v2925, %v2983
      %v2985 = vpop.f32.mrf.mxu0
      %v2986 = vadd.f32 %v2925, %v2985
      %2987 = vmatmul.bf16.gmra.mxu0 %v2906
      %v2988 = vpop.f32.mrf.mxu0
      %v2989 = vadd.f32 %v2925, %v2988
      %v2990 = vpop.f32.mrf.mxu0
      %v2991 = vadd.f32 %v2925, %v2990
      %2992 = vmatmul.bf16.gmra.mxu0 %v2907
      %v2993 = vpop.f32.mrf.mxu0
      %v2994 = vadd.f32 %v2925, %v2993
      %v2995 = vpop.f32.mrf.mxu0
      %2996 = vdwg.mxu0
      %s2997 = scalar_lea.vmem %s11, 64
      %v2998 = vld [vmem:[%s2997] sm:$0xf]
      %v2999 = vld [vmem:[%s2997 + $0x4] sm:$0xf]
      %v3000 = vld [vmem:[%s2997 + $0x8] sm:$0xf]
      %v3001 = vld [vmem:[%s2997 + $0xc] sm:$0xf]
      %v3002 = vld [vmem:[%s2997 + $0x10] sm:$0xf]
      %v3003 = vld [vmem:[%s2997 + $0x14] sm:$0xf]
      %v3004 = vld [vmem:[%s2997 + $0x18] sm:$0xf]
      %v3005 = vld [vmem:[%s2997 + $0x1c] sm:$0xf]
      %v3006 = vld [vmem:[%s2997 + $0x20] sm:$0xf]
      %v3007 = vld [vmem:[%s2997 + $0x24] sm:$0xf]
      %v3008 = vld [vmem:[%s2997 + $0x28] sm:$0xf]
      %v3009 = vld [vmem:[%s2997 + $0x2c] sm:$0xf]
      %v3010 = vld [vmem:[%s2997 + $0x30] sm:$0xf]
      %v3011 = vld [vmem:[%s2997 + $0x34] sm:$0xf]
      %v3012 = vld [vmem:[%s2997 + $0x38] sm:$0xf]
      %v3013 = vld [vmem:[%s2997 + $0x3c] sm:$0xf]
      %v3030 = vunpack.c.l.b16 %v2998
      %v3031 = vunpack.c.l.b16 %v2999
      %v3032 = vunpack.c.l.b16 %v3000
      %v3033 = vunpack.c.l.b16 %v3001
      %v3034 = vunpack.c.l.b16 %v3002
      %v3035 = vunpack.c.l.b16 %v3003
      %v3036 = vunpack.c.l.b16 %v3004
      %v3037 = vunpack.c.l.b16 %v3005
      %v3038 = vunpack.c.l.b16 %v3006
      %v3039 = vunpack.c.l.b16 %v3007
      %v3040 = vunpack.c.l.b16 %v3008
      %v3041 = vunpack.c.l.b16 %v3009
      %v3042 = vunpack.c.l.b16 %v3010
      %v3043 = vunpack.c.l.b16 %v3011
      %v3044 = vunpack.c.l.b16 %v3012
      %v3045 = vunpack.c.l.b16 %v3013
      %v3046 = vpack.c.b16 %v3031, %v3030
      %v3047 = vpack.c.b16 %v3033, %v3032
      %v3048 = vpack.c.b16 %v3035, %v3034
      %v3049 = vpack.c.b16 %v3037, %v3036
      %v3050 = vpack.c.b16 %v3039, %v3038
      %v3051 = vpack.c.b16 %v3041, %v3040
      %v3052 = vpack.c.b16 %v3043, %v3042
      %v3053 = vpack.c.b16 %v3045, %v3044
      %3062 = vmatpush.bf16.msra.mxu0 %v3053
      %3063 = vmatpush.bf16.msra.mxu0 %v3052
      %3064 = vmatpush.bf16.msra.mxu0 %v3051
      %3065 = vmatpush.bf16.msra.mxu0 %v3050
      %3066 = vmatpush.bf16.msra.mxu0 %v3049
      %3067 = vmatpush.bf16.msra.mxu0 %v3048
      %3068 = vmatpush.bf16.msra.mxu0 %v3047
      %3069 = vmatpush.bf16.msra.mxu0 %v3046
      %3070 = vmatmul.bf16.gmra.mxu0 %v2905
      %v3071 = vpop.f32.mrf.mxu0
      %v3072 = vadd.f32 0.0, %v3071
      %v3073 = vpop.f32.mrf.mxu0
      %v3074 = vadd.f32 0.0, %v3073
      %3075 = vmatmul.bf16.gmra.mxu0 %v2906
      %v3076 = vpop.f32.mrf.mxu0
      %v3077 = vadd.f32 0.0, %v3076
      %v3078 = vpop.f32.mrf.mxu0
      %v3079 = vadd.f32 0.0, %v3078
      %3080 = vmatmul.bf16.gmra.mxu0 %v2907
      %v3081 = vpop.f32.mrf.mxu0
      %v3082 = vadd.f32 0.0, %v3081
      %v3083 = vpop.f32.mrf.mxu0
      %3084 = vdwg.mxu0
      %v3085 = vpack.c.bf16 %v3074, %v3072
      %v3086 = vpack.c.bf16 %v3079, %v3077
      %v3087 = vpack.c.bf16 %v3082, %v3082
      %s3088 = scalar_lea.vmem %s12, 4
      %v3089 = vld [vmem:[%s3088] sm:$0xf]
      %v3091 = vsel %vm1102, %v3085, 0
      %v3094 = vsel %vm1102, %v3086, 0
      %v3097 = vsel %vm1102, %v3087, 0
      %v3100 = vsel %vm1112, %v3089, 0
      %3102 = vmatpush.bf16.msra.mxu0 0
      %3103 = vmatpush.bf16.msra.mxu0 0
      %3104 = vmatpush.bf16.msra.mxu0 0
      %3105 = vmatpush.bf16.msra.mxu0 0
      %3106 = vmatpush.bf16.msra.mxu0 0
      %3107 = vmatpush.bf16.msra.mxu0 0
      %3108 = vmatpush.bf16.msra.mxu0 0
      %3109 = vmatpush.bf16.msra.mxu0 %v3100
      %3110 = vmatmul.bf16.gmra.mxu0 %v3091
      %v3111 = vpop.f32.mrf.mxu0
      %v3112 = vadd.f32 0.0, %v3111
      %v3113 = vpop.f32.mrf.mxu0
      %v3114 = vadd.f32 0.0, %v3113
      %3115 = vmatmul.bf16.gmra.mxu0 %v3094
      %v3116 = vpop.f32.mrf.mxu0
      %v3117 = vadd.f32 0.0, %v3116
      %v3118 = vpop.f32.mrf.mxu0
      %v3119 = vadd.f32 0.0, %v3118
      %3120 = vmatmul.bf16.gmra.mxu0 %v3097
      %v3121 = vpop.f32.mrf.mxu0
      %v3122 = vadd.f32 0.0, %v3121
      %v3123 = vpop.f32.mrf.mxu0
      %3124 = vdwg.mxu0
      %v3125 = vadd.f32 %v2984, %v3112
      %v3126 = vadd.f32 %v2986, %v3114
      %v3127 = vadd.f32 %v2989, %v3117
      %v3128 = vadd.f32 %v2991, %v3119
      %v3129 = vadd.f32 %v2994, %v3122
      %s3130 = scalar_lea.vmem %s8, 64
      %v3131 = vld [vmem:[%s3130] sm:$0xf]
      %v3132 = vld [vmem:[%s3130 + $0x4] sm:$0xf]
      %v3133 = vld [vmem:[%s3130 + $0x8] sm:$0xf]
      %v3134 = vld [vmem:[%s3130 + $0xc] sm:$0xf]
      %v3135 = vld [vmem:[%s3130 + $0x10] sm:$0xf]
      %v3136 = vld [vmem:[%s3130 + $0x14] sm:$0xf]
      %v3137 = vld [vmem:[%s3130 + $0x18] sm:$0xf]
      %v3138 = vld [vmem:[%s3130 + $0x1c] sm:$0xf]
      %v3139 = vld [vmem:[%s3130 + $0x20] sm:$0xf]
      %v3140 = vld [vmem:[%s3130 + $0x24] sm:$0xf]
      %v3141 = vld [vmem:[%s3130 + $0x28] sm:$0xf]
      %v3142 = vld [vmem:[%s3130 + $0x2c] sm:$0xf]
      %v3143 = vld [vmem:[%s3130 + $0x30] sm:$0xf]
      %v3144 = vld [vmem:[%s3130 + $0x34] sm:$0xf]
      %v3145 = vld [vmem:[%s3130 + $0x38] sm:$0xf]
      %v3146 = vld [vmem:[%s3130 + $0x3c] sm:$0xf]
      %v3147 = vperm.slane %v2787, 3
      %v3164 = vunpack.c.l.b16 %v3131
      %v3165 = vunpack.c.l.b16 %v3132
      %v3166 = vunpack.c.l.b16 %v3133
      %v3167 = vunpack.c.l.b16 %v3134
      %v3168 = vunpack.c.l.b16 %v3135
      %v3169 = vunpack.c.l.b16 %v3136
      %v3170 = vunpack.c.l.b16 %v3137
      %v3171 = vunpack.c.l.b16 %v3138
      %v3172 = vunpack.c.l.b16 %v3139
      %v3173 = vunpack.c.l.b16 %v3140
      %v3174 = vunpack.c.l.b16 %v3141
      %v3175 = vunpack.c.l.b16 %v3142
      %v3176 = vunpack.c.l.b16 %v3143
      %v3177 = vunpack.c.l.b16 %v3144
      %v3178 = vunpack.c.l.b16 %v3145
      %v3179 = vunpack.c.l.b16 %v3146
      %v3180 = vpack.c.b16 %v3165, %v3164
      %v3181 = vpack.c.b16 %v3167, %v3166
      %v3182 = vpack.c.b16 %v3169, %v3168
      %v3183 = vpack.c.b16 %v3171, %v3170
      %v3184 = vpack.c.b16 %v3173, %v3172
      %v3185 = vpack.c.b16 %v3175, %v3174
      %v3186 = vpack.c.b16 %v3177, %v3176
      %v3187 = vpack.c.b16 %v3179, %v3178
      %3196 = vmatpush.bf16.msra.mxu0 %v3187
      %3197 = vmatpush.bf16.msra.mxu0 %v3186
      %3198 = vmatpush.bf16.msra.mxu0 %v3185
      %3199 = vmatpush.bf16.msra.mxu0 %v3184
      %3200 = vmatpush.bf16.msra.mxu0 %v3183
      %3201 = vmatpush.bf16.msra.mxu0 %v3182
      %3202 = vmatpush.bf16.msra.mxu0 %v3181
      %3203 = vmatpush.bf16.msra.mxu0 %v3180
      %3204 = vmatmul.bf16.gmra.mxu0 %v2905
      %v3205 = vpop.f32.mrf.mxu0
      %v3206 = vadd.f32 %v3147, %v3205
      %v3207 = vpop.f32.mrf.mxu0
      %v3208 = vadd.f32 %v3147, %v3207
      %3209 = vmatmul.bf16.gmra.mxu0 %v2906
      %v3210 = vpop.f32.mrf.mxu0
      %v3211 = vadd.f32 %v3147, %v3210
      %v3212 = vpop.f32.mrf.mxu0
      %v3213 = vadd.f32 %v3147, %v3212
      %3214 = vmatmul.bf16.gmra.mxu0 %v2907
      %v3215 = vpop.f32.mrf.mxu0
      %v3216 = vadd.f32 %v3147, %v3215
      %v3217 = vpop.f32.mrf.mxu0
      %3218 = vdwg.mxu0
      %s3219 = scalar_lea.vmem %s9, 64
      %v3220 = vld [vmem:[%s3219] sm:$0xf]
      %v3221 = vld [vmem:[%s3219 + $0x4] sm:$0xf]
      %v3222 = vld [vmem:[%s3219 + $0x8] sm:$0xf]
      %v3223 = vld [vmem:[%s3219 + $0xc] sm:$0xf]
      %v3224 = vld [vmem:[%s3219 + $0x10] sm:$0xf]
      %v3225 = vld [vmem:[%s3219 + $0x14] sm:$0xf]
      %v3226 = vld [vmem:[%s3219 + $0x18] sm:$0xf]
      %v3227 = vld [vmem:[%s3219 + $0x1c] sm:$0xf]
      %v3228 = vld [vmem:[%s3219 + $0x20] sm:$0xf]
      %v3229 = vld [vmem:[%s3219 + $0x24] sm:$0xf]
      %v3230 = vld [vmem:[%s3219 + $0x28] sm:$0xf]
      %v3231 = vld [vmem:[%s3219 + $0x2c] sm:$0xf]
      %v3232 = vld [vmem:[%s3219 + $0x30] sm:$0xf]
      %v3233 = vld [vmem:[%s3219 + $0x34] sm:$0xf]
      %v3234 = vld [vmem:[%s3219 + $0x38] sm:$0xf]
      %v3235 = vld [vmem:[%s3219 + $0x3c] sm:$0xf]
      %v3236 = vperm.slane %v2787, 4
      %v3253 = vunpack.c.l.b16 %v3220
      %v3254 = vunpack.c.l.b16 %v3221
      %v3255 = vunpack.c.l.b16 %v3222
      %v3256 = vunpack.c.l.b16 %v3223
      %v3257 = vunpack.c.l.b16 %v3224
      %v3258 = vunpack.c.l.b16 %v3225
      %v3259 = vunpack.c.l.b16 %v3226
      %v3260 = vunpack.c.l.b16 %v3227
      %v3261 = vunpack.c.l.b16 %v3228
      %v3262 = vunpack.c.l.b16 %v3229
      %v3263 = vunpack.c.l.b16 %v3230
      %v3264 = vunpack.c.l.b16 %v3231
      %v3265 = vunpack.c.l.b16 %v3232
      %v3266 = vunpack.c.l.b16 %v3233
      %v3267 = vunpack.c.l.b16 %v3234
      %v3268 = vunpack.c.l.b16 %v3235
      %v3269 = vpack.c.b16 %v3254, %v3253
      %v3270 = vpack.c.b16 %v3256, %v3255
      %v3271 = vpack.c.b16 %v3258, %v3257
      %v3272 = vpack.c.b16 %v3260, %v3259
      %v3273 = vpack.c.b16 %v3262, %v3261
      %v3274 = vpack.c.b16 %v3264, %v3263
      %v3275 = vpack.c.b16 %v3266, %v3265
      %v3276 = vpack.c.b16 %v3268, %v3267
      %3285 = vmatpush.bf16.msra.mxu0 %v3276
      %3286 = vmatpush.bf16.msra.mxu0 %v3275
      %3287 = vmatpush.bf16.msra.mxu0 %v3274
      %3288 = vmatpush.bf16.msra.mxu0 %v3273
      %3289 = vmatpush.bf16.msra.mxu0 %v3272
      %3290 = vmatpush.bf16.msra.mxu0 %v3271
      %3291 = vmatpush.bf16.msra.mxu0 %v3270
      %3292 = vmatpush.bf16.msra.mxu0 %v3269
      %3293 = vmatmul.bf16.gmra.mxu0 %v2905
      %v3294 = vpop.f32.mrf.mxu0
      %v3295 = vadd.f32 %v3236, %v3294
      %v3296 = vpop.f32.mrf.mxu0
      %v3297 = vadd.f32 %v3236, %v3296
      %3298 = vmatmul.bf16.gmra.mxu0 %v2906
      %v3299 = vpop.f32.mrf.mxu0
      %v3300 = vadd.f32 %v3236, %v3299
      %v3301 = vpop.f32.mrf.mxu0
      %v3302 = vadd.f32 %v3236, %v3301
      %3303 = vmatmul.bf16.gmra.mxu0 %v2907
      %v3304 = vpop.f32.mrf.mxu0
      %v3305 = vadd.f32 %v3236, %v3304
      %v3306 = vpop.f32.mrf.mxu0
      %3307 = vdwg.mxu0
      %s3308 = scalar_lea.vmem %s13, 64
      %v3309 = vld [vmem:[%s3308] sm:$0xf]
      %v3310 = vld [vmem:[%s3308 + $0x4] sm:$0xf]
      %v3311 = vld [vmem:[%s3308 + $0x8] sm:$0xf]
      %v3312 = vld [vmem:[%s3308 + $0xc] sm:$0xf]
      %v3313 = vld [vmem:[%s3308 + $0x10] sm:$0xf]
      %v3314 = vld [vmem:[%s3308 + $0x14] sm:$0xf]
      %v3315 = vld [vmem:[%s3308 + $0x18] sm:$0xf]
      %v3316 = vld [vmem:[%s3308 + $0x1c] sm:$0xf]
      %v3317 = vld [vmem:[%s3308 + $0x20] sm:$0xf]
      %v3318 = vld [vmem:[%s3308 + $0x24] sm:$0xf]
      %v3319 = vld [vmem:[%s3308 + $0x28] sm:$0xf]
      %v3320 = vld [vmem:[%s3308 + $0x2c] sm:$0xf]
      %v3321 = vld [vmem:[%s3308 + $0x30] sm:$0xf]
      %v3322 = vld [vmem:[%s3308 + $0x34] sm:$0xf]
      %v3323 = vld [vmem:[%s3308 + $0x38] sm:$0xf]
      %v3324 = vld [vmem:[%s3308 + $0x3c] sm:$0xf]
      %v3341 = vunpack.c.l.b16 %v3309
      %v3342 = vunpack.c.l.b16 %v3310
      %v3343 = vunpack.c.l.b16 %v3311
      %v3344 = vunpack.c.l.b16 %v3312
      %v3345 = vunpack.c.l.b16 %v3313
      %v3346 = vunpack.c.l.b16 %v3314
      %v3347 = vunpack.c.l.b16 %v3315
      %v3348 = vunpack.c.l.b16 %v3316
      %v3349 = vunpack.c.l.b16 %v3317
      %v3350 = vunpack.c.l.b16 %v3318
      %v3351 = vunpack.c.l.b16 %v3319
      %v3352 = vunpack.c.l.b16 %v3320
      %v3353 = vunpack.c.l.b16 %v3321
      %v3354 = vunpack.c.l.b16 %v3322
      %v3355 = vunpack.c.l.b16 %v3323
      %v3356 = vunpack.c.l.b16 %v3324
      %v3357 = vpack.c.b16 %v3342, %v3341
      %v3358 = vpack.c.b16 %v3344, %v3343
      %v3359 = vpack.c.b16 %v3346, %v3345
      %v3360 = vpack.c.b16 %v3348, %v3347
      %v3361 = vpack.c.b16 %v3350, %v3349
      %v3362 = vpack.c.b16 %v3352, %v3351
      %v3363 = vpack.c.b16 %v3354, %v3353
      %v3364 = vpack.c.b16 %v3356, %v3355
      %3373 = vmatpush.bf16.msra.mxu0 %v3364
      %3374 = vmatpush.bf16.msra.mxu0 %v3363
      %3375 = vmatpush.bf16.msra.mxu0 %v3362
      %3376 = vmatpush.bf16.msra.mxu0 %v3361
      %3377 = vmatpush.bf16.msra.mxu0 %v3360
      %3378 = vmatpush.bf16.msra.mxu0 %v3359
      %3379 = vmatpush.bf16.msra.mxu0 %v3358
      %3380 = vmatpush.bf16.msra.mxu0 %v3357
      %3381 = vmatmul.bf16.gmra.mxu0 %v2905
      %v3382 = vpop.f32.mrf.mxu0
      %v3383 = vadd.f32 0.0, %v3382
      %v3384 = vpop.f32.mrf.mxu0
      %v3385 = vadd.f32 0.0, %v3384
      %3386 = vmatmul.bf16.gmra.mxu0 %v2906
      %v3387 = vpop.f32.mrf.mxu0
      %v3388 = vadd.f32 0.0, %v3387
      %v3389 = vpop.f32.mrf.mxu0
      %v3390 = vadd.f32 0.0, %v3389
      %3391 = vmatmul.bf16.gmra.mxu0 %v2907
      %v3392 = vpop.f32.mrf.mxu0
      %v3393 = vadd.f32 0.0, %v3392
      %v3394 = vpop.f32.mrf.mxu0
      %3395 = vdwg.mxu0
      %v3396 = vpack.c.bf16 %v3385, %v3383
      %v3397 = vpack.c.bf16 %v3390, %v3388
      %v3398 = vpack.c.bf16 %v3393, %v3393
      %s3399 = scalar_lea.vmem %s14, 4
      %v3400 = vld [vmem:[%s3399] sm:$0xf]
      %v3402 = vsel %vm1102, %v3396, 0
      %v3405 = vsel %vm1102, %v3397, 0
      %v3408 = vsel %vm1102, %v3398, 0
      %v3411 = vsel %vm1112, %v3400, 0
      %3413 = vmatpush.bf16.msra.mxu0 0
      %3414 = vmatpush.bf16.msra.mxu0 0
      %3415 = vmatpush.bf16.msra.mxu0 0
      %3416 = vmatpush.bf16.msra.mxu0 0
      %3417 = vmatpush.bf16.msra.mxu0 0
      %3418 = vmatpush.bf16.msra.mxu0 0
      %3419 = vmatpush.bf16.msra.mxu0 0
      %3420 = vmatpush.bf16.msra.mxu0 %v3411
      %3421 = vmatmul.bf16.gmra.mxu0 %v3402
      %v3422 = vpop.f32.mrf.mxu0
      %v3423 = vadd.f32 0.0, %v3422
      %v3424 = vpop.f32.mrf.mxu0
      %v3425 = vadd.f32 0.0, %v3424
      %3426 = vmatmul.bf16.gmra.mxu0 %v3405
      %v3427 = vpop.f32.mrf.mxu0
      %v3428 = vadd.f32 0.0, %v3427
      %v3429 = vpop.f32.mrf.mxu0
      %v3430 = vadd.f32 0.0, %v3429
      %3431 = vmatmul.bf16.gmra.mxu0 %v3408
      %v3432 = vpop.f32.mrf.mxu0
      %v3433 = vadd.f32 0.0, %v3432
      %v3434 = vpop.f32.mrf.mxu0
      %3435 = vdwg.mxu0
      %v3436 = vadd.f32 %v3295, %v3423
      %v3437 = vadd.f32 %v3297, %v3425
      %v3438 = vadd.f32 %v3300, %v3428
      %v3439 = vadd.f32 %v3302, %v3430
      %v3440 = vadd.f32 %v3305, %v3433
      %v3441 = vmul.f32 %v3125, 0.17677669
      %v3442 = vmul.f32 %v3126, 0.17677669
      %v3443 = vmul.f32 %v3127, 0.17677669
      %v3444 = vmul.f32 %v3128, 0.17677669
      %v3445 = vmul.f32 %v3129, 0.17677669
      %v3446 = vpack.c.bf16 %v3442, %v3441
      %v3447 = vpack.c.bf16 %v3444, %v3443
      %v3448 = vpack.c.bf16 %v3445, %v3445
      %v3449 = vpack.c.bf16 %v3208, %v3206
      %v3450 = vpack.c.bf16 %v3213, %v3211
      %v3451 = vpack.c.bf16 %v3216, %v3216
      %v3452 = vpack.c.bf16 %v3437, %v3436
      %v3453 = vpack.c.bf16 %v3439, %v3438
      %v3454 = vpack.c.bf16 %v3440, %v3440
      %v3456 = vsel %vm1465, %v3446, 0
      %v3459 = vsel %vm1465, %v3447, 0
      %v3462 = vsel %vm1465, %v3448, 0
      %v3465 = vsel %vm1465, %v3449, 0
      %v3468 = vsel %vm1465, %v3450, 0
      %v3471 = vsel %vm1465, %v3451, 0
      %3473 = vmatpush.bf16.xpose.msra.mxu0 0
      %3474 = vmatpush.bf16.xpose.msra.mxu0 0
      %3475 = vmatpush.bf16.xpose.msra.mxu0 0
      %3476 = vmatpush.bf16.xpose.msra.mxu0 0
      %3477 = vmatpush.bf16.xpose.msra.mxu0 0
      %3478 = vmatpush.bf16.xpose.msra.mxu0 %v3471
      %3479 = vmatpush.bf16.xpose.msra.mxu0 %v3468
      %3480 = vmatpush.bf16.xpose.msra.mxu0 %v3465
      %3481 = vmatmul.bf16.gmra.mxu0 %v3456
      %v3482 = vpop.f32.mrf.mxu0
      %v3483 = vadd.f32 %v790, %v3482
      %v3484 = vpop.f32.mrf.mxu0
      %v3485 = vadd.f32 %v791, %v3484
      %3486 = vmatmul.bf16.gmra.mxu0 %v3459
      %v3487 = vpop.f32.mrf.mxu0
      %v3488 = vadd.f32 %v792, %v3487
      %v3489 = vpop.f32.mrf.mxu0
      %v3490 = vadd.f32 %v793, %v3489
      %3491 = vmatmul.bf16.gmra.mxu0 %v3462
      %v3492 = vpop.f32.mrf.mxu0
      %v3493 = vadd.f32 %v794, %v3492
      %v3494 = vpop.f32.mrf.mxu0
      %3495 = vdwg.mxu0
      %v3496 = vsel %vm1507, %v3483, -inf
      %3497 = vmax.xlane.f32.xlu0 %v3496
      %v3498 = vpop.xlane.xlu0 %3497
      %v3499 = vsel %vm1507, %v3485, -inf
      %3500 = vmax.xlane.f32.xlu0 %v3499
      %v3501 = vpop.xlane.xlu0 %3500
      %v3502 = vsel %vm1507, %v3488, -inf
      %3503 = vmax.xlane.f32.xlu0 %v3502
      %v3504 = vpop.xlane.xlu0 %3503
      %v3505 = vsel %vm1507, %v3490, -inf
      %3506 = vmax.xlane.f32.xlu0 %v3505
      %v3507 = vpop.xlane.xlu0 %3506
      %v3508 = vsel %vm1520, %v3493, -inf
      %3509 = vmax.xlane.f32.xlu0 %v3508
      %v3510 = vpop.xlane.xlu0 %3509
      %v3511 = vsub.f32 %v3483, %v3498
      %v3512 = vsub.f32 %v3485, %v3501
      %v3513 = vsub.f32 %v3488, %v3504
      %v3514 = vsub.f32 %v3490, %v3507
      %v3515 = vsub.f32 %v3493, %v3510
      %v3516 = vmul.f32 %v3511, 1.442695
      %v3517 = vpow.pop %v3516
      %v3518 = vmul.f32 %v3512, 1.442695
      %v3519 = vpow.pop %v3518
      %v3520 = vmul.f32 %v3513, 1.442695
      %v3521 = vpow.pop %v3520
      %v3522 = vmul.f32 %v3514, 1.442695
      %v3523 = vpow.pop %v3522
      %v3524 = vmul.f32 %v3515, 1.442695
      %v3525 = vpow.pop %v3524
      %v3526 = vsel %vm1507, %v3517, 0.0
      %3527 = vadd.xlane.f32.xlu0 %v3526
      %v3528 = vpop.xlane.xlu0 %3527
      %v3529 = vsel %vm1507, %v3519, 0.0
      %3530 = vadd.xlane.f32.xlu0 %v3529
      %v3531 = vpop.xlane.xlu0 %3530
      %v3532 = vsel %vm1507, %v3521, 0.0
      %3533 = vadd.xlane.f32.xlu0 %v3532
      %v3534 = vpop.xlane.xlu0 %3533
      %v3535 = vsel %vm1507, %v3523, 0.0
      %3536 = vadd.xlane.f32.xlu0 %v3535
      %v3537 = vpop.xlane.xlu0 %3536
      %v3538 = vsel %vm1520, %v3525, 0.0
      %3539 = vadd.xlane.f32.xlu0 %v3538
      %v3540 = vpop.xlane.xlu0 %3539
      %v3541 = vrcp.pop %v3528
      %v3542 = vrcp.pop %v3531
      %v3543 = vrcp.pop %v3534
      %v3544 = vrcp.pop %v3537
      %v3545 = vrcp.pop %v3540
      %v3546 = vmul.f32 %v3517, %v3541
      %v3547 = vmul.f32 %v3519, %v3542
      %v3548 = vmul.f32 %v3521, %v3543
      %v3549 = vmul.f32 %v3523, %v3544
      %v3550 = vmul.f32 %v3525, %v3545
      %v3551 = vpack.c.bf16 %v3547, %v3546
      %v3552 = vpack.c.bf16 %v3549, %v3548
      %v3553 = vpack.c.bf16 %v3550, %v3550
      %v3555 = vsel %vm1507, %v3551, 0
      %v3558 = vsel %vm1507, %v3552, 0
      %v3561 = vsel %vm1507, %v3553, 0
      %v3564 = vsel %vm1576, %v3454, 0
      %3566 = vmatpush.bf16.msra.mxu0 0
      %3567 = vmatpush.bf16.msra.mxu0 0
      %3568 = vmatpush.bf16.msra.mxu0 0
      %3569 = vmatpush.bf16.msra.mxu0 0
      %3570 = vmatpush.bf16.msra.mxu0 0
      %3571 = vmatpush.bf16.msra.mxu0 %v3564
      %3572 = vmatpush.bf16.msra.mxu0 %v3453
      %3573 = vmatpush.bf16.msra.mxu0 %v3452
      %3574 = vmatmul.bf16.gmra.mxu0 %v3555
      %v3575 = vpop.f32.mrf.mxu0
      %v3576 = vadd.f32 0.0, %v3575
      %v3577 = vpop.f32.mrf.mxu0
      %v3578 = vadd.f32 0.0, %v3577
      %3579 = vmatmul.bf16.gmra.mxu0 %v3558
      %v3580 = vpop.f32.mrf.mxu0
      %v3581 = vadd.f32 0.0, %v3580
      %v3582 = vpop.f32.mrf.mxu0
      %v3583 = vadd.f32 0.0, %v3582
      %3584 = vmatmul.bf16.gmra.mxu0 %v3561
      %v3585 = vpop.f32.mrf.mxu0
      %v3586 = vadd.f32 0.0, %v3585
      %v3587 = vpop.f32.mrf.mxu0
      %3588 = vdwg.mxu0
      %3592 = vrot.lane.b32.xlu0 %v3446, 96
      %v3593 = vpop.permute.xlu0 %3592
      %3594 = vrot.lane.b32.xlu0 %v3447, 96
      %v3595 = vpop.permute.xlu0 %3594
      %3596 = vrot.lane.b32.xlu0 %v3448, 96
      %v3597 = vpop.permute.xlu0 %3596
      %3601 = vrot.lane.b32.xlu0 %v3449, 96
      %v3602 = vpop.permute.xlu0 %3601
      %3603 = vrot.lane.b32.xlu0 %v3450, 96
      %v3604 = vpop.permute.xlu0 %3603
      %3605 = vrot.lane.b32.xlu0 %v3451, 96
      %v3606 = vpop.permute.xlu0 %3605
      %v3608 = vsel %vm1465, %v3593, 0
      %v3611 = vsel %vm1465, %v3595, 0
      %v3614 = vsel %vm1465, %v3597, 0
      %v3617 = vsel %vm1465, %v3602, 0
      %v3620 = vsel %vm1465, %v3604, 0
      %v3623 = vsel %vm1465, %v3606, 0
      %3625 = vmatpush.bf16.xpose.msra.mxu0 0
      %3626 = vmatpush.bf16.xpose.msra.mxu0 0
      %3627 = vmatpush.bf16.xpose.msra.mxu0 0
      %3628 = vmatpush.bf16.xpose.msra.mxu0 0
      %3629 = vmatpush.bf16.xpose.msra.mxu0 0
      %3630 = vmatpush.bf16.xpose.msra.mxu0 %v3623
      %3631 = vmatpush.bf16.xpose.msra.mxu0 %v3620
      %3632 = vmatpush.bf16.xpose.msra.mxu0 %v3617
      %3633 = vmatmul.bf16.gmra.mxu0 %v3608
      %v3634 = vpop.f32.mrf.mxu0
      %v3635 = vadd.f32 %v790, %v3634
      %v3636 = vpop.f32.mrf.mxu0
      %v3637 = vadd.f32 %v791, %v3636
      %3638 = vmatmul.bf16.gmra.mxu0 %v3611
      %v3639 = vpop.f32.mrf.mxu0
      %v3640 = vadd.f32 %v792, %v3639
      %v3641 = vpop.f32.mrf.mxu0
      %v3642 = vadd.f32 %v793, %v3641
      %3643 = vmatmul.bf16.gmra.mxu0 %v3614
      %v3644 = vpop.f32.mrf.mxu0
      %v3645 = vadd.f32 %v794, %v3644
      %v3646 = vpop.f32.mrf.mxu0
      %3647 = vdwg.mxu0
      %v3648 = vsel %vm1507, %v3635, -inf
      %3649 = vmax.xlane.f32.xlu0 %v3648
      %v3650 = vpop.xlane.xlu0 %3649
      %v3651 = vsel %vm1507, %v3637, -inf
      %3652 = vmax.xlane.f32.xlu0 %v3651
      %v3653 = vpop.xlane.xlu0 %3652
      %v3654 = vsel %vm1507, %v3640, -inf
      %3655 = vmax.xlane.f32.xlu0 %v3654
      %v3656 = vpop.xlane.xlu0 %3655
      %v3657 = vsel %vm1507, %v3642, -inf
      %3658 = vmax.xlane.f32.xlu0 %v3657
      %v3659 = vpop.xlane.xlu0 %3658
      %v3660 = vsel %vm1520, %v3645, -inf
      %3661 = vmax.xlane.f32.xlu0 %v3660
      %v3662 = vpop.xlane.xlu0 %3661
      %v3663 = vsub.f32 %v3635, %v3650
      %v3664 = vsub.f32 %v3637, %v3653
      %v3665 = vsub.f32 %v3640, %v3656
      %v3666 = vsub.f32 %v3642, %v3659
      %v3667 = vsub.f32 %v3645, %v3662
      %v3668 = vmul.f32 %v3663, 1.442695
      %v3669 = vpow.pop %v3668
      %v3670 = vmul.f32 %v3664, 1.442695
      %v3671 = vpow.pop %v3670
      %v3672 = vmul.f32 %v3665, 1.442695
      %v3673 = vpow.pop %v3672
      %v3674 = vmul.f32 %v3666, 1.442695
      %v3675 = vpow.pop %v3674
      %v3676 = vmul.f32 %v3667, 1.442695
      %v3677 = vpow.pop %v3676
      %v3678 = vsel %vm1507, %v3669, 0.0
      %3679 = vadd.xlane.f32.xlu0 %v3678
      %v3680 = vpop.xlane.xlu0 %3679
      %v3681 = vsel %vm1507, %v3671, 0.0
      %3682 = vadd.xlane.f32.xlu0 %v3681
      %v3683 = vpop.xlane.xlu0 %3682
      %v3684 = vsel %vm1507, %v3673, 0.0
      %3685 = vadd.xlane.f32.xlu0 %v3684
      %v3686 = vpop.xlane.xlu0 %3685
      %v3687 = vsel %vm1507, %v3675, 0.0
      %3688 = vadd.xlane.f32.xlu0 %v3687
      %v3689 = vpop.xlane.xlu0 %3688
      %v3690 = vsel %vm1520, %v3677, 0.0
      %3691 = vadd.xlane.f32.xlu0 %v3690
      %v3692 = vpop.xlane.xlu0 %3691
      %v3693 = vrcp.pop %v3680
      %v3694 = vrcp.pop %v3683
      %v3695 = vrcp.pop %v3686
      %v3696 = vrcp.pop %v3689
      %v3697 = vrcp.pop %v3692
      %v3698 = vmul.f32 %v3669, %v3693
      %v3699 = vmul.f32 %v3671, %v3694
      %v3700 = vmul.f32 %v3673, %v3695
      %v3701 = vmul.f32 %v3675, %v3696
      %v3702 = vmul.f32 %v3677, %v3697
      %v3703 = vpack.c.bf16 %v3699, %v3698
      %v3704 = vpack.c.bf16 %v3701, %v3700
      %v3705 = vpack.c.bf16 %v3702, %v3702
      %3709 = vrot.lane.b32.xlu0 %v3452, 96
      %v3710 = vpop.permute.xlu0 %3709
      %3711 = vrot.lane.b32.xlu0 %v3453, 96
      %v3712 = vpop.permute.xlu0 %3711
      %3713 = vrot.lane.b32.xlu0 %v3454, 96
      %v3714 = vpop.permute.xlu0 %3713
      %v3718 = vsel %vm1507, %v3703, 0
      %v3721 = vsel %vm1507, %v3704, 0
      %v3724 = vsel %vm1507, %v3705, 0
      %v3727 = vsel %vm1576, %v3714, 0
      %3729 = vmatpush.bf16.msra.mxu0 0
      %3730 = vmatpush.bf16.msra.mxu0 0
      %3731 = vmatpush.bf16.msra.mxu0 0
      %3732 = vmatpush.bf16.msra.mxu0 0
      %3733 = vmatpush.bf16.msra.mxu0 0
      %3734 = vmatpush.bf16.msra.mxu0 %v3727
      %3735 = vmatpush.bf16.msra.mxu0 %v3712
      %3736 = vmatpush.bf16.msra.mxu0 %v3710
      %3737 = vmatmul.bf16.gmra.mxu0 %v3718
      %v3738 = vpop.f32.mrf.mxu0
      %v3739 = vadd.f32 0.0, %v3738
      %v3740 = vpop.f32.mrf.mxu0
      %v3741 = vadd.f32 0.0, %v3740
      %3742 = vmatmul.bf16.gmra.mxu0 %v3721
      %v3743 = vpop.f32.mrf.mxu0
      %v3744 = vadd.f32 0.0, %v3743
      %v3745 = vpop.f32.mrf.mxu0
      %v3746 = vadd.f32 0.0, %v3745
      %3747 = vmatmul.bf16.gmra.mxu0 %v3724
      %v3748 = vpop.f32.mrf.mxu0
      %v3749 = vadd.f32 0.0, %v3748
      %v3750 = vpop.f32.mrf.mxu0
      %3751 = vdwg.mxu0
      %3752 = vrot.lane.b32.xlu0 %v3446, 64
      %v3753 = vpop.permute.xlu0 %3752
      %3754 = vrot.lane.b32.xlu0 %v3447, 64
      %v3755 = vpop.permute.xlu0 %3754
      %3756 = vrot.lane.b32.xlu0 %v3448, 64
      %v3757 = vpop.permute.xlu0 %3756
      %3758 = vrot.lane.b32.xlu0 %v3449, 64
      %v3759 = vpop.permute.xlu0 %3758
      %3760 = vrot.lane.b32.xlu0 %v3450, 64
      %v3761 = vpop.permute.xlu0 %3760
      %3762 = vrot.lane.b32.xlu0 %v3451, 64
      %v3763 = vpop.permute.xlu0 %3762
      %v3765 = vsel %vm1465, %v3753, 0
      %v3768 = vsel %vm1465, %v3755, 0
      %v3771 = vsel %vm1465, %v3757, 0
      %v3774 = vsel %vm1465, %v3759, 0
      %v3777 = vsel %vm1465, %v3761, 0
      %v3780 = vsel %vm1465, %v3763, 0
      %3782 = vmatpush.bf16.xpose.msra.mxu0 0
      %3783 = vmatpush.bf16.xpose.msra.mxu0 0
      %3784 = vmatpush.bf16.xpose.msra.mxu0 0
      %3785 = vmatpush.bf16.xpose.msra.mxu0 0
      %3786 = vmatpush.bf16.xpose.msra.mxu0 0
      %3787 = vmatpush.bf16.xpose.msra.mxu0 %v3780
      %3788 = vmatpush.bf16.xpose.msra.mxu0 %v3777
      %3789 = vmatpush.bf16.xpose.msra.mxu0 %v3774
      %3790 = vmatmul.bf16.gmra.mxu0 %v3765
      %v3791 = vpop.f32.mrf.mxu0
      %v3792 = vadd.f32 %v790, %v3791
      %v3793 = vpop.f32.mrf.mxu0
      %v3794 = vadd.f32 %v791, %v3793
      %3795 = vmatmul.bf16.gmra.mxu0 %v3768
      %v3796 = vpop.f32.mrf.mxu0
      %v3797 = vadd.f32 %v792, %v3796
      %v3798 = vpop.f32.mrf.mxu0
      %v3799 = vadd.f32 %v793, %v3798
      %3800 = vmatmul.bf16.gmra.mxu0 %v3771
      %v3801 = vpop.f32.mrf.mxu0
      %v3802 = vadd.f32 %v794, %v3801
      %v3803 = vpop.f32.mrf.mxu0
      %3804 = vdwg.mxu0
      %v3805 = vsel %vm1507, %v3792, -inf
      %3806 = vmax.xlane.f32.xlu0 %v3805
      %v3807 = vpop.xlane.xlu0 %3806
      %v3808 = vsel %vm1507, %v3794, -inf
      %3809 = vmax.xlane.f32.xlu0 %v3808
      %v3810 = vpop.xlane.xlu0 %3809
      %v3811 = vsel %vm1507, %v3797, -inf
      %3812 = vmax.xlane.f32.xlu0 %v3811
      %v3813 = vpop.xlane.xlu0 %3812
      %v3814 = vsel %vm1507, %v3799, -inf
      %3815 = vmax.xlane.f32.xlu0 %v3814
      %v3816 = vpop.xlane.xlu0 %3815
      %v3817 = vsel %vm1520, %v3802, -inf
      %3818 = vmax.xlane.f32.xlu0 %v3817
      %v3819 = vpop.xlane.xlu0 %3818
      %v3820 = vsub.f32 %v3792, %v3807
      %v3821 = vsub.f32 %v3794, %v3810
      %v3822 = vsub.f32 %v3797, %v3813
      %v3823 = vsub.f32 %v3799, %v3816
      %v3824 = vsub.f32 %v3802, %v3819
      %v3825 = vmul.f32 %v3820, 1.442695
      %v3826 = vpow.pop %v3825
      %v3827 = vmul.f32 %v3821, 1.442695
      %v3828 = vpow.pop %v3827
      %v3829 = vmul.f32 %v3822, 1.442695
      %v3830 = vpow.pop %v3829
      %v3831 = vmul.f32 %v3823, 1.442695
      %v3832 = vpow.pop %v3831
      %v3833 = vmul.f32 %v3824, 1.442695
      %v3834 = vpow.pop %v3833
      %v3835 = vsel %vm1507, %v3826, 0.0
      %3836 = vadd.xlane.f32.xlu0 %v3835
      %v3837 = vpop.xlane.xlu0 %3836
      %v3838 = vsel %vm1507, %v3828, 0.0
      %3839 = vadd.xlane.f32.xlu0 %v3838
      %v3840 = vpop.xlane.xlu0 %3839
      %v3841 = vsel %vm1507, %v3830, 0.0
      %3842 = vadd.xlane.f32.xlu0 %v3841
      %v3843 = vpop.xlane.xlu0 %3842
      %v3844 = vsel %vm1507, %v3832, 0.0
      %3845 = vadd.xlane.f32.xlu0 %v3844
      %v3846 = vpop.xlane.xlu0 %3845
      %v3847 = vsel %vm1520, %v3834, 0.0
      %3848 = vadd.xlane.f32.xlu0 %v3847
      %v3849 = vpop.xlane.xlu0 %3848
      %v3850 = vrcp.pop %v3837
      %v3851 = vrcp.pop %v3840
      %v3852 = vrcp.pop %v3843
      %v3853 = vrcp.pop %v3846
      %v3854 = vrcp.pop %v3849
      %v3855 = vmul.f32 %v3826, %v3850
      %v3856 = vmul.f32 %v3828, %v3851
      %v3857 = vmul.f32 %v3830, %v3852
      %v3858 = vmul.f32 %v3832, %v3853
      %v3859 = vmul.f32 %v3834, %v3854
      %v3860 = vpack.c.bf16 %v3856, %v3855
      %v3861 = vpack.c.bf16 %v3858, %v3857
      %v3862 = vpack.c.bf16 %v3859, %v3859
      %3863 = vrot.lane.b32.xlu0 %v3452, 64
      %v3864 = vpop.permute.xlu0 %3863
      %3865 = vrot.lane.b32.xlu0 %v3453, 64
      %v3866 = vpop.permute.xlu0 %3865
      %3867 = vrot.lane.b32.xlu0 %v3454, 64
      %v3868 = vpop.permute.xlu0 %3867
      %v3872 = vsel %vm1507, %v3860, 0
      %v3875 = vsel %vm1507, %v3861, 0
      %v3878 = vsel %vm1507, %v3862, 0
      %v3881 = vsel %vm1576, %v3868, 0
      %3883 = vmatpush.bf16.msra.mxu0 0
      %3884 = vmatpush.bf16.msra.mxu0 0
      %3885 = vmatpush.bf16.msra.mxu0 0
      %3886 = vmatpush.bf16.msra.mxu0 0
      %3887 = vmatpush.bf16.msra.mxu0 0
      %3888 = vmatpush.bf16.msra.mxu0 %v3881
      %3889 = vmatpush.bf16.msra.mxu0 %v3866
      %3890 = vmatpush.bf16.msra.mxu0 %v3864
      %3891 = vmatmul.bf16.gmra.mxu0 %v3872
      %v3892 = vpop.f32.mrf.mxu0
      %v3893 = vadd.f32 0.0, %v3892
      %v3894 = vpop.f32.mrf.mxu0
      %v3895 = vadd.f32 0.0, %v3894
      %3896 = vmatmul.bf16.gmra.mxu0 %v3875
      %v3897 = vpop.f32.mrf.mxu0
      %v3898 = vadd.f32 0.0, %v3897
      %v3899 = vpop.f32.mrf.mxu0
      %v3900 = vadd.f32 0.0, %v3899
      %3901 = vmatmul.bf16.gmra.mxu0 %v3878
      %v3902 = vpop.f32.mrf.mxu0
      %v3903 = vadd.f32 0.0, %v3902
      %v3904 = vpop.f32.mrf.mxu0
      %3905 = vdwg.mxu0
      %3906 = vrot.lane.b32.xlu0 %v3446, 32
      %v3907 = vpop.permute.xlu0 %3906
      %3908 = vrot.lane.b32.xlu0 %v3447, 32
      %v3909 = vpop.permute.xlu0 %3908
      %3910 = vrot.lane.b32.xlu0 %v3448, 32
      %v3911 = vpop.permute.xlu0 %3910
      %3912 = vrot.lane.b32.xlu0 %v3449, 32
      %v3913 = vpop.permute.xlu0 %3912
      %3914 = vrot.lane.b32.xlu0 %v3450, 32
      %v3915 = vpop.permute.xlu0 %3914
      %3916 = vrot.lane.b32.xlu0 %v3451, 32
      %v3917 = vpop.permute.xlu0 %3916
      %v3919 = vsel %vm1465, %v3907, 0
      %v3922 = vsel %vm1465, %v3909, 0
      %v3925 = vsel %vm1465, %v3911, 0
      %v3928 = vsel %vm1465, %v3913, 0
      %v3931 = vsel %vm1465, %v3915, 0
      %v3934 = vsel %vm1465, %v3917, 0
      %3936 = vmatpush.bf16.xpose.msra.mxu0 0
      %3937 = vmatpush.bf16.xpose.msra.mxu0 0
      %3938 = vmatpush.bf16.xpose.msra.mxu0 0
      %3939 = vmatpush.bf16.xpose.msra.mxu0 0
      %3940 = vmatpush.bf16.xpose.msra.mxu0 0
      %3941 = vmatpush.bf16.xpose.msra.mxu0 %v3934
      %3942 = vmatpush.bf16.xpose.msra.mxu0 %v3931
      %3943 = vmatpush.bf16.xpose.msra.mxu0 %v3928
      %3944 = vmatmul.bf16.gmra.mxu0 %v3919
      %v3945 = vpop.f32.mrf.mxu0
      %v3946 = vadd.f32 %v790, %v3945
      %v3947 = vpop.f32.mrf.mxu0
      %v3948 = vadd.f32 %v791, %v3947
      %3949 = vmatmul.bf16.gmra.mxu0 %v3922
      %v3950 = vpop.f32.mrf.mxu0
      %v3951 = vadd.f32 %v792, %v3950
      %v3952 = vpop.f32.mrf.mxu0
      %v3953 = vadd.f32 %v793, %v3952
      %3954 = vmatmul.bf16.gmra.mxu0 %v3925
      %v3955 = vpop.f32.mrf.mxu0
      %v3956 = vadd.f32 %v794, %v3955
      %v3957 = vpop.f32.mrf.mxu0
      %3958 = vdwg.mxu0
      %v3959 = vsel %vm1507, %v3946, -inf
      %3960 = vmax.xlane.f32.xlu0 %v3959
      %v3961 = vpop.xlane.xlu0 %3960
      %v3962 = vsel %vm1507, %v3948, -inf
      %3963 = vmax.xlane.f32.xlu0 %v3962
      %v3964 = vpop.xlane.xlu0 %3963
      %v3965 = vsel %vm1507, %v3951, -inf
      %3966 = vmax.xlane.f32.xlu0 %v3965
      %v3967 = vpop.xlane.xlu0 %3966
      %v3968 = vsel %vm1507, %v3953, -inf
      %3969 = vmax.xlane.f32.xlu0 %v3968
      %v3970 = vpop.xlane.xlu0 %3969
      %v3971 = vsel %vm1520, %v3956, -inf
      %3972 = vmax.xlane.f32.xlu0 %v3971
      %v3973 = vpop.xlane.xlu0 %3972
      %v3974 = vsub.f32 %v3946, %v3961
      %v3975 = vsub.f32 %v3948, %v3964
      %v3976 = vsub.f32 %v3951, %v3967
      %v3977 = vsub.f32 %v3953, %v3970
      %v3978 = vsub.f32 %v3956, %v3973
      %v3979 = vmul.f32 %v3974, 1.442695
      %v3980 = vpow.pop %v3979
      %v3981 = vmul.f32 %v3975, 1.442695
      %v3982 = vpow.pop %v3981
      %v3983 = vmul.f32 %v3976, 1.442695
      %v3984 = vpow.pop %v3983
      %v3985 = vmul.f32 %v3977, 1.442695
      %v3986 = vpow.pop %v3985
      %v3987 = vmul.f32 %v3978, 1.442695
      %v3988 = vpow.pop %v3987
      %v3989 = vsel %vm1507, %v3980, 0.0
      %3990 = vadd.xlane.f32.xlu0 %v3989
      %v3991 = vpop.xlane.xlu0 %3990
      %v3992 = vsel %vm1507, %v3982, 0.0
      %3993 = vadd.xlane.f32.xlu0 %v3992
      %v3994 = vpop.xlane.xlu0 %3993
      %v3995 = vsel %vm1507, %v3984, 0.0
      %3996 = vadd.xlane.f32.xlu0 %v3995
      %v3997 = vpop.xlane.xlu0 %3996
      %v3998 = vsel %vm1507, %v3986, 0.0
      %3999 = vadd.xlane.f32.xlu0 %v3998
      %v4000 = vpop.xlane.xlu0 %3999
      %v4001 = vsel %vm1520, %v3988, 0.0
      %4002 = vadd.xlane.f32.xlu0 %v4001
      %v4003 = vpop.xlane.xlu0 %4002
      %v4004 = vrcp.pop %v3991
      %v4005 = vrcp.pop %v3994
      %v4006 = vrcp.pop %v3997
      %v4007 = vrcp.pop %v4000
      %v4008 = vrcp.pop %v4003
      %v4009 = vmul.f32 %v3980, %v4004
      %v4010 = vmul.f32 %v3982, %v4005
      %v4011 = vmul.f32 %v3984, %v4006
      %v4012 = vmul.f32 %v3986, %v4007
      %v4013 = vmul.f32 %v3988, %v4008
      %v4014 = vpack.c.bf16 %v4010, %v4009
      %v4015 = vpack.c.bf16 %v4012, %v4011
      %v4016 = vpack.c.bf16 %v4013, %v4013
      %4017 = vrot.lane.b32.xlu0 %v3452, 32
      %v4018 = vpop.permute.xlu0 %4017
      %4019 = vrot.lane.b32.xlu0 %v3453, 32
      %v4020 = vpop.permute.xlu0 %4019
      %4021 = vrot.lane.b32.xlu0 %v3454, 32
      %v4022 = vpop.permute.xlu0 %4021
      %v4026 = vsel %vm1507, %v4014, 0
      %v4029 = vsel %vm1507, %v4015, 0
      %v4032 = vsel %vm1507, %v4016, 0
      %v4035 = vsel %vm1576, %v4022, 0
      %4037 = vmatpush.bf16.msra.mxu0 0
      %4038 = vmatpush.bf16.msra.mxu0 0
      %4039 = vmatpush.bf16.msra.mxu0 0
      %4040 = vmatpush.bf16.msra.mxu0 0
      %4041 = vmatpush.bf16.msra.mxu0 0
      %4042 = vmatpush.bf16.msra.mxu0 %v4035
      %4043 = vmatpush.bf16.msra.mxu0 %v4020
      %4044 = vmatpush.bf16.msra.mxu0 %v4018
      %4045 = vmatmul.bf16.gmra.mxu0 %v4026
      %v4046 = vpop.f32.mrf.mxu0
      %v4047 = vadd.f32 0.0, %v4046
      %v4048 = vpop.f32.mrf.mxu0
      %v4049 = vadd.f32 0.0, %v4048
      %4050 = vmatmul.bf16.gmra.mxu0 %v4029
      %v4051 = vpop.f32.mrf.mxu0
      %v4052 = vadd.f32 0.0, %v4051
      %v4053 = vpop.f32.mrf.mxu0
      %v4054 = vadd.f32 0.0, %v4053
      %4055 = vmatmul.bf16.gmra.mxu0 %v4032
      %v4056 = vpop.f32.mrf.mxu0
      %v4057 = vadd.f32 0.0, %v4056
      %v4058 = vpop.f32.mrf.mxu0
      %4059 = vdwg.mxu0
      %4065 = vrot.lane.b32.xlu0 %v3739, 32
      %v4066 = vpop.permute.xlu0 %4065
      %4067 = vrot.lane.b32.xlu0 %v3741, 32
      %v4068 = vpop.permute.xlu0 %4067
      %4069 = vrot.lane.b32.xlu0 %v3744, 32
      %v4070 = vpop.permute.xlu0 %4069
      %4071 = vrot.lane.b32.xlu0 %v3746, 32
      %v4072 = vpop.permute.xlu0 %4071
      %4073 = vrot.lane.b32.xlu0 %v3749, 32
      %v4074 = vpop.permute.xlu0 %4073
      %4085 = vrot.lane.b32.xlu0 %v3893, 64
      %v4086 = vpop.permute.xlu0 %4085
      %4087 = vrot.lane.b32.xlu0 %v3895, 64
      %v4088 = vpop.permute.xlu0 %4087
      %4089 = vrot.lane.b32.xlu0 %v3898, 64
      %v4090 = vpop.permute.xlu0 %4089
      %4091 = vrot.lane.b32.xlu0 %v3900, 64
      %v4092 = vpop.permute.xlu0 %4091
      %4093 = vrot.lane.b32.xlu0 %v3903, 64
      %v4094 = vpop.permute.xlu0 %4093
      %4105 = vrot.lane.b32.xlu0 %v4047, 96
      %v4106 = vpop.permute.xlu0 %4105
      %4107 = vrot.lane.b32.xlu0 %v4049, 96
      %v4108 = vpop.permute.xlu0 %4107
      %4109 = vrot.lane.b32.xlu0 %v4052, 96
      %v4110 = vpop.permute.xlu0 %4109
      %4111 = vrot.lane.b32.xlu0 %v4054, 96
      %v4112 = vpop.permute.xlu0 %4111
      %4113 = vrot.lane.b32.xlu0 %v4057, 96
      %v4114 = vpop.permute.xlu0 %4113
      %v4120 = vsel %vm1465, %v3576, %v4066
      %v4121 = vsel %vm1465, %v3578, %v4068
      %v4122 = vsel %vm1465, %v3581, %v4070
      %v4123 = vsel %vm1465, %v3583, %v4072
      %v4124 = vsel %vm1465, %v3586, %v4074
      %v4125 = vsel %vm734, %v4120, %v4086
      %v4126 = vsel %vm734, %v4121, %v4088
      %v4127 = vsel %vm734, %v4122, %v4090
      %v4128 = vsel %vm734, %v4123, %v4092
      %v4129 = vsel %vm734, %v4124, %v4094
      %v4130 = vsel %vm2144, %v4125, %v4106
      %v4131 = vsel %vm2144, %v4126, %v4108
      %v4132 = vsel %vm2144, %v4127, %v4110
      %v4133 = vsel %vm2144, %v4128, %v4112
      %v4134 = vsel %vm2144, %v4129, %v4114
      %v4135 = vpack.c.bf16 %v4131, %v4130
      %v4136 = vpack.c.bf16 %v4133, %v4132
      %v4137 = vpack.c.bf16 %v4134, %v4134
      %s4138 = scalar_lea.vmem %s10, 64
      %v4139 = vld [vmem:[%s4138] sm:$0xf]
      %v4140 = vld [vmem:[%s4138 + $0x4] sm:$0xf]
      %v4141 = vld [vmem:[%s4138 + $0x8] sm:$0xf]
      %v4142 = vld [vmem:[%s4138 + $0xc] sm:$0xf]
      %v4143 = vld [vmem:[%s4138 + $0x10] sm:$0xf]
      %v4144 = vld [vmem:[%s4138 + $0x14] sm:$0xf]
      %v4145 = vld [vmem:[%s4138 + $0x18] sm:$0xf]
      %v4146 = vld [vmem:[%s4138 + $0x1c] sm:$0xf]
      %v4147 = vld [vmem:[%s4138 + $0x20] sm:$0xf]
      %v4148 = vld [vmem:[%s4138 + $0x24] sm:$0xf]
      %v4149 = vld [vmem:[%s4138 + $0x28] sm:$0xf]
      %v4150 = vld [vmem:[%s4138 + $0x2c] sm:$0xf]
      %v4151 = vld [vmem:[%s4138 + $0x30] sm:$0xf]
      %v4152 = vld [vmem:[%s4138 + $0x34] sm:$0xf]
      %v4153 = vld [vmem:[%s4138 + $0x38] sm:$0xf]
      %v4154 = vld [vmem:[%s4138 + $0x3c] sm:$0xf]
      %v4155 = vperm.slane %v2787, 5
      %v4172 = vunpack.c.l.b16 %v4139
      %v4173 = vunpack.c.l.b16 %v4140
      %v4174 = vunpack.c.l.b16 %v4141
      %v4175 = vunpack.c.l.b16 %v4142
      %v4176 = vunpack.c.l.b16 %v4143
      %v4177 = vunpack.c.l.b16 %v4144
      %v4178 = vunpack.c.l.b16 %v4145
      %v4179 = vunpack.c.l.b16 %v4146
      %v4180 = vunpack.c.l.b16 %v4147
      %v4181 = vunpack.c.l.b16 %v4148
      %v4182 = vunpack.c.l.b16 %v4149
      %v4183 = vunpack.c.l.b16 %v4150
      %v4184 = vunpack.c.l.b16 %v4151
      %v4185 = vunpack.c.l.b16 %v4152
      %v4186 = vunpack.c.l.b16 %v4153
      %v4187 = vunpack.c.l.b16 %v4154
      %v4188 = vpack.c.b16 %v4173, %v4172
      %v4189 = vpack.c.b16 %v4175, %v4174
      %v4190 = vpack.c.b16 %v4177, %v4176
      %v4191 = vpack.c.b16 %v4179, %v4178
      %v4192 = vpack.c.b16 %v4181, %v4180
      %v4193 = vpack.c.b16 %v4183, %v4182
      %v4194 = vpack.c.b16 %v4185, %v4184
      %v4195 = vpack.c.b16 %v4187, %v4186
      %4204 = vmatpush.bf16.msra.mxu0 %v4195
      %4205 = vmatpush.bf16.msra.mxu0 %v4194
      %4206 = vmatpush.bf16.msra.mxu0 %v4193
      %4207 = vmatpush.bf16.msra.mxu0 %v4192
      %4208 = vmatpush.bf16.msra.mxu0 %v4191
      %4209 = vmatpush.bf16.msra.mxu0 %v4190
      %4210 = vmatpush.bf16.msra.mxu0 %v4189
      %4211 = vmatpush.bf16.msra.mxu0 %v4188
      %4212 = vmatmul.bf16.gmra.mxu0 %v4135
      %v4213 = vpop.f32.mrf.mxu0
      %v4214 = vadd.f32 %v4155, %v4213
      %v4215 = vpop.f32.mrf.mxu0
      %v4216 = vadd.f32 %v4155, %v4215
      %4217 = vmatmul.bf16.gmra.mxu0 %v4136
      %v4218 = vpop.f32.mrf.mxu0
      %v4219 = vadd.f32 %v4155, %v4218
      %v4220 = vpop.f32.mrf.mxu0
      %v4221 = vadd.f32 %v4155, %v4220
      %4222 = vmatmul.bf16.gmra.mxu0 %v4137
      %v4223 = vpop.f32.mrf.mxu0
      %v4224 = vadd.f32 %v4155, %v4223
      %v4225 = vpop.f32.mrf.mxu0
      %4226 = vdwg.mxu0
      %v4227 = vadd.f32 %v4214, %v2781
      %v4228 = vadd.f32 %v4216, %v2782
      %v4229 = vadd.f32 %v4219, %v2783
      %v4230 = vadd.f32 %v4221, %v2784
      %v4231 = vadd.f32 %v4224, %v2785
      %4232 = vadd.xlane.f32.xlu0 %v4227
      %v4233 = vpop.xlane.xlu0 %4232
      %4234 = vadd.xlane.f32.xlu0 %v4228
      %v4235 = vpop.xlane.xlu0 %4234
      %4236 = vadd.xlane.f32.xlu0 %v4229
      %v4237 = vpop.xlane.xlu0 %4236
      %4238 = vadd.xlane.f32.xlu0 %v4230
      %v4239 = vpop.xlane.xlu0 %4238
      %v4240 = vsel %vm806, %v4231, 0.0
      %4241 = vadd.xlane.f32.xlu0 %v4240
      %v4242 = vpop.xlane.xlu0 %4241
      %v4243 = vmul.f32 %v4233, %v816
      %v4244 = vmul.f32 %v4235, %v816
      %v4245 = vmul.f32 %v4237, %v816
      %v4246 = vmul.f32 %v4239, %v816
      %v4247 = vmul.f32 %v4242, %v816
      %v4248 = vsub.f32 %v4227, %v4243
      %v4249 = vsub.f32 %v4228, %v4244
      %v4250 = vsub.f32 %v4229, %v4245
      %v4251 = vsub.f32 %v4230, %v4246
      %v4252 = vsub.f32 %v4231, %v4247
      %v4253 = vmul.f32 %v4248, %v4248
      %v4254 = vmul.f32 %v4249, %v4249
      %v4255 = vmul.f32 %v4250, %v4250
      %v4256 = vmul.f32 %v4251, %v4251
      %v4257 = vmul.f32 %v4252, %v4252
      %4258 = vadd.xlane.f32.xlu0 %v4253
      %v4259 = vpop.xlane.xlu0 %4258
      %4260 = vadd.xlane.f32.xlu0 %v4254
      %v4261 = vpop.xlane.xlu0 %4260
      %4262 = vadd.xlane.f32.xlu0 %v4255
      %v4263 = vpop.xlane.xlu0 %4262
      %4264 = vadd.xlane.f32.xlu0 %v4256
      %v4265 = vpop.xlane.xlu0 %4264
      %v4266 = vsel %vm806, %v4257, 0.0
      %4267 = vadd.xlane.f32.xlu0 %v4266
      %v4268 = vpop.xlane.xlu0 %4267
      %v4269 = vmul.f32 %v4259, %v816
      %v4270 = vmul.f32 %v4261, %v816
      %v4271 = vmul.f32 %v4263, %v816
      %v4272 = vmul.f32 %v4265, %v816
      %v4273 = vmul.f32 %v4268, %v816
      %v4274 = vadd.f32 %v4269, 1e-12
      %v4275 = vadd.f32 %v4270, 1e-12
      %v4276 = vadd.f32 %v4271, 1e-12
      %v4277 = vadd.f32 %v4272, 1e-12
      %v4278 = vadd.f32 %v4273, 1e-12
      %v4279 = vrsqrt.pop %v4274
      %v4280 = vmul.f32 %v4279, %v4274
      %v4281 = vmul.f32 %v4280, %v4279
      %v4282 = vmul.f32 0.5, %v4281
      %v4283 = vsub.f32 1.5, %v4282
      %v4284 = vmul.f32 %v4279, %v4283
      %vm4285 = vweird.f32 %v4274
      %vm4286 = vweird.f32 %v4279
      %vm4287 = vmor %vm4285, %vm4286
      %v4288 = vsel %vm4287, %v4279, %v4284
      %v4289 = vrsqrt.pop %v4275
      %v4290 = vmul.f32 %v4289, %v4275
      %v4291 = vmul.f32 %v4290, %v4289
      %v4292 = vmul.f32 0.5, %v4291
      %v4293 = vsub.f32 1.5, %v4292
      %v4294 = vmul.f32 %v4289, %v4293
      %vm4295 = vweird.f32 %v4275
      %vm4296 = vweird.f32 %v4289
      %vm4297 = vmor %vm4295, %vm4296
      %v4298 = vsel %vm4297, %v4289, %v4294
      %v4299 = vrsqrt.pop %v4276
      %v4300 = vmul.f32 %v4299, %v4276
      %v4301 = vmul.f32 %v4300, %v4299
      %v4302 = vmul.f32 0.5, %v4301
      %v4303 = vsub.f32 1.5, %v4302
      %v4304 = vmul.f32 %v4299, %v4303
      %vm4305 = vweird.f32 %v4276
      %vm4306 = vweird.f32 %v4299
      %vm4307 = vmor %vm4305, %vm4306
      %v4308 = vsel %vm4307, %v4299, %v4304
      %v4309 = vrsqrt.pop %v4277
      %v4310 = vmul.f32 %v4309, %v4277
      %v4311 = vmul.f32 %v4310, %v4309
      %v4312 = vmul.f32 0.5, %v4311
      %v4313 = vsub.f32 1.5, %v4312
      %v4314 = vmul.f32 %v4309, %v4313
      %vm4315 = vweird.f32 %v4277
      %vm4316 = vweird.f32 %v4309
      %vm4317 = vmor %vm4315, %vm4316
      %v4318 = vsel %vm4317, %v4309, %v4314
      %v4319 = vrsqrt.pop %v4278
      %v4320 = vmul.f32 %v4319, %v4278
      %v4321 = vmul.f32 %v4320, %v4319
      %v4322 = vmul.f32 0.5, %v4321
      %v4323 = vsub.f32 1.5, %v4322
      %v4324 = vmul.f32 %v4319, %v4323
      %vm4325 = vweird.f32 %v4278
      %vm4326 = vweird.f32 %v4319
      %vm4327 = vmor %vm4325, %vm4326
      %v4328 = vsel %vm4327, %v4319, %v4324
      %v4329 = vmul.f32 %v4248, %v4288
      %v4330 = vmul.f32 %v4249, %v4298
      %v4331 = vmul.f32 %v4250, %v4308
      %v4332 = vmul.f32 %v4251, %v4318
      %v4333 = vmul.f32 %v4252, %v4328
      %v4334 = vperm.slane %v2787, 6
      %v4335 = vmul.f32 %v4329, %v4334
      %v4336 = vmul.f32 %v4330, %v4334
      %v4337 = vmul.f32 %v4331, %v4334
      %v4338 = vmul.f32 %v4332, %v4334
      %v4339 = vmul.f32 %v4333, %v4334
      %v4340 = vperm.slane %v2787, 7
      %v4341 = vadd.f32 %v4335, %v4340
      %v4342 = vadd.f32 %v4336, %v4340
      %v4343 = vadd.f32 %v4337, %v4340
      %v4344 = vadd.f32 %v4338, %v4340
      %v4345 = vadd.f32 %v4339, %v4340
      %v4346 = vpack.c.bf16 %v4342, %v4341
      %v4347 = vpack.c.bf16 %v4344, %v4343
      %v4348 = vpack.c.bf16 %v4345, %v4345
      %s4349 = scalar_lea.vmem %s15, 128
      %v4350 = vld [vmem:[%s4349] sm:$0xff]
      %v4351 = vld [vmem:[%s4349 + $0x8] sm:$0xff]
      %v4352 = vld [vmem:[%s4349 + $0x10] sm:$0xff]
      %v4353 = vld [vmem:[%s4349 + $0x18] sm:$0xff]
      %v4354 = vld [vmem:[%s4349 + $0x20] sm:$0xff]
      %v4355 = vld [vmem:[%s4349 + $0x28] sm:$0xff]
      %v4356 = vld [vmem:[%s4349 + $0x30] sm:$0xff]
      %v4357 = vld [vmem:[%s4349 + $0x38] sm:$0xff]
      %v4358 = vld [vmem:[%s4349 + $0x40] sm:$0xff]
      %v4359 = vld [vmem:[%s4349 + $0x48] sm:$0xff]
      %v4360 = vld [vmem:[%s4349 + $0x50] sm:$0xff]
      %v4361 = vld [vmem:[%s4349 + $0x58] sm:$0xff]
      %v4362 = vld [vmem:[%s4349 + $0x60] sm:$0xff]
      %v4363 = vld [vmem:[%s4349 + $0x68] sm:$0xff]
      %v4364 = vld [vmem:[%s4349 + $0x70] sm:$0xff]
      %v4365 = vld [vmem:[%s4349 + $0x78] sm:$0xff]
      %v4367 = vperm.slane %v2790, 0
      %v4368 = vperm.slane %v2790, 1
      %v4387 = vunpack.c.l.b16 %v4350
      %v4388 = vunpack.c.h.b16 %v4350
      %v4389 = vunpack.c.l.b16 %v4351
      %v4390 = vunpack.c.h.b16 %v4351
      %v4391 = vunpack.c.l.b16 %v4352
      %v4392 = vunpack.c.h.b16 %v4352
      %v4393 = vunpack.c.l.b16 %v4353
      %v4394 = vunpack.c.h.b16 %v4353
      %v4395 = vunpack.c.l.b16 %v4354
      %v4396 = vunpack.c.h.b16 %v4354
      %v4397 = vunpack.c.l.b16 %v4355
      %v4398 = vunpack.c.h.b16 %v4355
      %v4399 = vunpack.c.l.b16 %v4356
      %v4400 = vunpack.c.h.b16 %v4356
      %v4401 = vunpack.c.l.b16 %v4357
      %v4402 = vunpack.c.h.b16 %v4357
      %v4403 = vunpack.c.l.b16 %v4358
      %v4404 = vunpack.c.h.b16 %v4358
      %v4405 = vunpack.c.l.b16 %v4359
      %v4406 = vunpack.c.h.b16 %v4359
      %v4407 = vunpack.c.l.b16 %v4360
      %v4408 = vunpack.c.h.b16 %v4360
      %v4409 = vunpack.c.l.b16 %v4361
      %v4410 = vunpack.c.h.b16 %v4361
      %v4411 = vunpack.c.l.b16 %v4362
      %v4412 = vunpack.c.h.b16 %v4362
      %v4413 = vunpack.c.l.b16 %v4363
      %v4414 = vunpack.c.h.b16 %v4363
      %v4415 = vunpack.c.l.b16 %v4364
      %v4416 = vunpack.c.h.b16 %v4364
      %v4417 = vunpack.c.l.b16 %v4365
      %v4418 = vunpack.c.h.b16 %v4365
      %v4419 = vpack.c.b16 %v4389, %v4387
      %v4420 = vpack.c.b16 %v4390, %v4388
      %v4421 = vpack.c.b16 %v4393, %v4391
      %v4422 = vpack.c.b16 %v4394, %v4392
      %v4423 = vpack.c.b16 %v4397, %v4395
      %v4424 = vpack.c.b16 %v4398, %v4396
      %v4425 = vpack.c.b16 %v4401, %v4399
      %v4426 = vpack.c.b16 %v4402, %v4400
      %v4427 = vpack.c.b16 %v4405, %v4403
      %v4428 = vpack.c.b16 %v4406, %v4404
      %v4429 = vpack.c.b16 %v4409, %v4407
      %v4430 = vpack.c.b16 %v4410, %v4408
      %v4431 = vpack.c.b16 %v4413, %v4411
      %v4432 = vpack.c.b16 %v4414, %v4412
      %v4433 = vpack.c.b16 %v4417, %v4415
      %v4434 = vpack.c.b16 %v4418, %v4416
      %4451 = vmatpush.bf16.msra.mxu0 %v4433
      %4452 = vmatpush.bf16.msra.mxu0 %v4431
      %4453 = vmatpush.bf16.msra.mxu0 %v4429
      %4454 = vmatpush.bf16.msra.mxu0 %v4427
      %4455 = vmatpush.bf16.msra.mxu0 %v4425
      %4456 = vmatpush.bf16.msra.mxu0 %v4423
      %4457 = vmatpush.bf16.msra.mxu0 %v4421
      %4458 = vmatpush.bf16.msra.mxu0 %v4419
      %4459 = vmatmul.bf16.gmra.mxu0 %v4346
      %v4460 = vpop.f32.mrf.mxu0
      %v4461 = vadd.f32 %v4367, %v4460
      %v4462 = vpop.f32.mrf.mxu0
      %v4463 = vadd.f32 %v4367, %v4462
      %4464 = vmatmul.bf16.gmra.mxu0 %v4347
      %v4465 = vpop.f32.mrf.mxu0
      %v4466 = vadd.f32 %v4367, %v4465
      %v4467 = vpop.f32.mrf.mxu0
      %v4468 = vadd.f32 %v4367, %v4467
      %4469 = vmatmul.bf16.gmra.mxu0 %v4348
      %v4470 = vpop.f32.mrf.mxu0
      %v4471 = vadd.f32 %v4367, %v4470
      %v4472 = vpop.f32.mrf.mxu0
      %4473 = vdwg.mxu0
      %4474 = vmatpush.bf16.msra.mxu0 %v4434
      %4475 = vmatpush.bf16.msra.mxu0 %v4432
      %4476 = vmatpush.bf16.msra.mxu0 %v4430
      %4477 = vmatpush.bf16.msra.mxu0 %v4428
      %4478 = vmatpush.bf16.msra.mxu0 %v4426
      %4479 = vmatpush.bf16.msra.mxu0 %v4424
      %4480 = vmatpush.bf16.msra.mxu0 %v4422
      %4481 = vmatpush.bf16.msra.mxu0 %v4420
      %4482 = vmatmul.bf16.gmra.mxu0 %v4346
      %v4483 = vpop.f32.mrf.mxu0
      %v4484 = vadd.f32 %v4368, %v4483
      %v4485 = vpop.f32.mrf.mxu0
      %v4486 = vadd.f32 %v4368, %v4485
      %4487 = vmatmul.bf16.gmra.mxu0 %v4347
      %v4488 = vpop.f32.mrf.mxu0
      %v4489 = vadd.f32 %v4368, %v4488
      %v4490 = vpop.f32.mrf.mxu0
      %v4491 = vadd.f32 %v4368, %v4490
      %4492 = vmatmul.bf16.gmra.mxu0 %v4348
      %v4493 = vpop.f32.mrf.mxu0
      %v4494 = vadd.f32 %v4368, %v4493
      %v4495 = vpop.f32.mrf.mxu0
      %4496 = vdwg.mxu0
      %v4497 = vmul.f32 %v4461, 0.5
      %v4498 = vmul.f32 %v4484, 0.5
      %v4499 = vmul.f32 %v4463, 0.5
      %v4500 = vmul.f32 %v4486, 0.5
      %v4501 = vmul.f32 %v4466, 0.5
      %v4502 = vmul.f32 %v4489, 0.5
      %v4503 = vmul.f32 %v4468, 0.5
      %v4504 = vmul.f32 %v4491, 0.5
      %v4505 = vmul.f32 %v4471, 0.5
      %v4506 = vmul.f32 %v4494, 0.5
      %v4507 = vmul.f32 %v4461, 0.044715
      %v4508 = vmul.f32 %v4484, 0.044715
      %v4509 = vmul.f32 %v4463, 0.044715
      %v4510 = vmul.f32 %v4486, 0.044715
      %v4511 = vmul.f32 %v4466, 0.044715
      %v4512 = vmul.f32 %v4489, 0.044715
      %v4513 = vmul.f32 %v4468, 0.044715
      %v4514 = vmul.f32 %v4491, 0.044715
      %v4515 = vmul.f32 %v4471, 0.044715
      %v4516 = vmul.f32 %v4494, 0.044715
      %v4517 = vmul.f32 %v4507, %v4461
      %v4518 = vmul.f32 %v4508, %v4484
      %v4519 = vmul.f32 %v4509, %v4463
      %v4520 = vmul.f32 %v4510, %v4486
      %v4521 = vmul.f32 %v4511, %v4466
      %v4522 = vmul.f32 %v4512, %v4489
      %v4523 = vmul.f32 %v4513, %v4468
      %v4524 = vmul.f32 %v4514, %v4491
      %v4525 = vmul.f32 %v4515, %v4471
      %v4526 = vmul.f32 %v4516, %v4494
      %v4527 = vmul.f32 %v4517, %v4461
      %v4528 = vmul.f32 %v4518, %v4484
      %v4529 = vmul.f32 %v4519, %v4463
      %v4530 = vmul.f32 %v4520, %v4486
      %v4531 = vmul.f32 %v4521, %v4466
      %v4532 = vmul.f32 %v4522, %v4489
      %v4533 = vmul.f32 %v4523, %v4468
      %v4534 = vmul.f32 %v4524, %v4491
      %v4535 = vmul.f32 %v4525, %v4471
      %v4536 = vmul.f32 %v4526, %v4494
      %v4537 = vadd.f32 %v4461, %v4527
      %v4538 = vadd.f32 %v4484, %v4528
      %v4539 = vadd.f32 %v4463, %v4529
      %v4540 = vadd.f32 %v4486, %v4530
      %v4541 = vadd.f32 %v4466, %v4531
      %v4542 = vadd.f32 %v4489, %v4532
      %v4543 = vadd.f32 %v4468, %v4533
      %v4544 = vadd.f32 %v4491, %v4534
      %v4545 = vadd.f32 %v4471, %v4535
      %v4546 = vadd.f32 %v4494, %v4536
      %v4547 = vmul.f32 %v4537, 0.7978846
      %v4548 = vmul.f32 %v4538, 0.7978846
      %v4549 = vmul.f32 %v4539, 0.7978846
      %v4550 = vmul.f32 %v4540, 0.7978846
      %v4551 = vmul.f32 %v4541, 0.7978846
      %v4552 = vmul.f32 %v4542, 0.7978846
      %v4553 = vmul.f32 %v4543, 0.7978846
      %v4554 = vmul.f32 %v4544, 0.7978846
      %v4555 = vmul.f32 %v4545, 0.7978846
      %v4556 = vmul.f32 %v4546, 0.7978846
      %v4557 = vtanh.pop %v4547
      %v4558 = vtanh.pop %v4548
      %v4559 = vtanh.pop %v4549
      %v4560 = vtanh.pop %v4550
      %v4561 = vtanh.pop %v4551
      %v4562 = vtanh.pop %v4552
      %v4563 = vtanh.pop %v4553
      %v4564 = vtanh.pop %v4554
      %v4565 = vtanh.pop %v4555
      %v4566 = vtanh.pop %v4556
      %v4567 = vadd.f32 %v4557, 1.0
      %v4568 = vadd.f32 %v4558, 1.0
      %v4569 = vadd.f32 %v4559, 1.0
      %v4570 = vadd.f32 %v4560, 1.0
      %v4571 = vadd.f32 %v4561, 1.0
      %v4572 = vadd.f32 %v4562, 1.0
      %v4573 = vadd.f32 %v4563, 1.0
      %v4574 = vadd.f32 %v4564, 1.0
      %v4575 = vadd.f32 %v4565, 1.0
      %v4576 = vadd.f32 %v4566, 1.0
      %v4577 = vmul.f32 %v4497, %v4567
      %v4578 = vmul.f32 %v4498, %v4568
      %v4579 = vmul.f32 %v4499, %v4569
      %v4580 = vmul.f32 %v4500, %v4570
      %v4581 = vmul.f32 %v4501, %v4571
      %v4582 = vmul.f32 %v4502, %v4572
      %v4583 = vmul.f32 %v4503, %v4573
      %v4584 = vmul.f32 %v4504, %v4574
      %v4585 = vmul.f32 %v4505, %v4575
      %v4586 = vmul.f32 %v4506, %v4576
      %v4587 = vpack.c.bf16 %v4579, %v4577
      %v4588 = vpack.c.bf16 %v4580, %v4578
      %v4589 = vpack.c.bf16 %v4583, %v4581
      %v4590 = vpack.c.bf16 %v4584, %v4582
      %v4591 = vpack.c.bf16 %v4585, %v4585
      %v4592 = vpack.c.bf16 %v4586, %v4586
      %s4593 = scalar_lea.vmem %s16, 128
      %v4594 = vld [vmem:[%s4593] sm:$0xf]
      %v4595 = vld [vmem:[%s4593 + $0x4] sm:$0xf]
      %v4596 = vld [vmem:[%s4593 + $0x8] sm:$0xf]
      %v4597 = vld [vmem:[%s4593 + $0xc] sm:$0xf]
      %v4598 = vld [vmem:[%s4593 + $0x10] sm:$0xf]
      %v4599 = vld [vmem:[%s4593 + $0x14] sm:$0xf]
      %v4600 = vld [vmem:[%s4593 + $0x18] sm:$0xf]
      %v4601 = vld [vmem:[%s4593 + $0x1c] sm:$0xf]
      %v4602 = vld [vmem:[%s4593 + $0x20] sm:$0xf]
      %v4603 = vld [vmem:[%s4593 + $0x24] sm:$0xf]
      %v4604 = vld [vmem:[%s4593 + $0x28] sm:$0xf]
      %v4605 = vld [vmem:[%s4593 + $0x2c] sm:$0xf]
      %v4606 = vld [vmem:[%s4593 + $0x30] sm:$0xf]
      %v4607 = vld [vmem:[%s4593 + $0x34] sm:$0xf]
      %v4608 = vld [vmem:[%s4593 + $0x38] sm:$0xf]
      %v4609 = vld [vmem:[%s4593 + $0x3c] sm:$0xf]
      %v4610 = vld [vmem:[%s4593 + $0x40] sm:$0xf]
      %v4611 = vld [vmem:[%s4593 + $0x44] sm:$0xf]
      %v4612 = vld [vmem:[%s4593 + $0x48] sm:$0xf]
      %v4613 = vld [vmem:[%s4593 + $0x4c] sm:$0xf]
      %v4614 = vld [vmem:[%s4593 + $0x50] sm:$0xf]
      %v4615 = vld [vmem:[%s4593 + $0x54] sm:$0xf]
      %v4616 = vld [vmem:[%s4593 + $0x58] sm:$0xf]
      %v4617 = vld [vmem:[%s4593 + $0x5c] sm:$0xf]
      %v4618 = vld [vmem:[%s4593 + $0x60] sm:$0xf]
      %v4619 = vld [vmem:[%s4593 + $0x64] sm:$0xf]
      %v4620 = vld [vmem:[%s4593 + $0x68] sm:$0xf]
      %v4621 = vld [vmem:[%s4593 + $0x6c] sm:$0xf]
      %v4622 = vld [vmem:[%s4593 + $0x70] sm:$0xf]
      %v4623 = vld [vmem:[%s4593 + $0x74] sm:$0xf]
      %v4624 = vld [vmem:[%s4593 + $0x78] sm:$0xf]
      %v4625 = vld [vmem:[%s4593 + $0x7c] sm:$0xf]
      %v4626 = vperm.slane %v2788, 0
      %v4659 = vunpack.c.l.b16 %v4594
      %v4660 = vunpack.c.l.b16 %v4595
      %v4661 = vunpack.c.l.b16 %v4596
      %v4662 = vunpack.c.l.b16 %v4597
      %v4663 = vunpack.c.l.b16 %v4598
      %v4664 = vunpack.c.l.b16 %v4599
      %v4665 = vunpack.c.l.b16 %v4600
      %v4666 = vunpack.c.l.b16 %v4601
      %v4667 = vunpack.c.l.b16 %v4602
      %v4668 = vunpack.c.l.b16 %v4603
      %v4669 = vunpack.c.l.b16 %v4604
      %v4670 = vunpack.c.l.b16 %v4605
      %v4671 = vunpack.c.l.b16 %v4606
      %v4672 = vunpack.c.l.b16 %v4607
      %v4673 = vunpack.c.l.b16 %v4608
      %v4674 = vunpack.c.l.b16 %v4609
      %v4675 = vunpack.c.l.b16 %v4610
      %v4676 = vunpack.c.l.b16 %v4611
      %v4677 = vunpack.c.l.b16 %v4612
      %v4678 = vunpack.c.l.b16 %v4613
      %v4679 = vunpack.c.l.b16 %v4614
      %v4680 = vunpack.c.l.b16 %v4615
      %v4681 = vunpack.c.l.b16 %v4616
      %v4682 = vunpack.c.l.b16 %v4617
      %v4683 = vunpack.c.l.b16 %v4618
      %v4684 = vunpack.c.l.b16 %v4619
      %v4685 = vunpack.c.l.b16 %v4620
      %v4686 = vunpack.c.l.b16 %v4621
      %v4687 = vunpack.c.l.b16 %v4622
      %v4688 = vunpack.c.l.b16 %v4623
      %v4689 = vunpack.c.l.b16 %v4624
      %v4690 = vunpack.c.l.b16 %v4625
      %v4691 = vpack.c.b16 %v4660, %v4659
      %v4692 = vpack.c.b16 %v4662, %v4661
      %v4693 = vpack.c.b16 %v4664, %v4663
      %v4694 = vpack.c.b16 %v4666, %v4665
      %v4695 = vpack.c.b16 %v4668, %v4667
      %v4696 = vpack.c.b16 %v4670, %v4669
      %v4697 = vpack.c.b16 %v4672, %v4671
      %v4698 = vpack.c.b16 %v4674, %v4673
      %v4699 = vpack.c.b16 %v4676, %v4675
      %v4700 = vpack.c.b16 %v4678, %v4677
      %v4701 = vpack.c.b16 %v4680, %v4679
      %v4702 = vpack.c.b16 %v4682, %v4681
      %v4703 = vpack.c.b16 %v4684, %v4683
      %v4704 = vpack.c.b16 %v4686, %v4685
      %v4705 = vpack.c.b16 %v4688, %v4687
      %v4706 = vpack.c.b16 %v4690, %v4689
      %4723 = vmatpush.bf16.msra.mxu0 %v4698
      %4724 = vmatpush.bf16.msra.mxu0 %v4697
      %4725 = vmatpush.bf16.msra.mxu0 %v4696
      %4726 = vmatpush.bf16.msra.mxu0 %v4695
      %4727 = vmatpush.bf16.msra.mxu0 %v4694
      %4728 = vmatpush.bf16.msra.mxu0 %v4693
      %4729 = vmatpush.bf16.msra.mxu0 %v4692
      %4730 = vmatpush.bf16.msra.mxu0 %v4691
      %4731 = vmatmul.bf16.gmra.mxu0 %v4587
      %v4732 = vpop.f32.mrf.mxu0
      %v4733 = vadd.f32 %v4626, %v4732
      %v4734 = vpop.f32.mrf.mxu0
      %v4735 = vadd.f32 %v4626, %v4734
      %4736 = vmatmul.bf16.gmra.mxu0 %v4589
      %v4737 = vpop.f32.mrf.mxu0
      %v4738 = vadd.f32 %v4626, %v4737
      %v4739 = vpop.f32.mrf.mxu0
      %v4740 = vadd.f32 %v4626, %v4739
      %4741 = vmatmul.bf16.gmra.mxu0 %v4591
      %v4742 = vpop.f32.mrf.mxu0
      %v4743 = vadd.f32 %v4626, %v4742
      %v4744 = vpop.f32.mrf.mxu0
      %4745 = vdwg.mxu0
      %4746 = vmatpush.bf16.msra.mxu0 %v4706
      %4747 = vmatpush.bf16.msra.mxu0 %v4705
      %4748 = vmatpush.bf16.msra.mxu0 %v4704
      %4749 = vmatpush.bf16.msra.mxu0 %v4703
      %4750 = vmatpush.bf16.msra.mxu0 %v4702
      %4751 = vmatpush.bf16.msra.mxu0 %v4701
      %4752 = vmatpush.bf16.msra.mxu0 %v4700
      %4753 = vmatpush.bf16.msra.mxu0 %v4699
      %4754 = vmatmul.bf16.gmra.mxu0 %v4588
      %v4755 = vpop.f32.mrf.mxu0
      %v4756 = vadd.f32 %v4733, %v4755
      %v4757 = vpop.f32.mrf.mxu0
      %v4758 = vadd.f32 %v4735, %v4757
      %4759 = vmatmul.bf16.gmra.mxu0 %v4590
      %v4760 = vpop.f32.mrf.mxu0
      %v4761 = vadd.f32 %v4738, %v4760
      %v4762 = vpop.f32.mrf.mxu0
      %v4763 = vadd.f32 %v4740, %v4762
      %4764 = vmatmul.bf16.gmra.mxu0 %v4592
      %v4765 = vpop.f32.mrf.mxu0
      %v4766 = vadd.f32 %v4743, %v4765
      %v4767 = vpop.f32.mrf.mxu0
      %4768 = vdwg.mxu0
      %v4769 = vadd.f32 %v4756, %v4227
      %v4770 = vadd.f32 %v4758, %v4228
      %v4771 = vadd.f32 %v4761, %v4229
      %v4772 = vadd.f32 %v4763, %v4230
      %v4773 = vadd.f32 %v4766, %v4231
      %v4774 = vld [vmem:[%s4] sm:$0x3]
      %4775 = vadd.xlane.f32.xlu0 %v4769
      %v4776 = vpop.xlane.xlu0 %4775
      %4777 = vadd.xlane.f32.xlu0 %v4770
      %v4778 = vpop.xlane.xlu0 %4777
      %4779 = vadd.xlane.f32.xlu0 %v4771
      %v4780 = vpop.xlane.xlu0 %4779
      %4781 = vadd.xlane.f32.xlu0 %v4772
      %v4782 = vpop.xlane.xlu0 %4781
      %v4783 = vsel %vm806, %v4773, 0.0
      %4784 = vadd.xlane.f32.xlu0 %v4783
      %v4785 = vpop.xlane.xlu0 %4784
      %v4786 = vmul.f32 %v4776, %v816
      %v4787 = vmul.f32 %v4778, %v816
      %v4788 = vmul.f32 %v4780, %v816
      %v4789 = vmul.f32 %v4782, %v816
      %v4790 = vmul.f32 %v4785, %v816
      %v4791 = vsub.f32 %v4769, %v4786
      %v4792 = vsub.f32 %v4770, %v4787
      %v4793 = vsub.f32 %v4771, %v4788
      %v4794 = vsub.f32 %v4772, %v4789
      %v4795 = vsub.f32 %v4773, %v4790
      %v4796 = vmul.f32 %v4791, %v4791
      %v4797 = vmul.f32 %v4792, %v4792
      %v4798 = vmul.f32 %v4793, %v4793
      %v4799 = vmul.f32 %v4794, %v4794
      %v4800 = vmul.f32 %v4795, %v4795
      %4801 = vadd.xlane.f32.xlu0 %v4796
      %v4802 = vpop.xlane.xlu0 %4801
      %4803 = vadd.xlane.f32.xlu0 %v4797
      %v4804 = vpop.xlane.xlu0 %4803
      %4805 = vadd.xlane.f32.xlu0 %v4798
      %v4806 = vpop.xlane.xlu0 %4805
      %4807 = vadd.xlane.f32.xlu0 %v4799
      %v4808 = vpop.xlane.xlu0 %4807
      %v4809 = vsel %vm806, %v4800, 0.0
      %4810 = vadd.xlane.f32.xlu0 %v4809
      %v4811 = vpop.xlane.xlu0 %4810
      %v4812 = vmul.f32 %v4802, %v816
      %v4813 = vmul.f32 %v4804, %v816
      %v4814 = vmul.f32 %v4806, %v816
      %v4815 = vmul.f32 %v4808, %v816
      %v4816 = vmul.f32 %v4811, %v816
      %v4817 = vadd.f32 %v4812, 1e-12
      %v4818 = vadd.f32 %v4813, 1e-12
      %v4819 = vadd.f32 %v4814, 1e-12
      %v4820 = vadd.f32 %v4815, 1e-12
      %v4821 = vadd.f32 %v4816, 1e-12
      %v4822 = vrsqrt.pop %v4817
      %v4823 = vmul.f32 %v4822, %v4817
      %v4824 = vmul.f32 %v4823, %v4822
      %v4825 = vmul.f32 0.5, %v4824
      %v4826 = vsub.f32 1.5, %v4825
      %v4827 = vmul.f32 %v4822, %v4826
      %vm4828 = vweird.f32 %v4817
      %vm4829 = vweird.f32 %v4822
      %vm4830 = vmor %vm4828, %vm4829
      %v4831 = vsel %vm4830, %v4822, %v4827
      %v4832 = vrsqrt.pop %v4818
      %v4833 = vmul.f32 %v4832, %v4818
      %v4834 = vmul.f32 %v4833, %v4832
      %v4835 = vmul.f32 0.5, %v4834
      %v4836 = vsub.f32 1.5, %v4835
      %v4837 = vmul.f32 %v4832, %v4836
      %vm4838 = vweird.f32 %v4818
      %vm4839 = vweird.f32 %v4832
      %vm4840 = vmor %vm4838, %vm4839
      %v4841 = vsel %vm4840, %v4832, %v4837
      %v4842 = vrsqrt.pop %v4819
      %v4843 = vmul.f32 %v4842, %v4819
      %v4844 = vmul.f32 %v4843, %v4842
      %v4845 = vmul.f32 0.5, %v4844
      %v4846 = vsub.f32 1.5, %v4845
      %v4847 = vmul.f32 %v4842, %v4846
      %vm4848 = vweird.f32 %v4819
      %vm4849 = vweird.f32 %v4842
      %vm4850 = vmor %vm4848, %vm4849
      %v4851 = vsel %vm4850, %v4842, %v4847
      %v4852 = vrsqrt.pop %v4820
      %v4853 = vmul.f32 %v4852, %v4820
      %v4854 = vmul.f32 %v4853, %v4852
      %v4855 = vmul.f32 0.5, %v4854
      %v4856 = vsub.f32 1.5, %v4855
      %v4857 = vmul.f32 %v4852, %v4856
      %vm4858 = vweird.f32 %v4820
      %vm4859 = vweird.f32 %v4852
      %vm4860 = vmor %vm4858, %vm4859
      %v4861 = vsel %vm4860, %v4852, %v4857
      %v4862 = vrsqrt.pop %v4821
      %v4863 = vmul.f32 %v4862, %v4821
      %v4864 = vmul.f32 %v4863, %v4862
      %v4865 = vmul.f32 0.5, %v4864
      %v4866 = vsub.f32 1.5, %v4865
      %v4867 = vmul.f32 %v4862, %v4866
      %vm4868 = vweird.f32 %v4821
      %vm4869 = vweird.f32 %v4862
      %vm4870 = vmor %vm4868, %vm4869
      %v4871 = vsel %vm4870, %v4862, %v4867
      %v4872 = vmul.f32 %v4791, %v4831
      %v4873 = vmul.f32 %v4792, %v4841
      %v4874 = vmul.f32 %v4793, %v4851
      %v4875 = vmul.f32 %v4794, %v4861
      %v4876 = vmul.f32 %v4795, %v4871
      %v4877 = vperm.slane %v4774, 0
      %v4878 = vmul.f32 %v4872, %v4877
      %v4879 = vmul.f32 %v4873, %v4877
      %v4880 = vmul.f32 %v4874, %v4877
      %v4881 = vmul.f32 %v4875, %v4877
      %v4882 = vmul.f32 %v4876, %v4877
      %v4883 = vperm.slane %v4774, 1
      %v4884 = vadd.f32 %v4878, %v4883
      %v4885 = vadd.f32 %v4879, %v4883
      %v4886 = vadd.f32 %v4880, %v4883
      %v4887 = vadd.f32 %v4881, %v4883
      %v4888 = vadd.f32 %v4882, %v4883
      %v4889 = vld [vmem:[%s5] sm:$0xff]
      %v4890 = vld [vmem:[%s5 + $0x8] sm:$0xff]
      %v4891 = vld [vmem:[%s5 + $0x10] sm:$0xff]
      %v4892 = vld [vmem:[%s5 + $0x18] sm:$0xff]
      %v4893 = vld [vmem:[%s5 + $0x20] sm:$0xff]
      %v4894 = vld [vmem:[%s5 + $0x28] sm:$0xff]
      %v4895 = vld [vmem:[%s5 + $0x30] sm:$0xff]
      %v4896 = vld [vmem:[%s5 + $0x38] sm:$0xff]
      %v4897 = vld [vmem:[%s5 + $0x40] sm:$0xff]
      %v4898 = vld [vmem:[%s5 + $0x48] sm:$0xff]
      %v4899 = vld [vmem:[%s5 + $0x50] sm:$0xff]
      %v4900 = vld [vmem:[%s5 + $0x58] sm:$0xff]
      %v4901 = vld [vmem:[%s5 + $0x60] sm:$0xff]
      %v4902 = vld [vmem:[%s5 + $0x68] sm:$0xff]
      %v4903 = vld [vmem:[%s5 + $0x70] sm:$0xff]
      %v4904 = vld [vmem:[%s5 + $0x78] sm:$0xff]
      %v4905 = vld [vmem:[%s6] sm:$0x1]
      %v4907 = vperm.slane %v4905, 0
      %4909 = vmatpush.msra.mxu0 %v4904
      %4910 = vmatpush.msra.mxu0 %v4903
      %4911 = vmatpush.msra.mxu0 %v4902
      %4912 = vmatpush.msra.mxu0 %v4901
      %4913 = vmatpush.msra.mxu0 %v4900
      %4914 = vmatpush.msra.mxu0 %v4899
      %4915 = vmatpush.msra.mxu0 %v4898
      %4916 = vmatpush.msra.mxu0 %v4897
      %4917 = vmatpush.msra.mxu0 %v4896
      %4918 = vmatpush.msra.mxu0 %v4895
      %4919 = vmatpush.msra.mxu0 %v4894
      %4920 = vmatpush.msra.mxu0 %v4893
      %4921 = vmatpush.msra.mxu0 %v4892
      %4922 = vmatpush.msra.mxu0 %v4891
      %4923 = vmatpush.msra.mxu0 %v4890
      %4924 = vmatpush.msra.mxu0 %v4889
      %4925 = vmatmul.f32.gmra.mxu0 %v4884
      %v4926 = vpop.f32.mrf.mxu0
      %v4927 = vadd.f32 %v4907, %v4926
      %4928 = vmatmul.f32.gmra.mxu0 %v4885
      %v4929 = vpop.f32.mrf.mxu0
      %v4930 = vadd.f32 %v4907, %v4929
      %4931 = vmatmul.f32.gmra.mxu0 %v4886
      %v4932 = vpop.f32.mrf.mxu0
      %v4933 = vadd.f32 %v4907, %v4932
      %4934 = vmatmul.f32.gmra.mxu0 %v4887
      %v4935 = vpop.f32.mrf.mxu0
      %v4936 = vadd.f32 %v4907, %v4935
      %4937 = vmatmul.f32.gmra.mxu0 %v4888
      %v4938 = vpop.f32.mrf.mxu0
      %v4939 = vadd.f32 %v4907, %v4938
      %4940 = vdwg.mxu0
      %v4941 = vmul.f32 %v4927, 0.044715
      %v4942 = vmul.f32 %v4930, 0.044715
      %v4943 = vmul.f32 %v4933, 0.044715
      %v4944 = vmul.f32 %v4936, 0.044715
      %v4945 = vmul.f32 %v4939, 0.044715
      %v4946 = vmul.f32 %v4941, %v4927
      %v4947 = vmul.f32 %v4942, %v4930
      %v4948 = vmul.f32 %v4943, %v4933
      %v4949 = vmul.f32 %v4944, %v4936
      %v4950 = vmul.f32 %v4945, %v4939
      %v4951 = vmul.f32 %v4946, %v4927
      %v4952 = vmul.f32 %v4947, %v4930
      %v4953 = vmul.f32 %v4948, %v4933
      %v4954 = vmul.f32 %v4949, %v4936
      %v4955 = vmul.f32 %v4950, %v4939
      %v4956 = vadd.f32 %v4927, %v4951
      %v4957 = vadd.f32 %v4930, %v4952
      %v4958 = vadd.f32 %v4933, %v4953
      %v4959 = vadd.f32 %v4936, %v4954
      %v4960 = vadd.f32 %v4939, %v4955
      %v4961 = vmul.f32 %v4956, 0.7978846
      %v4962 = vmul.f32 %v4957, 0.7978846
      %v4963 = vmul.f32 %v4958, 0.7978846
      %v4964 = vmul.f32 %v4959, 0.7978846
      %v4965 = vmul.f32 %v4960, 0.7978846
      %v4966 = vtanh.pop %v4961
      %v4967 = vtanh.pop %v4962
      %v4968 = vtanh.pop %v4963
      %v4969 = vtanh.pop %v4964
      %v4970 = vtanh.pop %v4965
      %v4971 = vadd.f32 %v4966, 1.0
      %v4972 = vadd.f32 %v4967, 1.0
      %v4973 = vadd.f32 %v4968, 1.0
      %v4974 = vadd.f32 %v4969, 1.0
      %v4975 = vadd.f32 %v4970, 1.0
      %v4976 = vmul.f32 %v4971, 0.5
      %v4977 = vmul.f32 %v4972, 0.5
      %v4978 = vmul.f32 %v4973, 0.5
      %v4979 = vmul.f32 %v4974, 0.5
      %v4980 = vmul.f32 %v4975, 0.5
      %4986 = vrot.lane.b32.xlu0 %v4976, 2
      %v4987 = vpop.permute.xlu0 %4986
      %4988 = vrot.lane.b32.xlu0 %v4977, 2
      %v4989 = vpop.permute.xlu0 %4988
      %4990 = vrot.lane.b32.xlu0 %v4978, 2
      %v4991 = vpop.permute.xlu0 %4990
      %4992 = vrot.lane.b32.xlu0 %v4979, 2
      %v4993 = vpop.permute.xlu0 %4992
      %4994 = vrot.lane.b32.xlu0 %v4980, 2
      %v4995 = vpop.permute.xlu0 %4994
      %vm5001 = vcmask 15360
      %v5002 = vsel %vm5001, %v4927, %v4987
      %v5003 = vsel %vm5001, %v4930, %v4989
      %v5004 = vsel %vm5001, %v4933, %v4991
      %v5005 = vsel %vm5001, %v4936, %v4993
      %v5006 = vsel %vm5001, %v4939, %v4995
      %vm5007 = vcmask 23552
      %5008 = vst.msk [vmem:[%s602] sm:$0xff] %vm5007, %v5002
      %5009 = vst.msk [vmem:[%s602 + $0x8] sm:$0xff] %vm5007, %v5003
      %5010 = vst.msk [vmem:[%s602 + $0x10] sm:$0xff] %vm5007, %v5004
      %5011 = vst.msk [vmem:[%s602 + $0x18] sm:$0xff] %vm5007, %v5005
      %vm5012 = vcmask 17408
      %5013 = vst.msk [vmem:[%s602 + $0x20] sm:$0x3] %vm5012, %v5006
      %p5014 = scmp.lt.s32.totalorder %s30, 1
      %s5015 = scalar_select %p5014, %s30, 1
      %s5016 = smul.addr %s5015, 5
      %s5017 = smul.addr %s5016, 8
      %s5018 = scalar_lea.vmem %s19, %s5017
      // Predicated region
      $region97: #{covit_forward.1} parent=95 // pred_check
        %p5019 = pneg %p452
      $region98: #{covit_forward.1} parent=95 // pred_check_branch
        %5021 = sbr.rel (%p5019) target = $region100
      $region99: #{covit_forward.1} parent=95 // pred_region
        _
      $region100: #{covit_forward.1} parent=95 // pred_fallthru
        _
    $region96: #{covit_forward.1} parent=5 // pred_fallthru
      _
    %p5022 = scmp.le.s32.totalorder 2, %s25
    // Predicated region
    $region101: #{covit_forward.1} parent=5 // pred_check
      %p5023 = pneg %p5022
    $region102: #{covit_forward.1} parent=5 // pred_check_branch
      %5025 = sbr.rel (%p5023) target = $region104
    $region103: #{covit_forward.1} parent=5 // pred_region
      %s5026 = ssub.s32 %s25, 2
      // Predicated region
      $region105: #{covit_forward.1} parent=103 // pred_check
        %p5027 = pneg %p458
      $region106: #{covit_forward.1} parent=103 // pred_check_branch
        %5029 = sbr.rel (%p5027) target = $region108
      $region107: #{covit_forward.1} parent=103 // pred_region
        %p5030 = scmp.lt.s32.totalorder %s31, 1
        %s5031 = scalar_select %p5030, %s31, 1
        %s5032 = smul.addr %s5031, 5
        %s5033 = smul.addr %s5032, 8
        %s5034 = scalar_lea.vmem %s19, %s5033
      $region108: #{covit_forward.1} parent=103 // pred_fallthru
        _
    $region104: #{covit_forward.1} parent=5 // pred_fallthru
      _
  $region6: #{covit_forward.1} parent=0 // loop_footer
    %s29 = sadd.s32 1, %s25
  $region7: #{covit_forward.1} parent=0 // loop_footer_branch
    %24 = sbr.rel target = $region3
  $region8: #{covit_forward.1} parent=0 // loop_exit
    _

</llo_original>
